<compile_context>
chip_gen: v7x
topology: tpu7x:2x2x1
jax: 0.10.0
libtpu: 0.0.40
codegen_flags: <defaults>
</compile_context>

<pallas_src>
import functools

import jax
import jax.numpy as jnp
from jax.experimental import pallas as pl
from jax.experimental.pallas import tpu as pltpu


CPAD = 128      # padded (lane-dense) channel count
POOL = 4        # MaxPool1d kernel/stride
BN_EPS = 1e-5


# ----------------------------- Pallas kernel ------------------------------

def _stage_kernel(*refs, n_rows, has_tail, fuse_head, B, Lp):
    it = iter(refs)
    xm_ref = next(it)                        # (POOL, B*Lp, K*Cin)  bf16 patches
    xt_ref = next(it) if has_tail else None  # (n_tail, K*Cin)      bf16 patches
    w_ref = next(it)                         # (K*Cin, CPAD)        bf16 weights
    g_ref = next(it)                         # (1, CPAD) f32 BN gamma (0 on pad)
    be_ref = next(it)                        # (1, CPAD) f32 BN beta  (0 on pad)
    wf_ref = next(it) if fuse_head else None  # (CPAD, num_classes) f32
    bf_ref = next(it) if fuse_head else None  # (1, num_classes)    f32
    o_ref = next(it)

    w = w_ref[...]
    # Conv as matmul: one (B*Lp, K*Cin) x (K*Cin, CPAD) product per pool slot.
    accs = [jnp.dot(xm_ref[i], w, preferred_element_type=jnp.float32)
            for i in range(POOL)]                                   # (B*Lp, CPAD)
    acc_t = (jnp.dot(xt_ref[...], w, preferred_element_type=jnp.float32)
             if has_tail else None)

    # Training-mode BatchNorm1d: per-channel stats over all B*L_out conv
    # outputs (tail rows dropped by the pool still count toward the stats).
    s = accs[0].sum(axis=0, keepdims=True)
    for a in accs[1:]:
        s = s + a.sum(axis=0, keepdims=True)
    if has_tail:
        s = s + acc_t.sum(axis=0, keepdims=True)
    mean = s * (1.0 / n_rows)

    ss = ((accs[0] - mean) ** 2).sum(axis=0, keepdims=True)
    for a in accs[1:]:
        ss = ss + ((a - mean) ** 2).sum(axis=0, keepdims=True)
    if has_tail:
        ss = ss + ((acc_t - mean) ** 2).sum(axis=0, keepdims=True)
    var = ss * (1.0 / n_rows)

    scale = g_ref[...] * jax.lax.rsqrt(var + BN_EPS)   # pre-combined BN affine
    shift = be_ref[...] - mean * scale

    # BN + ReLU per pool slot, then element-wise max over the pool axis.
    acts = [jnp.maximum(a * scale + shift, 0.0) for a in accs]
    pooled = jnp.maximum(jnp.maximum(acts[0], acts[1]),
                         jnp.maximum(acts[2], acts[3]))             # (B*Lp, CPAD)

    if not fuse_head:
        o_ref[...] = pooled.astype(o_ref.dtype)
        return

    # Fused head: avg_pool1d over the remaining length Lp, fc1, log_softmax.
    if Lp == 1:
        xm = pooled                                                 # rows == batch
    else:
        # Per-batch mean over Lp contiguous rows, expressed as a small MXU
        # matmul (robust layout; avoids unaligned in-kernel reshapes).
        r = jax.lax.broadcasted_iota(jnp.int32, (B, B * Lp), 1)
        bi = jax.lax.broadcasted_iota(jnp.int32, (B, B * Lp), 0)
        avg = jnp.where(r // Lp == bi, 1.0 / Lp, 0.0).astype(jnp.float32)
        xm = jnp.dot(avg, pooled, preferred_element_type=jnp.float32)  # (B, CPAD)
    logits = jnp.dot(xm, wf_ref[...], preferred_element_type=jnp.float32) + bf_ref[...]
    m = jnp.max(logits, axis=-1, keepdims=True)
    z = logits - m
    lse = jnp.log(jnp.sum(jnp.exp(z), axis=-1, keepdims=True))
    o_ref[...] = z - lse


def run_stage(main, tail, w_mat, gamma, beta, n_rows, B, Lp, wf=None, bf=None):
    fuse_head = wf is not None
    has_tail = tail is not None
    Cp = w_mat.shape[-1]

    inputs = [main]
    in_specs = [pl.BlockSpec(main.shape, lambda i: (0, 0, 0))]
    if has_tail:
        inputs.append(tail)
        in_specs.append(pl.BlockSpec(tail.shape, lambda i: (0, 0)))
    inputs += [w_mat, gamma, beta]
    in_specs += [pl.BlockSpec(w_mat.shape, lambda i: (0, 0)),
                 pl.BlockSpec(gamma.shape, lambda i: (0, 0)),
                 pl.BlockSpec(beta.shape, lambda i: (0, 0))]
    if fuse_head:
        inputs += [wf, bf]
        in_specs += [pl.BlockSpec(wf.shape, lambda i: (0, 0)),
                     pl.BlockSpec(bf.shape, lambda i: (0, 0))]
        out_shape = jax.ShapeDtypeStruct((B, wf.shape[-1]), jnp.float32)
        out_specs = pl.BlockSpec((B, wf.shape[-1]), lambda i: (0, 0))
    else:
        out_shape = jax.ShapeDtypeStruct((B * Lp, Cp), jnp.bfloat16)
        out_specs = pl.BlockSpec((B * Lp, Cp), lambda i: (0, 0))

    kernel = functools.partial(_stage_kernel, n_rows=n_rows, has_tail=has_tail,
                               fuse_head=fuse_head, B=B, Lp=Lp)
    return pl.pallas_call(
        kernel,
        out_shape=out_shape,
        grid=(1,),
        in_specs=in_specs,
        out_specs=out_specs,
        compiler_params=pltpu.CompilerParams(dimension_semantics=("arbitrary",)),
    )(*inputs)


# ------------------------------- JAX glue ---------------------------------

def build_patch_groups(x, K, S, pool=POOL):
    """x: (B, L, C) channels-last activation.

    Returns
      main : (pool, B*Lp, K*C)  patch rows regrouped so the pool window lies on
             the leading axis (kernel just maxes over it — no in-kernel reshape)
      tail : (B*(L_out - pool*Lp), K*C) or None  rows the pool drops but that
             still contribute to the training-mode BatchNorm statistics
    """
    B, L, C = x.shape
    L_out = (L - K) // S + 1
    # gather-free im2col: K static strided slices, column order (tap k, chan c)
    taps = [x[:, k: k + (L_out - 1) * S + 1: S, :] for k in range(K)]
    cols = jnp.stack(taps, axis=2).reshape(B, L_out, K * C)
    Lp = L_out // pool
    main = cols[:, :Lp * pool, :].reshape(B, Lp, pool, K * C)
    main = jnp.transpose(main, (2, 0, 1, 3)).reshape(pool, B * Lp, K * C)
    n_tail = L_out - Lp * pool
    tail = cols[:, Lp * pool:, :].reshape(B * n_tail, K * C) if n_tail else None
    return main, tail, L_out, Lp


def init_params(key, n_input=1, num_classes=2, n_channel=32):
    keys = jax.random.split(key, 10)

    def uni(k, shape, fan_in):
        bound = 1.0 / (fan_in ** 0.5)
        return jax.random.uniform(k, shape, jnp.float32, -bound, bound)

    p = {}
    conv_defs = [
        ("1", n_channel, n_input, 80),
        ("2", n_channel, n_channel, 3),
        ("3", 2 * n_channel, n_channel, 3),
        ("4", 2 * n_channel, 2 * n_channel, 3),
    ]
    for i, (name, cout, cin, ksz) in enumerate(conv_defs):
        p["w" + name] = uni(keys[2 * i], (cout, cin, ksz), cin * ksz)
        # Conv biases exist in the module but cancel exactly under
        # training-mode BatchNorm, so the kernels never consume them.
        p["b" + name] = uni(keys[2 * i + 1], (cout,), cin * ksz)
        p["g" + name] = jnp.ones((cout,), jnp.float32)    # BN gamma
        p["be" + name] = jnp.zeros((cout,), jnp.float32)  # BN beta
    p["wf"] = uni(keys[8], (num_classes, 2 * n_channel), 2 * n_channel)
    p["bf"] = uni(keys[9], (num_classes,), 2 * n_channel)
    return p


def m5_forward(x_ncl, params, stride=16, n_channel=32):
    # x_ncl: (B, Cin, L) PyTorch layout
    x = jnp.transpose(x_ncl, (0, 2, 1)).astype(jnp.bfloat16)     # (B, L, Cin)
    B = x.shape[0]

    stages = [("1", 80, stride), ("2", 3, 1), ("3", 3, 1), ("4", 3, 1)]
    out = None
    for si, (name, K, S) in enumerate(stages):
        w = params["w" + name]                                   # (Cout, Cin, K)
        Cout, Cin, _ = w.shape
        Cin_act = x.shape[-1]                                    # CPAD from stage 2 on
        wt = jnp.transpose(w, (2, 1, 0))                         # (K, Cin, Cout)
        if Cin_act != Cin:                                       # padded input channels: zero rows
            wt = jnp.pad(wt, ((0, 0), (0, Cin_act - Cin), (0, 0)))
        w_mat = wt.reshape(K * Cin_act, Cout)
        w_mat = jnp.pad(w_mat, ((0, 0), (0, CPAD - Cout))).astype(jnp.bfloat16)
        gamma = jnp.pad(params["g" + name], (0, CPAD - Cout)).reshape(1, CPAD)
        beta = jnp.pad(params["be" + name], (0, CPAD - Cout)).reshape(1, CPAD)

        main, tail, L_out, Lp = build_patch_groups(x, K, S)
        n_rows = B * L_out

        if si == len(stages) - 1:
            wf = jnp.pad(params["wf"].T.astype(jnp.float32),
                         ((0, CPAD - 2 * n_channel), (0, 0)))     # (CPAD, num_classes)
            bf = params["bf"].reshape(1, -1).astype(jnp.float32)
            out = run_stage(main, tail, w_mat, gamma, beta, n_rows, B, Lp,
                            wf=wf, bf=bf)                          # (B, num_classes)
        else:
            y = run_stage(main, tail, w_mat, gamma, beta, n_rows, B, Lp)
            x = y.reshape(B, Lp, CPAD)                             # bf16 activation

    return out[:, None, :]                                         # (B, 1, num_classes)


if __name__ == "__main__":
    key = jax.random.PRNGKey(0)
    kp, kx = jax.random.split(key)
    params = init_params(kp)

    B, L = 2, 8000          # smallest "natural" length: needs L >= 6848
    x = jax.random.normal(kx, (B, 1, L), jnp.float32)

    fwd = jax.jit(m5_forward)
    out = jax.block_until_ready(fwd(x, params))
    assert out.shape == (B, 1, 2), out.shape
    assert bool(jnp.all(jnp.isfinite(out)))
    print("KERNEL_OK")
</pallas_src>

<mosaic_0001>
module attributes {stable_mosaic.version = 11 : i64} {
  func.func @_stage_kernel(%arg0: i32, %arg1: memref<4x248x80xbf16, #tpu.memory_space<vmem>>, %arg2: memref<80x128xbf16, #tpu.memory_space<vmem>>, %arg3: memref<1x128xf32, #tpu.memory_space<vmem>>, %arg4: memref<1x128xf32, #tpu.memory_space<vmem>>, %arg5: memref<248x128xbf16, #tpu.memory_space<vmem>>) attributes {dimension_semantics = [#tpu.dimension_semantics<arbitrary>], iteration_bounds = array<i64: 1>, scalar_prefetch = 0 : i64, scratch_operands = 0 : i64, tpu.core_type = #tpu.core_type<tc>, window_params = [{pipeline_mode = #tpu.pipeline_mode<synchronous>, transform_indices = @transform_0, window_bounds = array<i64: 4, 248, 80>}, {pipeline_mode = #tpu.pipeline_mode<synchronous>, transform_indices = @transform_1, window_bounds = array<i64: 80, 128>}, {pipeline_mode = #tpu.pipeline_mode<synchronous>, transform_indices = @transform_2, window_bounds = array<i64: 1, 128>}, {pipeline_mode = #tpu.pipeline_mode<synchronous>, transform_indices = @transform_3, window_bounds = array<i64: 1, 128>}, {pipeline_mode = #tpu.pipeline_mode<synchronous>, transform_indices = @transform_4, window_bounds = array<i64: 248, 128>}]} {
    %c0 = arith.constant 0 : index
    %c0_0 = arith.constant 0 : index
    %0 = vector.load %arg2[%c0, %c0_0] : memref<80x128xbf16, #tpu.memory_space<vmem>>, vector<80x128xbf16>
    %c0_1 = arith.constant 0 : index
    %c0_2 = arith.constant 0 : index
    %c0_3 = arith.constant 0 : index
    %1 = vector.load %arg1[%c0_1, %c0_2, %c0_3] : memref<4x248x80xbf16, #tpu.memory_space<vmem>>, vector<1x248x80xbf16>
    %2 = vector.shape_cast %1 : vector<1x248x80xbf16> to vector<248x80xbf16>
    %cst = arith.constant dense<0.000000e+00> : vector<248x128xf32>
    %3 = tpu.matmul %2, %0, %cst {dimension_numbers = #tpu.dot_dimension_numbers<[1], [0], [0], [1], [0, 0, 1, 1], [], []>} : vector<248x80xbf16>, vector<80x128xbf16>, vector<248x128xf32> -> vector<248x128xf32>
    %c1 = arith.constant 1 : index
    %c0_4 = arith.constant 0 : index
    %c0_5 = arith.constant 0 : index
    %4 = vector.load %arg1[%c1, %c0_4, %c0_5] : memref<4x248x80xbf16, #tpu.memory_space<vmem>>, vector<1x248x80xbf16>
    %5 = vector.shape_cast %4 : vector<1x248x80xbf16> to vector<248x80xbf16>
    %cst_6 = arith.constant dense<0.000000e+00> : vector<248x128xf32>
    %6 = tpu.matmul %5, %0, %cst_6 {dimension_numbers = #tpu.dot_dimension_numbers<[1], [0], [0], [1], [0, 0, 1, 1], [], []>} : vector<248x80xbf16>, vector<80x128xbf16>, vector<248x128xf32> -> vector<248x128xf32>
    %c2 = arith.constant 2 : index
    %c0_7 = arith.constant 0 : index
    %c0_8 = arith.constant 0 : index
    %7 = vector.load %arg1[%c2, %c0_7, %c0_8] : memref<4x248x80xbf16, #tpu.memory_space<vmem>>, vector<1x248x80xbf16>
    %8 = vector.shape_cast %7 : vector<1x248x80xbf16> to vector<248x80xbf16>
    %cst_9 = arith.constant dense<0.000000e+00> : vector<248x128xf32>
    %9 = tpu.matmul %8, %0, %cst_9 {dimension_numbers = #tpu.dot_dimension_numbers<[1], [0], [0], [1], [0, 0, 1, 1], [], []>} : vector<248x80xbf16>, vector<80x128xbf16>, vector<248x128xf32> -> vector<248x128xf32>
    %c3 = arith.constant 3 : index
    %c0_10 = arith.constant 0 : index
    %c0_11 = arith.constant 0 : index
    %10 = vector.load %arg1[%c3, %c0_10, %c0_11] : memref<4x248x80xbf16, #tpu.memory_space<vmem>>, vector<1x248x80xbf16>
    %11 = vector.shape_cast %10 : vector<1x248x80xbf16> to vector<248x80xbf16>
    %cst_12 = arith.constant dense<0.000000e+00> : vector<248x128xf32>
    %12 = tpu.matmul %11, %0, %cst_12 {dimension_numbers = #tpu.dot_dimension_numbers<[1], [0], [0], [1], [0, 0, 1, 1], [], []>} : vector<248x80xbf16>, vector<80x128xbf16>, vector<248x128xf32> -> vector<248x128xf32>
    %cst_13 = arith.constant dense<0.000000e+00> : vector<128xf32>
    %13 = vector.multi_reduction <add>, %3, %cst_13 [0] : vector<248x128xf32> to vector<128xf32>
    %14 = vector.shape_cast %13 : vector<128xf32> to vector<1x128xf32>
    %cst_14 = arith.constant dense<0.000000e+00> : vector<128xf32>
    %15 = vector.multi_reduction <add>, %6, %cst_14 [0] : vector<248x128xf32> to vector<128xf32>
    %16 = vector.shape_cast %15 : vector<128xf32> to vector<1x128xf32>
    %17 = arith.addf %14, %16 : vector<1x128xf32>
    %cst_15 = arith.constant dense<0.000000e+00> : vector<128xf32>
    %18 = vector.multi_reduction <add>, %9, %cst_15 [0] : vector<248x128xf32> to vector<128xf32>
    %19 = vector.shape_cast %18 : vector<128xf32> to vector<1x128xf32>
    %20 = arith.addf %17, %19 : vector<1x128xf32>
    %cst_16 = arith.constant dense<0.000000e+00> : vector<128xf32>
    %21 = vector.multi_reduction <add>, %12, %cst_16 [0] : vector<248x128xf32> to vector<128xf32>
    %22 = vector.shape_cast %21 : vector<128xf32> to vector<1x128xf32>
    %23 = arith.addf %20, %22 : vector<1x128xf32>
    %cst_17 = arith.constant 0.00100806449 : f32
    %24 = vector.broadcast %cst_17 : f32 to vector<1x128xf32>
    %25 = arith.mulf %23, %24 : vector<1x128xf32>
    %26 = vector.broadcast %25 : vector<1x128xf32> to vector<248x128xf32>
    %27 = arith.subf %3, %26 : vector<248x128xf32>
    %28 = arith.mulf %27, %27 : vector<248x128xf32>
    %cst_18 = arith.constant dense<0.000000e+00> : vector<128xf32>
    %29 = vector.multi_reduction <add>, %28, %cst_18 [0] : vector<248x128xf32> to vector<128xf32>
    %30 = vector.shape_cast %29 : vector<128xf32> to vector<1x128xf32>
    %31 = vector.broadcast %25 : vector<1x128xf32> to vector<248x128xf32>
    %32 = arith.subf %6, %31 : vector<248x128xf32>
    %33 = arith.mulf %32, %32 : vector<248x128xf32>
    %cst_19 = arith.constant dense<0.000000e+00> : vector<128xf32>
    %34 = vector.multi_reduction <add>, %33, %cst_19 [0] : vector<248x128xf32> to vector<128xf32>
    %35 = vector.shape_cast %34 : vector<128xf32> to vector<1x128xf32>
    %36 = arith.addf %30, %35 : vector<1x128xf32>
    %37 = vector.broadcast %25 : vector<1x128xf32> to vector<248x128xf32>
    %38 = arith.subf %9, %37 : vector<248x128xf32>
    %39 = arith.mulf %38, %38 : vector<248x128xf32>
    %cst_20 = arith.constant dense<0.000000e+00> : vector<128xf32>
    %40 = vector.multi_reduction <add>, %39, %cst_20 [0] : vector<248x128xf32> to vector<128xf32>
    %41 = vector.shape_cast %40 : vector<128xf32> to vector<1x128xf32>
    %42 = arith.addf %36, %41 : vector<1x128xf32>
    %43 = vector.broadcast %25 : vector<1x128xf32> to vector<248x128xf32>
    %44 = arith.subf %12, %43 : vector<248x128xf32>
    %45 = arith.mulf %44, %44 : vector<248x128xf32>
    %cst_21 = arith.constant dense<0.000000e+00> : vector<128xf32>
    %46 = vector.multi_reduction <add>, %45, %cst_21 [0] : vector<248x128xf32> to vector<128xf32>
    %47 = vector.shape_cast %46 : vector<128xf32> to vector<1x128xf32>
    %48 = arith.addf %42, %47 : vector<1x128xf32>
    %cst_22 = arith.constant 0.00100806449 : f32
    %49 = vector.broadcast %cst_22 : f32 to vector<1x128xf32>
    %50 = arith.mulf %48, %49 : vector<1x128xf32>
    %c0_23 = arith.constant 0 : index
    %c0_24 = arith.constant 0 : index
    %51 = vector.load %arg3[%c0_23, %c0_24] : memref<1x128xf32, #tpu.memory_space<vmem>>, vector<1x128xf32>
    %cst_25 = arith.constant 9.99999974E-6 : f32
    %52 = vector.broadcast %cst_25 : f32 to vector<1x128xf32>
    %53 = arith.addf %50, %52 : vector<1x128xf32>
    %54 = math.rsqrt %53 : vector<1x128xf32>
    %55 = arith.mulf %51, %54 : vector<1x128xf32>
    %c0_26 = arith.constant 0 : index
    %c0_27 = arith.constant 0 : index
    %56 = vector.load %arg4[%c0_26, %c0_27] : memref<1x128xf32, #tpu.memory_space<vmem>>, vector<1x128xf32>
    %57 = arith.mulf %25, %55 : vector<1x128xf32>
    %58 = arith.subf %56, %57 : vector<1x128xf32>
    %59 = vector.broadcast %55 : vector<1x128xf32> to vector<248x128xf32>
    %60 = arith.mulf %3, %59 : vector<248x128xf32>
    %61 = vector.broadcast %58 : vector<1x128xf32> to vector<248x128xf32>
    %62 = arith.addf %60, %61 : vector<248x128xf32>
    %cst_28 = arith.constant 0.000000e+00 : f32
    %63 = vector.broadcast %cst_28 : f32 to vector<248x128xf32>
    %64 = arith.maximumf %62, %63 : vector<248x128xf32>
    %65 = vector.broadcast %55 : vector<1x128xf32> to vector<248x128xf32>
    %66 = arith.mulf %6, %65 : vector<248x128xf32>
    %67 = vector.broadcast %58 : vector<1x128xf32> to vector<248x128xf32>
    %68 = arith.addf %66, %67 : vector<248x128xf32>
    %cst_29 = arith.constant 0.000000e+00 : f32
    %69 = vector.broadcast %cst_29 : f32 to vector<248x128xf32>
    %70 = arith.maximumf %68, %69 : vector<248x128xf32>
    %71 = vector.broadcast %55 : vector<1x128xf32> to vector<248x128xf32>
    %72 = arith.mulf %9, %71 : vector<248x128xf32>
    %73 = vector.broadcast %58 : vector<1x128xf32> to vector<248x128xf32>
    %74 = arith.addf %72, %73 : vector<248x128xf32>
    %cst_30 = arith.constant 0.000000e+00 : f32
    %75 = vector.broadcast %cst_30 : f32 to vector<248x128xf32>
    %76 = arith.maximumf %74, %75 : vector<248x128xf32>
    %77 = vector.broadcast %55 : vector<1x128xf32> to vector<248x128xf32>
    %78 = arith.mulf %12, %77 : vector<248x128xf32>
    %79 = vector.broadcast %58 : vector<1x128xf32> to vector<248x128xf32>
    %80 = arith.addf %78, %79 : vector<248x128xf32>
    %cst_31 = arith.constant 0.000000e+00 : f32
    %81 = vector.broadcast %cst_31 : f32 to vector<248x128xf32>
    %82 = arith.maximumf %80, %81 : vector<248x128xf32>
    %83 = arith.maximumf %64, %70 : vector<248x128xf32>
    %84 = arith.maximumf %76, %82 : vector<248x128xf32>
    %85 = arith.maximumf %83, %84 : vector<248x128xf32>
    %86 = arith.truncf %85 : vector<248x128xf32> to vector<248x128xbf16>
    %c0_32 = arith.constant 0 : index
    %c0_33 = arith.constant 0 : index
    %87 = vector.load %arg5[%c0_32, %c0_33] : memref<248x128xbf16, #tpu.memory_space<vmem>>, vector<248x128xbf16>
    tpu.vector_store %arg5[%c0_32, %c0_33], %86 {strides = array<i32>} : memref<248x128xbf16, #tpu.memory_space<vmem>>, vector<248x128xbf16>,
    return
  }
  func.func @transform_0(%arg0: i32) -> (i32, i32, i32) {
    %c0_i32 = arith.constant 0 : i32
    %c0_i32_0 = arith.constant 0 : i32
    %c0_i32_1 = arith.constant 0 : i32
    %c0_i32_2 = arith.constant 0 : i32
    return %c0_i32, %c0_i32_0, %c0_i32_1 : i32, i32, i32
  }
  func.func @transform_1(%arg0: i32) -> (i32, i32) {
    %c0_i32 = arith.constant 0 : i32
    %c0_i32_0 = arith.constant 0 : i32
    %c0_i32_1 = arith.constant 0 : i32
    return %c0_i32, %c0_i32_0 : i32, i32
  }
  func.func @transform_2(%arg0: i32) -> (i32, i32) {
    %c0_i32 = arith.constant 0 : i32
    %c0_i32_0 = arith.constant 0 : i32
    %c0_i32_1 = arith.constant 0 : i32
    return %c0_i32, %c0_i32_0 : i32, i32
  }
  func.func @transform_3(%arg0: i32) -> (i32, i32) {
    %c0_i32 = arith.constant 0 : i32
    %c0_i32_0 = arith.constant 0 : i32
    %c0_i32_1 = arith.constant 0 : i32
    return %c0_i32, %c0_i32_0 : i32, i32
  }
  func.func @transform_4(%arg0: i32) -> (i32, i32) {
    %c0_i32 = arith.constant 0 : i32
    %c0_i32_0 = arith.constant 0 : i32
    %c0_i32_1 = arith.constant 0 : i32
    return %c0_i32, %c0_i32_0 : i32, i32
  }
}

module attributes {stable_mosaic.version = 11 : i64} {
  func.func @_stage_kernel(%arg0: i32, %arg1: memref<4x60x384xbf16, #tpu.memory_space<vmem>>, %arg2: memref<4x384xbf16, #tpu.memory_space<vmem>>, %arg3: memref<384x128xbf16, #tpu.memory_space<vmem>>, %arg4: memref<1x128xf32, #tpu.memory_space<vmem>>, %arg5: memref<1x128xf32, #tpu.memory_space<vmem>>, %arg6: memref<60x128xbf16, #tpu.memory_space<vmem>>) attributes {dimension_semantics = [#tpu.dimension_semantics<arbitrary>], iteration_bounds = array<i64: 1>, scalar_prefetch = 0 : i64, scratch_operands = 0 : i64, tpu.core_type = #tpu.core_type<tc>, window_params = [{pipeline_mode = #tpu.pipeline_mode<synchronous>, transform_indices = @transform_0, window_bounds = array<i64: 4, 60, 384>}, {pipeline_mode = #tpu.pipeline_mode<synchronous>, transform_indices = @transform_1, window_bounds = array<i64: 4, 384>}, {pipeline_mode = #tpu.pipeline_mode<synchronous>, transform_indices = @transform_2, window_bounds = array<i64: 384, 128>}, {pipeline_mode = #tpu.pipeline_mode<synchronous>, transform_indices = @transform_3, window_bounds = array<i64: 1, 128>}, {pipeline_mode = #tpu.pipeline_mode<synchronous>, transform_indices = @transform_4, window_bounds = array<i64: 1, 128>}, {pipeline_mode = #tpu.pipeline_mode<synchronous>, transform_indices = @transform_5, window_bounds = array<i64: 60, 128>}]} {
    %c0 = arith.constant 0 : index
    %c0_0 = arith.constant 0 : index
    %0 = vector.load %arg3[%c0, %c0_0] : memref<384x128xbf16, #tpu.memory_space<vmem>>, vector<384x128xbf16>
    %c0_1 = arith.constant 0 : index
    %c0_2 = arith.constant 0 : index
    %c0_3 = arith.constant 0 : index
    %1 = vector.load %arg1[%c0_1, %c0_2, %c0_3] : memref<4x60x384xbf16, #tpu.memory_space<vmem>>, vector<1x60x384xbf16>
    %2 = vector.shape_cast %1 : vector<1x60x384xbf16> to vector<60x384xbf16>
    %cst = arith.constant dense<0.000000e+00> : vector<60x128xf32>
    %3 = tpu.matmul %2, %0, %cst {dimension_numbers = #tpu.dot_dimension_numbers<[1], [0], [0], [1], [0, 0, 1, 1], [], []>} : vector<60x384xbf16>, vector<384x128xbf16>, vector<60x128xf32> -> vector<60x128xf32>
    %c1 = arith.constant 1 : index
    %c0_4 = arith.constant 0 : index
    %c0_5 = arith.constant 0 : index
    %4 = vector.load %arg1[%c1, %c0_4, %c0_5] : memref<4x60x384xbf16, #tpu.memory_space<vmem>>, vector<1x60x384xbf16>
    %5 = vector.shape_cast %4 : vector<1x60x384xbf16> to vector<60x384xbf16>
    %cst_6 = arith.constant dense<0.000000e+00> : vector<60x128xf32>
    %6 = tpu.matmul %5, %0, %cst_6 {dimension_numbers = #tpu.dot_dimension_numbers<[1], [0], [0], [1], [0, 0, 1, 1], [], []>} : vector<60x384xbf16>, vector<384x128xbf16>, vector<60x128xf32> -> vector<60x128xf32>
    %c2 = arith.constant 2 : index
    %c0_7 = arith.constant 0 : index
    %c0_8 = arith.constant 0 : index
    %7 = vector.load %arg1[%c2, %c0_7, %c0_8] : memref<4x60x384xbf16, #tpu.memory_space<vmem>>, vector<1x60x384xbf16>
    %8 = vector.shape_cast %7 : vector<1x60x384xbf16> to vector<60x384xbf16>
    %cst_9 = arith.constant dense<0.000000e+00> : vector<60x128xf32>
    %9 = tpu.matmul %8, %0, %cst_9 {dimension_numbers = #tpu.dot_dimension_numbers<[1], [0], [0], [1], [0, 0, 1, 1], [], []>} : vector<60x384xbf16>, vector<384x128xbf16>, vector<60x128xf32> -> vector<60x128xf32>
    %c3 = arith.constant 3 : index
    %c0_10 = arith.constant 0 : index
    %c0_11 = arith.constant 0 : index
    %10 = vector.load %arg1[%c3, %c0_10, %c0_11] : memref<4x60x384xbf16, #tpu.memory_space<vmem>>, vector<1x60x384xbf16>
    %11 = vector.shape_cast %10 : vector<1x60x384xbf16> to vector<60x384xbf16>
    %cst_12 = arith.constant dense<0.000000e+00> : vector<60x128xf32>
    %12 = tpu.matmul %11, %0, %cst_12 {dimension_numbers = #tpu.dot_dimension_numbers<[1], [0], [0], [1], [0, 0, 1, 1], [], []>} : vector<60x384xbf16>, vector<384x128xbf16>, vector<60x128xf32> -> vector<60x128xf32>
    %c0_13 = arith.constant 0 : index
    %c0_14 = arith.constant 0 : index
    %13 = vector.load %arg2[%c0_13, %c0_14] : memref<4x384xbf16, #tpu.memory_space<vmem>>, vector<4x384xbf16>
    %cst_15 = arith.constant dense<0.000000e+00> : vector<4x128xf32>
    %14 = tpu.matmul %13, %0, %cst_15 {dimension_numbers = #tpu.dot_dimension_numbers<[1], [0], [0], [1], [0, 0, 1, 1], [], []>} : vector<4x384xbf16>, vector<384x128xbf16>, vector<4x128xf32> -> vector<4x128xf32>
    %cst_16 = arith.constant dense<0.000000e+00> : vector<128xf32>
    %15 = vector.multi_reduction <add>, %3, %cst_16 [0] : vector<60x128xf32> to vector<128xf32>
    %16 = vector.shape_cast %15 : vector<128xf32> to vector<1x128xf32>
    %cst_17 = arith.constant dense<0.000000e+00> : vector<128xf32>
    %17 = vector.multi_reduction <add>, %6, %cst_17 [0] : vector<60x128xf32> to vector<128xf32>
    %18 = vector.shape_cast %17 : vector<128xf32> to vector<1x128xf32>
    %19 = arith.addf %16, %18 : vector<1x128xf32>
    %cst_18 = arith.constant dense<0.000000e+00> : vector<128xf32>
    %20 = vector.multi_reduction <add>, %9, %cst_18 [0] : vector<60x128xf32> to vector<128xf32>
    %21 = vector.shape_cast %20 : vector<128xf32> to vector<1x128xf32>
    %22 = arith.addf %19, %21 : vector<1x128xf32>
    %cst_19 = arith.constant dense<0.000000e+00> : vector<128xf32>
    %23 = vector.multi_reduction <add>, %12, %cst_19 [0] : vector<60x128xf32> to vector<128xf32>
    %24 = vector.shape_cast %23 : vector<128xf32> to vector<1x128xf32>
    %25 = arith.addf %22, %24 : vector<1x128xf32>
    %cst_20 = arith.constant dense<0.000000e+00> : vector<128xf32>
    %26 = vector.multi_reduction <add>, %14, %cst_20 [0] : vector<4x128xf32> to vector<128xf32>
    %27 = vector.shape_cast %26 : vector<128xf32> to vector<1x128xf32>
    %28 = arith.addf %25, %27 : vector<1x128xf32>
    %cst_21 = arith.constant 0.00409836043 : f32
    %29 = vector.broadcast %cst_21 : f32 to vector<1x128xf32>
    %30 = arith.mulf %28, %29 : vector<1x128xf32>
    %31 = vector.broadcast %30 : vector<1x128xf32> to vector<60x128xf32>
    %32 = arith.subf %3, %31 : vector<60x128xf32>
    %33 = arith.mulf %32, %32 : vector<60x128xf32>
    %cst_22 = arith.constant dense<0.000000e+00> : vector<128xf32>
    %34 = vector.multi_reduction <add>, %33, %cst_22 [0] : vector<60x128xf32> to vector<128xf32>
    %35 = vector.shape_cast %34 : vector<128xf32> to vector<1x128xf32>
    %36 = vector.broadcast %30 : vector<1x128xf32> to vector<60x128xf32>
    %37 = arith.subf %6, %36 : vector<60x128xf32>
    %38 = arith.mulf %37, %37 : vector<60x128xf32>
    %cst_23 = arith.constant dense<0.000000e+00> : vector<128xf32>
    %39 = vector.multi_reduction <add>, %38, %cst_23 [0] : vector<60x128xf32> to vector<128xf32>
    %40 = vector.shape_cast %39 : vector<128xf32> to vector<1x128xf32>
    %41 = arith.addf %35, %40 : vector<1x128xf32>
    %42 = vector.broadcast %30 : vector<1x128xf32> to vector<60x128xf32>
    %43 = arith.subf %9, %42 : vector<60x128xf32>
    %44 = arith.mulf %43, %43 : vector<60x128xf32>
    %cst_24 = arith.constant dense<0.000000e+00> : vector<128xf32>
    %45 = vector.multi_reduction <add>, %44, %cst_24 [0] : vector<60x128xf32> to vector<128xf32>
    %46 = vector.shape_cast %45 : vector<128xf32> to vector<1x128xf32>
    %47 = arith.addf %41, %46 : vector<1x128xf32>
    %48 = vector.broadcast %30 : vector<1x128xf32> to vector<60x128xf32>
    %49 = arith.subf %12, %48 : vector<60x128xf32>
    %50 = arith.mulf %49, %49 : vector<60x128xf32>
    %cst_25 = arith.constant dense<0.000000e+00> : vector<128xf32>
    %51 = vector.multi_reduction <add>, %50, %cst_25 [0] : vector<60x128xf32> to vector<128xf32>
    %52 = vector.shape_cast %51 : vector<128xf32> to vector<1x128xf32>
    %53 = arith.addf %47, %52 : vector<1x128xf32>
    %54 = vector.broadcast %30 : vector<1x128xf32> to vector<4x128xf32>
    %55 = arith.subf %14, %54 : vector<4x128xf32>
    %56 = arith.mulf %55, %55 : vector<4x128xf32>
    %cst_26 = arith.constant dense<0.000000e+00> : vector<128xf32>
    %57 = vector.multi_reduction <add>, %56, %cst_26 [0] : vector<4x128xf32> to vector<128xf32>
    %58 = vector.shape_cast %57 : vector<128xf32> to vector<1x128xf32>
    %59 = arith.addf %53, %58 : vector<1x128xf32>
    %cst_27 = arith.constant 0.00409836043 : f32
    %60 = vector.broadcast %cst_27 : f32 to vector<1x128xf32>
    %61 = arith.mulf %59, %60 : vector<1x128xf32>
    %c0_28 = arith.constant 0 : index
    %c0_29 = arith.constant 0 : index
    %62 = vector.load %arg4[%c0_28, %c0_29] : memref<1x128xf32, #tpu.memory_space<vmem>>, vector<1x128xf32>
    %cst_30 = arith.constant 9.99999974E-6 : f32
    %63 = vector.broadcast %cst_30 : f32 to vector<1x128xf32>
    %64 = arith.addf %61, %63 : vector<1x128xf32>
    %65 = math.rsqrt %64 : vector<1x128xf32>
    %66 = arith.mulf %62, %65 : vector<1x128xf32>
    %c0_31 = arith.constant 0 : index
    %c0_32 = arith.constant 0 : index
    %67 = vector.load %arg5[%c0_31, %c0_32] : memref<1x128xf32, #tpu.memory_space<vmem>>, vector<1x128xf32>
    %68 = arith.mulf %30, %66 : vector<1x128xf32>
    %69 = arith.subf %67, %68 : vector<1x128xf32>
    %70 = vector.broadcast %66 : vector<1x128xf32> to vector<60x128xf32>
    %71 = arith.mulf %3, %70 : vector<60x128xf32>
    %72 = vector.broadcast %69 : vector<1x128xf32> to vector<60x128xf32>
    %73 = arith.addf %71, %72 : vector<60x128xf32>
    %cst_33 = arith.constant 0.000000e+00 : f32
    %74 = vector.broadcast %cst_33 : f32 to vector<60x128xf32>
    %75 = arith.maximumf %73, %74 : vector<60x128xf32>
    %76 = vector.broadcast %66 : vector<1x128xf32> to vector<60x128xf32>
    %77 = arith.mulf %6, %76 : vector<60x128xf32>
    %78 = vector.broadcast %69 : vector<1x128xf32> to vector<60x128xf32>
    %79 = arith.addf %77, %78 : vector<60x128xf32>
    %cst_34 = arith.constant 0.000000e+00 : f32
    %80 = vector.broadcast %cst_34 : f32 to vector<60x128xf32>
    %81 = arith.maximumf %79, %80 : vector<60x128xf32>
    %82 = vector.broadcast %66 : vector<1x128xf32> to vector<60x128xf32>
    %83 = arith.mulf %9, %82 : vector<60x128xf32>
    %84 = vector.broadcast %69 : vector<1x128xf32> to vector<60x128xf32>
    %85 = arith.addf %83, %84 : vector<60x128xf32>
    %cst_35 = arith.constant 0.000000e+00 : f32
    %86 = vector.broadcast %cst_35 : f32 to vector<60x128xf32>
    %87 = arith.maximumf %85, %86 : vector<60x128xf32>
    %88 = vector.broadcast %66 : vector<1x128xf32> to vector<60x128xf32>
    %89 = arith.mulf %12, %88 : vector<60x128xf32>
    %90 = vector.broadcast %69 : vector<1x128xf32> to vector<60x128xf32>
    %91 = arith.addf %89, %90 : vector<60x128xf32>
    %cst_36 = arith.constant 0.000000e+00 : f32
    %92 = vector.broadcast %cst_36 : f32 to vector<60x128xf32>
    %93 = arith.maximumf %91, %92 : vector<60x128xf32>
    %94 = arith.maximumf %75, %81 : vector<60x128xf32>
    %95 = arith.maximumf %87, %93 : vector<60x128xf32>
    %96 = arith.maximumf %94, %95 : vector<60x128xf32>
    %97 = arith.truncf %96 : vector<60x128xf32> to vector<60x128xbf16>
    %c0_37 = arith.constant 0 : index
    %c0_38 = arith.constant 0 : index
    %98 = vector.load %arg6[%c0_37, %c0_38] : memref<60x128xbf16, #tpu.memory_space<vmem>>, vector<60x128xbf16>
    tpu.vector_store %arg6[%c0_37, %c0_38], %97 {strides = array<i32>} : memref<60x128xbf16, #tpu.memory_space<vmem>>, vector<60x128xbf16>,
    return
  }
  func.func @transform_0(%arg0: i32) -> (i32, i32, i32) {
    %c0_i32 = arith.constant 0 : i32
    %c0_i32_0 = arith.constant 0 : i32
    %c0_i32_1 = arith.constant 0 : i32
    %c0_i32_2 = arith.constant 0 : i32
    return %c0_i32, %c0_i32_0, %c0_i32_1 : i32, i32, i32
  }
  func.func @transform_1(%arg0: i32) -> (i32, i32) {
    %c0_i32 = arith.constant 0 : i32
    %c0_i32_0 = arith.constant 0 : i32
    %c0_i32_1 = arith.constant 0 : i32
    return %c0_i32, %c0_i32_0 : i32, i32
  }
  func.func @transform_2(%arg0: i32) -> (i32, i32) {
    %c0_i32 = arith.constant 0 : i32
    %c0_i32_0 = arith.constant 0 : i32
    %c0_i32_1 = arith.constant 0 : i32
    return %c0_i32, %c0_i32_0 : i32, i32
  }
  func.func @transform_3(%arg0: i32) -> (i32, i32) {
    %c0_i32 = arith.constant 0 : i32
    %c0_i32_0 = arith.constant 0 : i32
    %c0_i32_1 = arith.constant 0 : i32
    return %c0_i32, %c0_i32_0 : i32, i32
  }
  func.func @transform_4(%arg0: i32) -> (i32, i32) {
    %c0_i32 = arith.constant 0 : i32
    %c0_i32_0 = arith.constant 0 : i32
    %c0_i32_1 = arith.constant 0 : i32
    return %c0_i32, %c0_i32_0 : i32, i32
  }
  func.func @transform_5(%arg0: i32) -> (i32, i32) {
    %c0_i32 = arith.constant 0 : i32
    %c0_i32_0 = arith.constant 0 : i32
    %c0_i32_1 = arith.constant 0 : i32
    return %c0_i32, %c0_i32_0 : i32, i32
  }
}

module attributes {stable_mosaic.version = 11 : i64} {
  func.func @_stage_kernel(%arg0: i32, %arg1: memref<4x14x384xbf16, #tpu.memory_space<vmem>>, %arg2: memref<384x128xbf16, #tpu.memory_space<vmem>>, %arg3: memref<1x128xf32, #tpu.memory_space<vmem>>, %arg4: memref<1x128xf32, #tpu.memory_space<vmem>>, %arg5: memref<14x128xbf16, #tpu.memory_space<vmem>>) attributes {dimension_semantics = [#tpu.dimension_semantics<arbitrary>], iteration_bounds = array<i64: 1>, scalar_prefetch = 0 : i64, scratch_operands = 0 : i64, tpu.core_type = #tpu.core_type<tc>, window_params = [{pipeline_mode = #tpu.pipeline_mode<synchronous>, transform_indices = @transform_0, window_bounds = array<i64: 4, 14, 384>}, {pipeline_mode = #tpu.pipeline_mode<synchronous>, transform_indices = @transform_1, window_bounds = array<i64: 384, 128>}, {pipeline_mode = #tpu.pipeline_mode<synchronous>, transform_indices = @transform_2, window_bounds = array<i64: 1, 128>}, {pipeline_mode = #tpu.pipeline_mode<synchronous>, transform_indices = @transform_3, window_bounds = array<i64: 1, 128>}, {pipeline_mode = #tpu.pipeline_mode<synchronous>, transform_indices = @transform_4, window_bounds = array<i64: 14, 128>}]} {
    %c0 = arith.constant 0 : index
    %c0_0 = arith.constant 0 : index
    %0 = vector.load %arg2[%c0, %c0_0] : memref<384x128xbf16, #tpu.memory_space<vmem>>, vector<384x128xbf16>
    %c0_1 = arith.constant 0 : index
    %c0_2 = arith.constant 0 : index
    %c0_3 = arith.constant 0 : index
    %1 = vector.load %arg1[%c0_1, %c0_2, %c0_3] : memref<4x14x384xbf16, #tpu.memory_space<vmem>>, vector<1x14x384xbf16>
    %2 = vector.shape_cast %1 : vector<1x14x384xbf16> to vector<14x384xbf16>
    %cst = arith.constant dense<0.000000e+00> : vector<14x128xf32>
    %3 = tpu.matmul %2, %0, %cst {dimension_numbers = #tpu.dot_dimension_numbers<[1], [0], [0], [1], [0, 0, 1, 1], [], []>} : vector<14x384xbf16>, vector<384x128xbf16>, vector<14x128xf32> -> vector<14x128xf32>
    %c1 = arith.constant 1 : index
    %c0_4 = arith.constant 0 : index
    %c0_5 = arith.constant 0 : index
    %4 = vector.load %arg1[%c1, %c0_4, %c0_5] : memref<4x14x384xbf16, #tpu.memory_space<vmem>>, vector<1x14x384xbf16>
    %5 = vector.shape_cast %4 : vector<1x14x384xbf16> to vector<14x384xbf16>
    %cst_6 = arith.constant dense<0.000000e+00> : vector<14x128xf32>
    %6 = tpu.matmul %5, %0, %cst_6 {dimension_numbers = #tpu.dot_dimension_numbers<[1], [0], [0], [1], [0, 0, 1, 1], [], []>} : vector<14x384xbf16>, vector<384x128xbf16>, vector<14x128xf32> -> vector<14x128xf32>
    %c2 = arith.constant 2 : index
    %c0_7 = arith.constant 0 : index
    %c0_8 = arith.constant 0 : index
    %7 = vector.load %arg1[%c2, %c0_7, %c0_8] : memref<4x14x384xbf16, #tpu.memory_space<vmem>>, vector<1x14x384xbf16>
    %8 = vector.shape_cast %7 : vector<1x14x384xbf16> to vector<14x384xbf16>
    %cst_9 = arith.constant dense<0.000000e+00> : vector<14x128xf32>
    %9 = tpu.matmul %8, %0, %cst_9 {dimension_numbers = #tpu.dot_dimension_numbers<[1], [0], [0], [1], [0, 0, 1, 1], [], []>} : vector<14x384xbf16>, vector<384x128xbf16>, vector<14x128xf32> -> vector<14x128xf32>
    %c3 = arith.constant 3 : index
    %c0_10 = arith.constant 0 : index
    %c0_11 = arith.constant 0 : index
    %10 = vector.load %arg1[%c3, %c0_10, %c0_11] : memref<4x14x384xbf16, #tpu.memory_space<vmem>>, vector<1x14x384xbf16>
    %11 = vector.shape_cast %10 : vector<1x14x384xbf16> to vector<14x384xbf16>
    %cst_12 = arith.constant dense<0.000000e+00> : vector<14x128xf32>
    %12 = tpu.matmul %11, %0, %cst_12 {dimension_numbers = #tpu.dot_dimension_numbers<[1], [0], [0], [1], [0, 0, 1, 1], [], []>} : vector<14x384xbf16>, vector<384x128xbf16>, vector<14x128xf32> -> vector<14x128xf32>
    %cst_13 = arith.constant dense<0.000000e+00> : vector<128xf32>
    %13 = vector.multi_reduction <add>, %3, %cst_13 [0] : vector<14x128xf32> to vector<128xf32>
    %14 = vector.shape_cast %13 : vector<128xf32> to vector<1x128xf32>
    %cst_14 = arith.constant dense<0.000000e+00> : vector<128xf32>
    %15 = vector.multi_reduction <add>, %6, %cst_14 [0] : vector<14x128xf32> to vector<128xf32>
    %16 = vector.shape_cast %15 : vector<128xf32> to vector<1x128xf32>
    %17 = arith.addf %14, %16 : vector<1x128xf32>
    %cst_15 = arith.constant dense<0.000000e+00> : vector<128xf32>
    %18 = vector.multi_reduction <add>, %9, %cst_15 [0] : vector<14x128xf32> to vector<128xf32>
    %19 = vector.shape_cast %18 : vector<128xf32> to vector<1x128xf32>
    %20 = arith.addf %17, %19 : vector<1x128xf32>
    %cst_16 = arith.constant dense<0.000000e+00> : vector<128xf32>
    %21 = vector.multi_reduction <add>, %12, %cst_16 [0] : vector<14x128xf32> to vector<128xf32>
    %22 = vector.shape_cast %21 : vector<128xf32> to vector<1x128xf32>
    %23 = arith.addf %20, %22 : vector<1x128xf32>
    %cst_17 = arith.constant 0.0178571437 : f32
    %24 = vector.broadcast %cst_17 : f32 to vector<1x128xf32>
    %25 = arith.mulf %23, %24 : vector<1x128xf32>
    %26 = vector.broadcast %25 : vector<1x128xf32> to vector<14x128xf32>
    %27 = arith.subf %3, %26 : vector<14x128xf32>
    %28 = arith.mulf %27, %27 : vector<14x128xf32>
    %cst_18 = arith.constant dense<0.000000e+00> : vector<128xf32>
    %29 = vector.multi_reduction <add>, %28, %cst_18 [0] : vector<14x128xf32> to vector<128xf32>
    %30 = vector.shape_cast %29 : vector<128xf32> to vector<1x128xf32>
    %31 = vector.broadcast %25 : vector<1x128xf32> to vector<14x128xf32>
    %32 = arith.subf %6, %31 : vector<14x128xf32>
    %33 = arith.mulf %32, %32 : vector<14x128xf32>
    %cst_19 = arith.constant dense<0.000000e+00> : vector<128xf32>
    %34 = vector.multi_reduction <add>, %33, %cst_19 [0] : vector<14x128xf32> to vector<128xf32>
    %35 = vector.shape_cast %34 : vector<128xf32> to vector<1x128xf32>
    %36 = arith.addf %30, %35 : vector<1x128xf32>
    %37 = vector.broadcast %25 : vector<1x128xf32> to vector<14x128xf32>
    %38 = arith.subf %9, %37 : vector<14x128xf32>
    %39 = arith.mulf %38, %38 : vector<14x128xf32>
    %cst_20 = arith.constant dense<0.000000e+00> : vector<128xf32>
    %40 = vector.multi_reduction <add>, %39, %cst_20 [0] : vector<14x128xf32> to vector<128xf32>
    %41 = vector.shape_cast %40 : vector<128xf32> to vector<1x128xf32>
    %42 = arith.addf %36, %41 : vector<1x128xf32>
    %43 = vector.broadcast %25 : vector<1x128xf32> to vector<14x128xf32>
    %44 = arith.subf %12, %43 : vector<14x128xf32>
    %45 = arith.mulf %44, %44 : vector<14x128xf32>
    %cst_21 = arith.constant dense<0.000000e+00> : vector<128xf32>
    %46 = vector.multi_reduction <add>, %45, %cst_21 [0] : vector<14x128xf32> to vector<128xf32>
    %47 = vector.shape_cast %46 : vector<128xf32> to vector<1x128xf32>
    %48 = arith.addf %42, %47 : vector<1x128xf32>
    %cst_22 = arith.constant 0.0178571437 : f32
    %49 = vector.broadcast %cst_22 : f32 to vector<1x128xf32>
    %50 = arith.mulf %48, %49 : vector<1x128xf32>
    %c0_23 = arith.constant 0 : index
    %c0_24 = arith.constant 0 : index
    %51 = vector.load %arg3[%c0_23, %c0_24] : memref<1x128xf32, #tpu.memory_space<vmem>>, vector<1x128xf32>
    %cst_25 = arith.constant 9.99999974E-6 : f32
    %52 = vector.broadcast %cst_25 : f32 to vector<1x128xf32>
    %53 = arith.addf %50, %52 : vector<1x128xf32>
    %54 = math.rsqrt %53 : vector<1x128xf32>
    %55 = arith.mulf %51, %54 : vector<1x128xf32>
    %c0_26 = arith.constant 0 : index
    %c0_27 = arith.constant 0 : index
    %56 = vector.load %arg4[%c0_26, %c0_27] : memref<1x128xf32, #tpu.memory_space<vmem>>, vector<1x128xf32>
    %57 = arith.mulf %25, %55 : vector<1x128xf32>
    %58 = arith.subf %56, %57 : vector<1x128xf32>
    %59 = vector.broadcast %55 : vector<1x128xf32> to vector<14x128xf32>
    %60 = arith.mulf %3, %59 : vector<14x128xf32>
    %61 = vector.broadcast %58 : vector<1x128xf32> to vector<14x128xf32>
    %62 = arith.addf %60, %61 : vector<14x128xf32>
    %cst_28 = arith.constant 0.000000e+00 : f32
    %63 = vector.broadcast %cst_28 : f32 to vector<14x128xf32>
    %64 = arith.maximumf %62, %63 : vector<14x128xf32>
    %65 = vector.broadcast %55 : vector<1x128xf32> to vector<14x128xf32>
    %66 = arith.mulf %6, %65 : vector<14x128xf32>
    %67 = vector.broadcast %58 : vector<1x128xf32> to vector<14x128xf32>
    %68 = arith.addf %66, %67 : vector<14x128xf32>
    %cst_29 = arith.constant 0.000000e+00 : f32
    %69 = vector.broadcast %cst_29 : f32 to vector<14x128xf32>
    %70 = arith.maximumf %68, %69 : vector<14x128xf32>
    %71 = vector.broadcast %55 : vector<1x128xf32> to vector<14x128xf32>
    %72 = arith.mulf %9, %71 : vector<14x128xf32>
    %73 = vector.broadcast %58 : vector<1x128xf32> to vector<14x128xf32>
    %74 = arith.addf %72, %73 : vector<14x128xf32>
    %cst_30 = arith.constant 0.000000e+00 : f32
    %75 = vector.broadcast %cst_30 : f32 to vector<14x128xf32>
    %76 = arith.maximumf %74, %75 : vector<14x128xf32>
    %77 = vector.broadcast %55 : vector<1x128xf32> to vector<14x128xf32>
    %78 = arith.mulf %12, %77 : vector<14x128xf32>
    %79 = vector.broadcast %58 : vector<1x128xf32> to vector<14x128xf32>
    %80 = arith.addf %78, %79 : vector<14x128xf32>
    %cst_31 = arith.constant 0.000000e+00 : f32
    %81 = vector.broadcast %cst_31 : f32 to vector<14x128xf32>
    %82 = arith.maximumf %80, %81 : vector<14x128xf32>
    %83 = arith.maximumf %64, %70 : vector<14x128xf32>
    %84 = arith.maximumf %76, %82 : vector<14x128xf32>
    %85 = arith.maximumf %83, %84 : vector<14x128xf32>
    %86 = arith.truncf %85 : vector<14x128xf32> to vector<14x128xbf16>
    %c0_32 = arith.constant 0 : index
    %c0_33 = arith.constant 0 : index
    %87 = vector.load %arg5[%c0_32, %c0_33] : memref<14x128xbf16, #tpu.memory_space<vmem>>, vector<14x128xbf16>
    tpu.vector_store %arg5[%c0_32, %c0_33], %86 {strides = array<i32>} : memref<14x128xbf16, #tpu.memory_space<vmem>>, vector<14x128xbf16>,
    return
  }
  func.func @transform_0(%arg0: i32) -> (i32, i32, i32) {
    %c0_i32 = arith.constant 0 : i32
    %c0_i32_0 = arith.constant 0 : i32
    %c0_i32_1 = arith.constant 0 : i32
    %c0_i32_2 = arith.constant 0 : i32
    return %c0_i32, %c0_i32_0, %c0_i32_1 : i32, i32, i32
  }
  func.func @transform_1(%arg0: i32) -> (i32, i32) {
    %c0_i32 = arith.constant 0 : i32
    %c0_i32_0 = arith.constant 0 : i32
    %c0_i32_1 = arith.constant 0 : i32
    return %c0_i32, %c0_i32_0 : i32, i32
  }
  func.func @transform_2(%arg0: i32) -> (i32, i32) {
    %c0_i32 = arith.constant 0 : i32
    %c0_i32_0 = arith.constant 0 : i32
    %c0_i32_1 = arith.constant 0 : i32
    return %c0_i32, %c0_i32_0 : i32, i32
  }
  func.func @transform_3(%arg0: i32) -> (i32, i32) {
    %c0_i32 = arith.constant 0 : i32
    %c0_i32_0 = arith.constant 0 : i32
    %c0_i32_1 = arith.constant 0 : i32
    return %c0_i32, %c0_i32_0 : i32, i32
  }
  func.func @transform_4(%arg0: i32) -> (i32, i32) {
    %c0_i32 = arith.constant 0 : i32
    %c0_i32_0 = arith.constant 0 : i32
    %c0_i32_1 = arith.constant 0 : i32
    return %c0_i32, %c0_i32_0 : i32, i32
  }
}

module attributes {stable_mosaic.version = 11 : i64} {
  func.func @_stage_kernel(%arg0: i32, %arg1: memref<4x2x384xbf16, #tpu.memory_space<vmem>>, %arg2: memref<2x384xbf16, #tpu.memory_space<vmem>>, %arg3: memref<384x128xbf16, #tpu.memory_space<vmem>>, %arg4: memref<1x128xf32, #tpu.memory_space<vmem>>, %arg5: memref<1x128xf32, #tpu.memory_space<vmem>>, %arg6: memref<128x2xf32, #tpu.memory_space<vmem>>, %arg7: memref<1x2xf32, #tpu.memory_space<vmem>>, %arg8: memref<2x2xf32, #tpu.memory_space<vmem>>) attributes {dimension_semantics = [#tpu.dimension_semantics<arbitrary>], iteration_bounds = array<i64: 1>, scalar_prefetch = 0 : i64, scratch_operands = 0 : i64, tpu.core_type = #tpu.core_type<tc>, window_params = [{pipeline_mode = #tpu.pipeline_mode<synchronous>, transform_indices = @transform_0, window_bounds = array<i64: 4, 2, 384>}, {pipeline_mode = #tpu.pipeline_mode<synchronous>, transform_indices = @transform_1, window_bounds = array<i64: 2, 384>}, {pipeline_mode = #tpu.pipeline_mode<synchronous>, transform_indices = @transform_2, window_bounds = array<i64: 384, 128>}, {pipeline_mode = #tpu.pipeline_mode<synchronous>, transform_indices = @transform_3, window_bounds = array<i64: 1, 128>}, {pipeline_mode = #tpu.pipeline_mode<synchronous>, transform_indices = @transform_4, window_bounds = array<i64: 1, 128>}, {pipeline_mode = #tpu.pipeline_mode<synchronous>, transform_indices = @transform_5, window_bounds = array<i64: 128, 2>}, {pipeline_mode = #tpu.pipeline_mode<synchronous>, transform_indices = @transform_6, window_bounds = array<i64: 1, 2>}, {pipeline_mode = #tpu.pipeline_mode<synchronous>, transform_indices = @transform_7, window_bounds = array<i64: 2, 2>}]} {
    %c0 = arith.constant 0 : index
    %c0_0 = arith.constant 0 : index
    %0 = vector.load %arg3[%c0, %c0_0] : memref<384x128xbf16, #tpu.memory_space<vmem>>, vector<384x128xbf16>
    %c0_1 = arith.constant 0 : index
    %c0_2 = arith.constant 0 : index
    %c0_3 = arith.constant 0 : index
    %1 = vector.load %arg1[%c0_1, %c0_2, %c0_3] : memref<4x2x384xbf16, #tpu.memory_space<vmem>>, vector<1x2x384xbf16>
    %2 = vector.shape_cast %1 : vector<1x2x384xbf16> to vector<2x384xbf16>
    %cst = arith.constant dense<0.000000e+00> : vector<2x128xf32>
    %3 = tpu.matmul %2, %0, %cst {dimension_numbers = #tpu.dot_dimension_numbers<[1], [0], [0], [1], [0, 0, 1, 1], [], []>} : vector<2x384xbf16>, vector<384x128xbf16>, vector<2x128xf32> -> vector<2x128xf32>
    %c1 = arith.constant 1 : index
    %c0_4 = arith.constant 0 : index
    %c0_5 = arith.constant 0 : index
    %4 = vector.load %arg1[%c1, %c0_4, %c0_5] : memref<4x2x384xbf16, #tpu.memory_space<vmem>>, vector<1x2x384xbf16>
    %5 = vector.shape_cast %4 : vector<1x2x384xbf16> to vector<2x384xbf16>
    %cst_6 = arith.constant dense<0.000000e+00> : vector<2x128xf32>
    %6 = tpu.matmul %5, %0, %cst_6 {dimension_numbers = #tpu.dot_dimension_numbers<[1], [0], [0], [1], [0, 0, 1, 1], [], []>} : vector<2x384xbf16>, vector<384x128xbf16>, vector<2x128xf32> -> vector<2x128xf32>
    %c2 = arith.constant 2 : index
    %c0_7 = arith.constant 0 : index
    %c0_8 = arith.constant 0 : index
    %7 = vector.load %arg1[%c2, %c0_7, %c0_8] : memref<4x2x384xbf16, #tpu.memory_space<vmem>>, vector<1x2x384xbf16>
    %8 = vector.shape_cast %7 : vector<1x2x384xbf16> to vector<2x384xbf16>
    %cst_9 = arith.constant dense<0.000000e+00> : vector<2x128xf32>
    %9 = tpu.matmul %8, %0, %cst_9 {dimension_numbers = #tpu.dot_dimension_numbers<[1], [0], [0], [1], [0, 0, 1, 1], [], []>} : vector<2x384xbf16>, vector<384x128xbf16>, vector<2x128xf32> -> vector<2x128xf32>
    %c3 = arith.constant 3 : index
    %c0_10 = arith.constant 0 : index
    %c0_11 = arith.constant 0 : index
    %10 = vector.load %arg1[%c3, %c0_10, %c0_11] : memref<4x2x384xbf16, #tpu.memory_space<vmem>>, vector<1x2x384xbf16>
    %11 = vector.shape_cast %10 : vector<1x2x384xbf16> to vector<2x384xbf16>
    %cst_12 = arith.constant dense<0.000000e+00> : vector<2x128xf32>
    %12 = tpu.matmul %11, %0, %cst_12 {dimension_numbers = #tpu.dot_dimension_numbers<[1], [0], [0], [1], [0, 0, 1, 1], [], []>} : vector<2x384xbf16>, vector<384x128xbf16>, vector<2x128xf32> -> vector<2x128xf32>
    %c0_13 = arith.constant 0 : index
    %c0_14 = arith.constant 0 : index
    %13 = vector.load %arg2[%c0_13, %c0_14] : memref<2x384xbf16, #tpu.memory_space<vmem>>, vector<2x384xbf16>
    %cst_15 = arith.constant dense<0.000000e+00> : vector<2x128xf32>
    %14 = tpu.matmul %13, %0, %cst_15 {dimension_numbers = #tpu.dot_dimension_numbers<[1], [0], [0], [1], [0, 0, 1, 1], [], []>} : vector<2x384xbf16>, vector<384x128xbf16>, vector<2x128xf32> -> vector<2x128xf32>
    %cst_16 = arith.constant dense<0.000000e+00> : vector<128xf32>
    %15 = vector.multi_reduction <add>, %3, %cst_16 [0] : vector<2x128xf32> to vector<128xf32>
    %16 = vector.shape_cast %15 : vector<128xf32> to vector<1x128xf32>
    %cst_17 = arith.constant dense<0.000000e+00> : vector<128xf32>
    %17 = vector.multi_reduction <add>, %6, %cst_17 [0] : vector<2x128xf32> to vector<128xf32>
    %18 = vector.shape_cast %17 : vector<128xf32> to vector<1x128xf32>
    %19 = arith.addf %16, %18 : vector<1x128xf32>
    %cst_18 = arith.constant dense<0.000000e+00> : vector<128xf32>
    %20 = vector.multi_reduction <add>, %9, %cst_18 [0] : vector<2x128xf32> to vector<128xf32>
    %21 = vector.shape_cast %20 : vector<128xf32> to vector<1x128xf32>
    %22 = arith.addf %19, %21 : vector<1x128xf32>
    %cst_19 = arith.constant dense<0.000000e+00> : vector<128xf32>
    %23 = vector.multi_reduction <add>, %12, %cst_19 [0] : vector<2x128xf32> to vector<128xf32>
    %24 = vector.shape_cast %23 : vector<128xf32> to vector<1x128xf32>
    %25 = arith.addf %22, %24 : vector<1x128xf32>
    %cst_20 = arith.constant dense<0.000000e+00> : vector<128xf32>
    %26 = vector.multi_reduction <add>, %14, %cst_20 [0] : vector<2x128xf32> to vector<128xf32>
    %27 = vector.shape_cast %26 : vector<128xf32> to vector<1x128xf32>
    %28 = arith.addf %25, %27 : vector<1x128xf32>
    %cst_21 = arith.constant 1.000000e-01 : f32
    %29 = vector.broadcast %cst_21 : f32 to vector<1x128xf32>
    %30 = arith.mulf %28, %29 : vector<1x128xf32>
    %31 = vector.broadcast %30 : vector<1x128xf32> to vector<2x128xf32>
    %32 = arith.subf %3, %31 : vector<2x128xf32>
    %33 = arith.mulf %32, %32 : vector<2x128xf32>
    %cst_22 = arith.constant dense<0.000000e+00> : vector<128xf32>
    %34 = vector.multi_reduction <add>, %33, %cst_22 [0] : vector<2x128xf32> to vector<128xf32>
    %35 = vector.shape_cast %34 : vector<128xf32> to vector<1x128xf32>
    %36 = vector.broadcast %30 : vector<1x128xf32> to vector<2x128xf32>
    %37 = arith.subf %6, %36 : vector<2x128xf32>
    %38 = arith.mulf %37, %37 : vector<2x128xf32>
    %cst_23 = arith.constant dense<0.000000e+00> : vector<128xf32>
    %39 = vector.multi_reduction <add>, %38, %cst_23 [0] : vector<2x128xf32> to vector<128xf32>
    %40 = vector.shape_cast %39 : vector<128xf32> to vector<1x128xf32>
    %41 = arith.addf %35, %40 : vector<1x128xf32>
    %42 = vector.broadcast %30 : vector<1x128xf32> to vector<2x128xf32>
    %43 = arith.subf %9, %42 : vector<2x128xf32>
    %44 = arith.mulf %43, %43 : vector<2x128xf32>
    %cst_24 = arith.constant dense<0.000000e+00> : vector<128xf32>
    %45 = vector.multi_reduction <add>, %44, %cst_24 [0] : vector<2x128xf32> to vector<128xf32>
    %46 = vector.shape_cast %45 : vector<128xf32> to vector<1x128xf32>
    %47 = arith.addf %41, %46 : vector<1x128xf32>
    %48 = vector.broadcast %30 : vector<1x128xf32> to vector<2x128xf32>
    %49 = arith.subf %12, %48 : vector<2x128xf32>
    %50 = arith.mulf %49, %49 : vector<2x128xf32>
    %cst_25 = arith.constant dense<0.000000e+00> : vector<128xf32>
    %51 = vector.multi_reduction <add>, %50, %cst_25 [0] : vector<2x128xf32> to vector<128xf32>
    %52 = vector.shape_cast %51 : vector<128xf32> to vector<1x128xf32>
    %53 = arith.addf %47, %52 : vector<1x128xf32>
    %54 = vector.broadcast %30 : vector<1x128xf32> to vector<2x128xf32>
    %55 = arith.subf %14, %54 : vector<2x128xf32>
    %56 = arith.mulf %55, %55 : vector<2x128xf32>
    %cst_26 = arith.constant dense<0.000000e+00> : vector<128xf32>
    %57 = vector.multi_reduction <add>, %56, %cst_26 [0] : vector<2x128xf32> to vector<128xf32>
    %58 = vector.shape_cast %57 : vector<128xf32> to vector<1x128xf32>
    %59 = arith.addf %53, %58 : vector<1x128xf32>
    %cst_27 = arith.constant 1.000000e-01 : f32
    %60 = vector.broadcast %cst_27 : f32 to vector<1x128xf32>
    %61 = arith.mulf %59, %60 : vector<1x128xf32>
    %c0_28 = arith.constant 0 : index
    %c0_29 = arith.constant 0 : index
    %62 = vector.load %arg4[%c0_28, %c0_29] : memref<1x128xf32, #tpu.memory_space<vmem>>, vector<1x128xf32>
    %cst_30 = arith.constant 9.99999974E-6 : f32
    %63 = vector.broadcast %cst_30 : f32 to vector<1x128xf32>
    %64 = arith.addf %61, %63 : vector<1x128xf32>
    %65 = math.rsqrt %64 : vector<1x128xf32>
    %66 = arith.mulf %62, %65 : vector<1x128xf32>
    %c0_31 = arith.constant 0 : index
    %c0_32 = arith.constant 0 : index
    %67 = vector.load %arg5[%c0_31, %c0_32] : memref<1x128xf32, #tpu.memory_space<vmem>>, vector<1x128xf32>
    %68 = arith.mulf %30, %66 : vector<1x128xf32>
    %69 = arith.subf %67, %68 : vector<1x128xf32>
    %70 = vector.broadcast %66 : vector<1x128xf32> to vector<2x128xf32>
    %71 = arith.mulf %3, %70 : vector<2x128xf32>
    %72 = vector.broadcast %69 : vector<1x128xf32> to vector<2x128xf32>
    %73 = arith.addf %71, %72 : vector<2x128xf32>
    %cst_33 = arith.constant 0.000000e+00 : f32
    %74 = vector.broadcast %cst_33 : f32 to vector<2x128xf32>
    %75 = arith.maximumf %73, %74 : vector<2x128xf32>
    %76 = vector.broadcast %66 : vector<1x128xf32> to vector<2x128xf32>
    %77 = arith.mulf %6, %76 : vector<2x128xf32>
    %78 = vector.broadcast %69 : vector<1x128xf32> to vector<2x128xf32>
    %79 = arith.addf %77, %78 : vector<2x128xf32>
    %cst_34 = arith.constant 0.000000e+00 : f32
    %80 = vector.broadcast %cst_34 : f32 to vector<2x128xf32>
    %81 = arith.maximumf %79, %80 : vector<2x128xf32>
    %82 = vector.broadcast %66 : vector<1x128xf32> to vector<2x128xf32>
    %83 = arith.mulf %9, %82 : vector<2x128xf32>
    %84 = vector.broadcast %69 : vector<1x128xf32> to vector<2x128xf32>
    %85 = arith.addf %83, %84 : vector<2x128xf32>
    %cst_35 = arith.constant 0.000000e+00 : f32
    %86 = vector.broadcast %cst_35 : f32 to vector<2x128xf32>
    %87 = arith.maximumf %85, %86 : vector<2x128xf32>
    %88 = vector.broadcast %66 : vector<1x128xf32> to vector<2x128xf32>
    %89 = arith.mulf %12, %88 : vector<2x128xf32>
    %90 = vector.broadcast %69 : vector<1x128xf32> to vector<2x128xf32>
    %91 = arith.addf %89, %90 : vector<2x128xf32>
    %cst_36 = arith.constant 0.000000e+00 : f32
    %92 = vector.broadcast %cst_36 : f32 to vector<2x128xf32>
    %93 = arith.maximumf %91, %92 : vector<2x128xf32>
    %94 = arith.maximumf %75, %81 : vector<2x128xf32>
    %95 = arith.maximumf %87, %93 : vector<2x128xf32>
    %96 = arith.maximumf %94, %95 : vector<2x128xf32>
    %c0_37 = arith.constant 0 : index
    %c0_38 = arith.constant 0 : index
    %97 = vector.load %arg6[%c0_37, %c0_38] : memref<128x2xf32, #tpu.memory_space<vmem>>, vector<128x2xf32>
    %cst_39 = arith.constant dense<0.000000e+00> : vector<2x2xf32>
    %98 = tpu.matmul %96, %97, %cst_39 {dimension_numbers = #tpu.dot_dimension_numbers<[1], [0], [0], [1], [0, 0, 1, 1], [], []>} : vector<2x128xf32>, vector<128x2xf32>, vector<2x2xf32> -> vector<2x2xf32>
    %c0_40 = arith.constant 0 : index
    %c0_41 = arith.constant 0 : index
    %99 = vector.load %arg7[%c0_40, %c0_41] : memref<1x2xf32, #tpu.memory_space<vmem>>, vector<1x2xf32>
    %100 = vector.broadcast %99 : vector<1x2xf32> to vector<2x2xf32>
    %101 = arith.addf %98, %100 : vector<2x2xf32>
    %cst_42 = arith.constant dense<0xFF800000> : vector<2xf32>
    %102 = vector.multi_reduction <maximumf>, %101, %cst_42 [1] : vector<2x2xf32> to vector<2xf32>
    %103 = vector.shape_cast %102 : vector<2xf32> to vector<2x1xf32>
    %104 = vector.broadcast %103 : vector<2x1xf32> to vector<2x2xf32>
    %105 = arith.subf %101, %104 : vector<2x2xf32>
    %106 = math.exp %105 : vector<2x2xf32>
    %cst_43 = arith.constant dense<0.000000e+00> : vector<2xf32>
    %107 = vector.multi_reduction <add>, %106, %cst_43 [1] : vector<2x2xf32> to vector<2xf32>
    %108 = vector.shape_cast %107 : vector<2xf32> to vector<2x1xf32>
    %109 = math.log %108 : vector<2x1xf32>
    %110 = vector.broadcast %109 : vector<2x1xf32> to vector<2x2xf32>
    %111 = arith.subf %105, %110 : vector<2x2xf32>
    %c0_44 = arith.constant 0 : index
    %c0_45 = arith.constant 0 : index
    %112 = vector.load %arg8[%c0_44, %c0_45] : memref<2x2xf32, #tpu.memory_space<vmem>>, vector<2x2xf32>
    tpu.vector_store %arg8[%c0_44, %c0_45], %111 {strides = array<i32>} : memref<2x2xf32, #tpu.memory_space<vmem>>, vector<2x2xf32>,
    return
  }
  func.func @transform_0(%arg0: i32) -> (i32, i32, i32) {
    %c0_i32 = arith.constant 0 : i32
    %c0_i32_0 = arith.constant 0 : i32
    %c0_i32_1 = arith.constant 0 : i32
    %c0_i32_2 = arith.constant 0 : i32
    return %c0_i32, %c0_i32_0, %c0_i32_1 : i32, i32, i32
  }
  func.func @transform_1(%arg0: i32) -> (i32, i32) {
    %c0_i32 = arith.constant 0 : i32
    %c0_i32_0 = arith.constant 0 : i32
    %c0_i32_1 = arith.constant 0 : i32
    return %c0_i32, %c0_i32_0 : i32, i32
  }
  func.func @transform_2(%arg0: i32) -> (i32, i32) {
    %c0_i32 = arith.constant 0 : i32
    %c0_i32_0 = arith.constant 0 : i32
    %c0_i32_1 = arith.constant 0 : i32
    return %c0_i32, %c0_i32_0 : i32, i32
  }
  func.func @transform_3(%arg0: i32) -> (i32, i32) {
    %c0_i32 = arith.constant 0 : i32
    %c0_i32_0 = arith.constant 0 : i32
    %c0_i32_1 = arith.constant 0 : i32
    return %c0_i32, %c0_i32_0 : i32, i32
  }
  func.func @transform_4(%arg0: i32) -> (i32, i32) {
    %c0_i32 = arith.constant 0 : i32
    %c0_i32_0 = arith.constant 0 : i32
    %c0_i32_1 = arith.constant 0 : i32
    return %c0_i32, %c0_i32_0 : i32, i32
  }
  func.func @transform_5(%arg0: i32) -> (i32, i32) {
    %c0_i32 = arith.constant 0 : i32
    %c0_i32_0 = arith.constant 0 : i32
    %c0_i32_1 = arith.constant 0 : i32
    return %c0_i32, %c0_i32_0 : i32, i32
  }
  func.func @transform_6(%arg0: i32) -> (i32, i32) {
    %c0_i32 = arith.constant 0 : i32
    %c0_i32_0 = arith.constant 0 : i32
    %c0_i32_1 = arith.constant 0 : i32
    return %c0_i32, %c0_i32_0 : i32, i32
  }
  func.func @transform_7(%arg0: i32) -> (i32, i32) {
    %c0_i32 = arith.constant 0 : i32
    %c0_i32_0 = arith.constant 0 : i32
    %c0_i32_1 = arith.constant 0 : i32
    return %c0_i32, %c0_i32_0 : i32, i32
  }
}

</mosaic_0001>

<llo_original>
// kernel: m5_forward.4
$region0: #{m5_forward.4}
  #allocation0 [shape = 'u32[]', space=smem, size = 0x4, offset = 0x4, fixed_abs, tag = 'smem constant byte address 0x4 - core index']
  #allocation1 [shape = 'u32[144,128]{1,0:T(1,128)}', space=vmem, size = 0x12000, scoped, tag = 'internal scratch']
  %s0 = inlined_call_operand.vmem [shape: bf16[4,248,80], index: 0, kind: input, shape index: {}]
  %s1 = inlined_call_operand.vmem [shape: bf16[80,128], index: 1, kind: input, shape index: {}]
  %s2 = inlined_call_operand.vmem [shape: f32[1,128], index: 2, kind: input, shape index: {}]
  %s3 = inlined_call_operand.vmem [shape: f32[1,128], index: 3, kind: input, shape index: {}]
  %s4 = inlined_call_operand.vmem [shape: bf16[248,128], index: 4, kind: output, shape index: {}]
  %s5 = sld [smem:[#allocation0]]
  $region26: #{m5_forward.4} parent=0
    _
  %s7 = ssub.s32 1, %s5
  %s8 = scalar_select 0, %s7, %s5
  // Predicated region
  $region2: #{m5_forward.4} parent=0 // pred_check
    _
  $region3: #{m5_forward.4} parent=0 // pred_check_branch
    %10 = sbr.rel (0) target = $region5
  $region4: #{m5_forward.4} parent=0 // pred_region
    _
  $region5: #{m5_forward.4} parent=0 // pred_fallthru
    _
  // Predicated region
  $region6: #{m5_forward.4} parent=0 // pred_check
    _
  $region7: #{m5_forward.4} parent=0 // pred_check_branch
    %12 = sbr.rel (0) target = $region9
  $region8: #{m5_forward.4} parent=0 // pred_region
    _
  $region9: #{m5_forward.4} parent=0 // pred_fallthru
    _
  // Predicated region
  $region10: #{m5_forward.4} parent=0 // pred_check
    _
  $region11: #{m5_forward.4} parent=0 // pred_check_branch
    %14 = sbr.rel (0) target = $region13
  $region12: #{m5_forward.4} parent=0 // pred_region
    _
  $region13: #{m5_forward.4} parent=0 // pred_fallthru
    _
  // Predicated region
  $region14: #{m5_forward.4} parent=0 // pred_check
    _
  $region15: #{m5_forward.4} parent=0 // pred_check_branch
    %16 = sbr.rel (0) target = $region17
  $region16: #{m5_forward.4} parent=0 // pred_region
    _
  $region17: #{m5_forward.4} parent=0 // pred_fallthru
    _
  %v18 = vld [vmem:[%s1] sm:$0xf]
  %v19 = vld [vmem:[%s1 + $0x4] sm:$0xf]
  %v20 = vld [vmem:[%s1 + $0x8] sm:$0xf]
  %v21 = vld [vmem:[%s1 + $0xc] sm:$0xf]
  %v22 = vld [vmem:[%s1 + $0x10] sm:$0xf]
  %v23 = vld [vmem:[%s1 + $0x14] sm:$0xf]
  %v24 = vld [vmem:[%s1 + $0x18] sm:$0xf]
  %v25 = vld [vmem:[%s1 + $0x1c] sm:$0xf]
  %v26 = vld [vmem:[%s1 + $0x20] sm:$0xf]
  %v27 = vld [vmem:[%s1 + $0x24] sm:$0xf]
  %v28 = vld [vmem:[%s0] sm:$0xf]
  %v29 = vld [vmem:[%s0 + $0x4] sm:$0xf]
  %v30 = vld [vmem:[%s0 + $0x8] sm:$0xf]
  %v31 = vld [vmem:[%s0 + $0xc] sm:$0xf]
  %v32 = vld [vmem:[%s0 + $0x10] sm:$0xf]
  %v33 = vld [vmem:[%s0 + $0x14] sm:$0xf]
  %v34 = vld [vmem:[%s0 + $0x18] sm:$0xf]
  %v35 = vld [vmem:[%s0 + $0x1c] sm:$0xf]
  %v36 = vld [vmem:[%s0 + $0x20] sm:$0xf]
  %v37 = vld [vmem:[%s0 + $0x24] sm:$0xf]
  %v38 = vld [vmem:[%s0 + $0x28] sm:$0xf]
  %v39 = vld [vmem:[%s0 + $0x2c] sm:$0xf]
  %v40 = vld [vmem:[%s0 + $0x30] sm:$0xf]
  %v41 = vld [vmem:[%s0 + $0x34] sm:$0xf]
  %v42 = vld [vmem:[%s0 + $0x38] sm:$0xf]
  %v43 = vld [vmem:[%s0 + $0x3c] sm:$0xf]
  %v44 = vld [vmem:[%s0 + $0x40] sm:$0xf]
  %v45 = vld [vmem:[%s0 + $0x44] sm:$0xf]
  %v46 = vld [vmem:[%s0 + $0x48] sm:$0xf]
  %v47 = vld [vmem:[%s0 + $0x4c] sm:$0xf]
  %v48 = vld [vmem:[%s0 + $0x50] sm:$0xf]
  %v49 = vld [vmem:[%s0 + $0x54] sm:$0xf]
  %v50 = vld [vmem:[%s0 + $0x58] sm:$0xf]
  %v51 = vld [vmem:[%s0 + $0x5c] sm:$0xf]
  %v52 = vld [vmem:[%s0 + $0x60] sm:$0xf]
  %v53 = vld [vmem:[%s0 + $0x64] sm:$0xf]
  %v54 = vld [vmem:[%s0 + $0x68] sm:$0xf]
  %v55 = vld [vmem:[%s0 + $0x6c] sm:$0xf]
  %v56 = vld [vmem:[%s0 + $0x70] sm:$0xf]
  %v57 = vld [vmem:[%s0 + $0x74] sm:$0xf]
  %v58 = vld [vmem:[%s0 + $0x78] sm:$0xf]
  %v90 = vunpack.c.l.b16 %v28
  %v91 = vunpack.c.l.b16 %v29
  %v92 = vunpack.c.l.b16 %v30
  %v93 = vunpack.c.l.b16 %v31
  %v94 = vunpack.c.l.b16 %v32
  %v95 = vunpack.c.l.b16 %v33
  %v96 = vunpack.c.l.b16 %v34
  %v97 = vunpack.c.l.b16 %v35
  %v98 = vunpack.c.l.b16 %v36
  %v99 = vunpack.c.l.b16 %v37
  %v100 = vunpack.c.l.b16 %v38
  %v101 = vunpack.c.l.b16 %v39
  %v102 = vunpack.c.l.b16 %v40
  %v103 = vunpack.c.l.b16 %v41
  %v104 = vunpack.c.l.b16 %v42
  %v105 = vunpack.c.l.b16 %v43
  %v106 = vunpack.c.l.b16 %v44
  %v107 = vunpack.c.l.b16 %v45
  %v108 = vunpack.c.l.b16 %v46
  %v109 = vunpack.c.l.b16 %v47
  %v110 = vunpack.c.l.b16 %v48
  %v111 = vunpack.c.l.b16 %v49
  %v112 = vunpack.c.l.b16 %v50
  %v113 = vunpack.c.l.b16 %v51
  %v114 = vunpack.c.l.b16 %v52
  %v115 = vunpack.c.l.b16 %v53
  %v116 = vunpack.c.l.b16 %v54
  %v117 = vunpack.c.l.b16 %v55
  %v118 = vunpack.c.l.b16 %v56
  %v119 = vunpack.c.l.b16 %v57
  %v120 = vunpack.c.l.b16 %v58
  %v121 = vpack.c.b16 %v91, %v90
  %v122 = vpack.c.b16 %v93, %v92
  %v123 = vpack.c.b16 %v95, %v94
  %v124 = vpack.c.b16 %v97, %v96
  %v125 = vpack.c.b16 %v99, %v98
  %v126 = vpack.c.b16 %v101, %v100
  %v127 = vpack.c.b16 %v103, %v102
  %v128 = vpack.c.b16 %v105, %v104
  %v129 = vpack.c.b16 %v107, %v106
  %v130 = vpack.c.b16 %v109, %v108
  %v131 = vpack.c.b16 %v111, %v110
  %v132 = vpack.c.b16 %v113, %v112
  %v133 = vpack.c.b16 %v115, %v114
  %v134 = vpack.c.b16 %v117, %v116
  %v135 = vpack.c.b16 %v119, %v118
  %v136 = vpack.c.b16 %v120, %v120
  %v147 = vunpack.c.l.b16 %v18
  %v148 = vunpack.c.l.b16 %v19
  %v149 = vunpack.c.l.b16 %v20
  %v150 = vunpack.c.l.b16 %v21
  %v151 = vunpack.c.l.b16 %v22
  %v152 = vunpack.c.l.b16 %v23
  %v153 = vunpack.c.l.b16 %v24
  %v154 = vunpack.c.l.b16 %v25
  %v155 = vunpack.c.l.b16 %v26
  %v156 = vunpack.c.l.b16 %v27
  %v157 = vpack.c.b16 %v148, %v147
  %v158 = vpack.c.b16 %v150, %v149
  %v159 = vpack.c.b16 %v152, %v151
  %v160 = vpack.c.b16 %v154, %v153
  %v161 = vpack.c.b16 %v156, %v155
  %vm167 = vcmask 654336
  %v169 = vsel %vm167, %v121, 0
  %v172 = vsel %vm167, %v122, 0
  %v175 = vsel %vm167, %v123, 0
  %v178 = vsel %vm167, %v124, 0
  %v181 = vsel %vm167, %v125, 0
  %v184 = vsel %vm167, %v126, 0
  %v187 = vsel %vm167, %v127, 0
  %v190 = vsel %vm167, %v128, 0
  %v193 = vsel %vm167, %v129, 0
  %v196 = vsel %vm167, %v130, 0
  %v199 = vsel %vm167, %v131, 0
  %v202 = vsel %vm167, %v132, 0
  %v205 = vsel %vm167, %v133, 0
  %v208 = vsel %vm167, %v134, 0
  %v211 = vsel %vm167, %v135, 0
  %v214 = vsel %vm167, %v136, 0
  %216 = vmatprep.subr.bf16.mxu0 0
  %217 = vmatpush1.bf16.msra.mxu0 %v157
  %218 = vmatprep.subr.bf16.mxu0 0
  %219 = vmatpush1.bf16.msra.mxu0 %v158
  %220 = vmatprep.subr.bf16.mxu0 0
  %221 = vmatpush1.bf16.msra.mxu0 %v159
  %222 = vmatprep.subr.bf16.mxu0 0
  %223 = vmatpush1.bf16.msra.mxu0 %v160
  %224 = vmatprep.subr.bf16.mxu0 0
  %225 = vmatpush1.bf16.msra.mxu0 %v161
  %226 = vmatprep.subr.bf16.mxu0 0
  %227 = vmatpush1.bf16.msra.mxu0 0
  %228 = vmatprep.subr.bf16.mxu0 0
  %229 = vmatpush1.bf16.msra.mxu0 0
  %230 = vmatprep.subr.bf16.mxu0 0
  %231 = vmatpush1.bf16.msra.mxu0 0
  %232 = vmatprep.subr.bf16.mxu0 0
  %233 = vmatpush1.bf16.msra.mxu0 0
  %234 = vmatprep.subr.bf16.mxu0 0
  %235 = vmatpush1.bf16.msra.mxu0 0
  %236 = vmatprep.subr.bf16.mxu0 0
  %237 = vmatpush1.bf16.msra.mxu0 0
  %238 = vmatprep.subr.bf16.mxu0 0
  %239 = vmatpush1.bf16.msra.mxu0 0
  %240 = vmatprep.subr.bf16.mxu0 0
  %241 = vmatpush1.bf16.msra.mxu0 0
  %242 = vmatprep.subr.bf16.mxu0 0
  %243 = vmatpush1.bf16.msra.mxu0 0
  %244 = vmatprep.subr.bf16.mxu0 0
  %245 = vmatpush1.bf16.msra.mxu0 0
  %246 = vmatprep.subr.bf16.mxu0 0
  %247 = vmatpush1.bf16.msra.mxu0 0
  %248 = vmatprep.mubr.bf16.mxu0 0
  %249 = vmatmul.mubr.bf16.gmra.mrb[0].mxu0 %v169
  %v250 = vpop.f32.mrb[0].mxu0
  %v251 = vadd.f32 0.0, %v250
  %v252 = vpop.f32.mrb[0].mxu0
  %v253 = vpop.f32.mrb[0].mxu0
  %v254 = vadd.f32 0.0, %v253
  %v255 = vpop.f32.mrb[0].mxu0
  %256 = vmatprep.mubr.bf16.mxu0 0
  %257 = vmatmul.mubr.bf16.gmra.mrb[0].mxu0 %v172
  %v258 = vpop.f32.mrb[0].mxu0
  %v259 = vadd.f32 0.0, %v258
  %v260 = vpop.f32.mrb[0].mxu0
  %v261 = vpop.f32.mrb[0].mxu0
  %v262 = vadd.f32 0.0, %v261
  %v263 = vpop.f32.mrb[0].mxu0
  %264 = vmatprep.mubr.bf16.mxu0 0
  %265 = vmatmul.mubr.bf16.gmra.mrb[0].mxu0 %v175
  %v266 = vpop.f32.mrb[0].mxu0
  %v267 = vadd.f32 0.0, %v266
  %v268 = vpop.f32.mrb[0].mxu0
  %v269 = vpop.f32.mrb[0].mxu0
  %v270 = vadd.f32 0.0, %v269
  %v271 = vpop.f32.mrb[0].mxu0
  %272 = vmatprep.mubr.bf16.mxu0 0
  %273 = vmatmul.mubr.bf16.gmra.mrb[0].mxu0 %v178
  %v274 = vpop.f32.mrb[0].mxu0
  %v275 = vadd.f32 0.0, %v274
  %v276 = vpop.f32.mrb[0].mxu0
  %v277 = vpop.f32.mrb[0].mxu0
  %v278 = vadd.f32 0.0, %v277
  %v279 = vpop.f32.mrb[0].mxu0
  %280 = vmatprep.mubr.bf16.mxu0 0
  %281 = vmatmul.mubr.bf16.gmra.mrb[0].mxu0 %v181
  %v282 = vpop.f32.mrb[0].mxu0
  %v283 = vadd.f32 0.0, %v282
  %v284 = vpop.f32.mrb[0].mxu0
  %v285 = vpop.f32.mrb[0].mxu0
  %v286 = vadd.f32 0.0, %v285
  %v287 = vpop.f32.mrb[0].mxu0
  %288 = vmatprep.mubr.bf16.mxu0 0
  %289 = vmatmul.mubr.bf16.gmra.mrb[0].mxu0 %v184
  %v290 = vpop.f32.mrb[0].mxu0
  %v291 = vadd.f32 0.0, %v290
  %v292 = vpop.f32.mrb[0].mxu0
  %v293 = vpop.f32.mrb[0].mxu0
  %v294 = vadd.f32 0.0, %v293
  %v295 = vpop.f32.mrb[0].mxu0
  %296 = vmatprep.mubr.bf16.mxu0 0
  %297 = vmatmul.mubr.bf16.gmra.mrb[0].mxu0 %v187
  %v298 = vpop.f32.mrb[0].mxu0
  %v299 = vadd.f32 0.0, %v298
  %v300 = vpop.f32.mrb[0].mxu0
  %v301 = vpop.f32.mrb[0].mxu0
  %v302 = vadd.f32 0.0, %v301
  %v303 = vpop.f32.mrb[0].mxu0
  %304 = vmatprep.mubr.bf16.mxu0 0
  %305 = vmatmul.mubr.bf16.gmra.mrb[0].mxu0 %v190
  %v306 = vpop.f32.mrb[0].mxu0
  %v307 = vadd.f32 0.0, %v306
  %v308 = vpop.f32.mrb[0].mxu0
  %v309 = vpop.f32.mrb[0].mxu0
  %v310 = vadd.f32 0.0, %v309
  %v311 = vpop.f32.mrb[0].mxu0
  %312 = vmatprep.mubr.bf16.mxu0 0
  %313 = vmatmul.mubr.bf16.gmra.mrb[0].mxu0 %v193
  %v314 = vpop.f32.mrb[0].mxu0
  %v315 = vadd.f32 0.0, %v314
  %v316 = vpop.f32.mrb[0].mxu0
  %v317 = vpop.f32.mrb[0].mxu0
  %v318 = vadd.f32 0.0, %v317
  %v319 = vpop.f32.mrb[0].mxu0
  %320 = vmatprep.mubr.bf16.mxu0 0
  %321 = vmatmul.mubr.bf16.gmra.mrb[0].mxu0 %v196
  %v322 = vpop.f32.mrb[0].mxu0
  %v323 = vadd.f32 0.0, %v322
  %v324 = vpop.f32.mrb[0].mxu0
  %v325 = vpop.f32.mrb[0].mxu0
  %v326 = vadd.f32 0.0, %v325
  %v327 = vpop.f32.mrb[0].mxu0
  %328 = vmatprep.mubr.bf16.mxu0 0
  %329 = vmatmul.mubr.bf16.gmra.mrb[0].mxu0 %v199
  %v330 = vpop.f32.mrb[0].mxu0
  %v331 = vadd.f32 0.0, %v330
  %v332 = vpop.f32.mrb[0].mxu0
  %v333 = vpop.f32.mrb[0].mxu0
  %v334 = vadd.f32 0.0, %v333
  %v335 = vpop.f32.mrb[0].mxu0
  %336 = vmatprep.mubr.bf16.mxu0 0
  %337 = vmatmul.mubr.bf16.gmra.mrb[0].mxu0 %v202
  %v338 = vpop.f32.mrb[0].mxu0
  %v339 = vadd.f32 0.0, %v338
  %v340 = vpop.f32.mrb[0].mxu0
  %v341 = vpop.f32.mrb[0].mxu0
  %v342 = vadd.f32 0.0, %v341
  %v343 = vpop.f32.mrb[0].mxu0
  %344 = vmatprep.mubr.bf16.mxu0 0
  %345 = vmatmul.mubr.bf16.gmra.mrb[0].mxu0 %v205
  %v346 = vpop.f32.mrb[0].mxu0
  %v347 = vadd.f32 0.0, %v346
  %v348 = vpop.f32.mrb[0].mxu0
  %v349 = vpop.f32.mrb[0].mxu0
  %v350 = vadd.f32 0.0, %v349
  %v351 = vpop.f32.mrb[0].mxu0
  %352 = vmatprep.mubr.bf16.mxu0 0
  %353 = vmatmul.mubr.bf16.gmra.mrb[0].mxu0 %v208
  %v354 = vpop.f32.mrb[0].mxu0
  %v355 = vadd.f32 0.0, %v354
  %v356 = vpop.f32.mrb[0].mxu0
  %v357 = vpop.f32.mrb[0].mxu0
  %v358 = vadd.f32 0.0, %v357
  %v359 = vpop.f32.mrb[0].mxu0
  %360 = vmatprep.mubr.bf16.mxu0 0
  %361 = vmatmul.mubr.bf16.gmra.mrb[0].mxu0 %v211
  %v362 = vpop.f32.mrb[0].mxu0
  %v363 = vadd.f32 0.0, %v362
  %v364 = vpop.f32.mrb[0].mxu0
  %v365 = vpop.f32.mrb[0].mxu0
  %v366 = vadd.f32 0.0, %v365
  %v367 = vpop.f32.mrb[0].mxu0
  %368 = vmatprep.mubr.bf16.mxu0 0
  %369 = vmatmul.mubr.bf16.gmra.mrb[0].mxu0 %v214
  %v370 = vpop.f32.mrb[0].mxu0
  %v371 = vadd.f32 0.0, %v370
  %v372 = vpop.f32.mrb[0].mxu0
  %v373 = vpop.f32.mrb[0].mxu0
  %v374 = vpop.f32.mrb[0].mxu0
  %375 = vdwg.mxu0
  %s376 = scalar_lea.vmem %s0, 124
  %v377 = vld [vmem:[%s376] sm:$0xf]
  %v378 = vld [vmem:[%s376 + $0x4] sm:$0xf]
  %v379 = vld [vmem:[%s376 + $0x8] sm:$0xf]
  %v380 = vld [vmem:[%s376 + $0xc] sm:$0xf]
  %v381 = vld [vmem:[%s376 + $0x10] sm:$0xf]
  %v382 = vld [vmem:[%s376 + $0x14] sm:$0xf]
  %v383 = vld [vmem:[%s376 + $0x18] sm:$0xf]
  %v384 = vld [vmem:[%s376 + $0x1c] sm:$0xf]
  %v385 = vld [vmem:[%s376 + $0x20] sm:$0xf]
  %v386 = vld [vmem:[%s376 + $0x24] sm:$0xf]
  %v387 = vld [vmem:[%s376 + $0x28] sm:$0xf]
  %v388 = vld [vmem:[%s376 + $0x2c] sm:$0xf]
  %v389 = vld [vmem:[%s376 + $0x30] sm:$0xf]
  %v390 = vld [vmem:[%s376 + $0x34] sm:$0xf]
  %v391 = vld [vmem:[%s376 + $0x38] sm:$0xf]
  %v392 = vld [vmem:[%s376 + $0x3c] sm:$0xf]
  %v393 = vld [vmem:[%s376 + $0x40] sm:$0xf]
  %v394 = vld [vmem:[%s376 + $0x44] sm:$0xf]
  %v395 = vld [vmem:[%s376 + $0x48] sm:$0xf]
  %v396 = vld [vmem:[%s376 + $0x4c] sm:$0xf]
  %v397 = vld [vmem:[%s376 + $0x50] sm:$0xf]
  %v398 = vld [vmem:[%s376 + $0x54] sm:$0xf]
  %v399 = vld [vmem:[%s376 + $0x58] sm:$0xf]
  %v400 = vld [vmem:[%s376 + $0x5c] sm:$0xf]
  %v401 = vld [vmem:[%s376 + $0x60] sm:$0xf]
  %v402 = vld [vmem:[%s376 + $0x64] sm:$0xf]
  %v403 = vld [vmem:[%s376 + $0x68] sm:$0xf]
  %v404 = vld [vmem:[%s376 + $0x6c] sm:$0xf]
  %v405 = vld [vmem:[%s376 + $0x70] sm:$0xf]
  %v406 = vld [vmem:[%s376 + $0x74] sm:$0xf]
  %v407 = vld [vmem:[%s376 + $0x78] sm:$0xf]
  %v439 = vunpack.c.l.b16 %v377
  %v440 = vunpack.c.l.b16 %v378
  %v441 = vunpack.c.l.b16 %v379
  %v442 = vunpack.c.l.b16 %v380
  %v443 = vunpack.c.l.b16 %v381
  %v444 = vunpack.c.l.b16 %v382
  %v445 = vunpack.c.l.b16 %v383
  %v446 = vunpack.c.l.b16 %v384
  %v447 = vunpack.c.l.b16 %v385
  %v448 = vunpack.c.l.b16 %v386
  %v449 = vunpack.c.l.b16 %v387
  %v450 = vunpack.c.l.b16 %v388
  %v451 = vunpack.c.l.b16 %v389
  %v452 = vunpack.c.l.b16 %v390
  %v453 = vunpack.c.l.b16 %v391
  %v454 = vunpack.c.l.b16 %v392
  %v455 = vunpack.c.l.b16 %v393
  %v456 = vunpack.c.l.b16 %v394
  %v457 = vunpack.c.l.b16 %v395
  %v458 = vunpack.c.l.b16 %v396
  %v459 = vunpack.c.l.b16 %v397
  %v460 = vunpack.c.l.b16 %v398
  %v461 = vunpack.c.l.b16 %v399
  %v462 = vunpack.c.l.b16 %v400
  %v463 = vunpack.c.l.b16 %v401
  %v464 = vunpack.c.l.b16 %v402
  %v465 = vunpack.c.l.b16 %v403
  %v466 = vunpack.c.l.b16 %v404
  %v467 = vunpack.c.l.b16 %v405
  %v468 = vunpack.c.l.b16 %v406
  %v469 = vunpack.c.l.b16 %v407
  %v470 = vpack.c.b16 %v440, %v439
  %v471 = vpack.c.b16 %v442, %v441
  %v472 = vpack.c.b16 %v444, %v443
  %v473 = vpack.c.b16 %v446, %v445
  %v474 = vpack.c.b16 %v448, %v447
  %v475 = vpack.c.b16 %v450, %v449
  %v476 = vpack.c.b16 %v452, %v451
  %v477 = vpack.c.b16 %v454, %v453
  %v478 = vpack.c.b16 %v456, %v455
  %v479 = vpack.c.b16 %v458, %v457
  %v480 = vpack.c.b16 %v460, %v459
  %v481 = vpack.c.b16 %v462, %v461
  %v482 = vpack.c.b16 %v464, %v463
  %v483 = vpack.c.b16 %v466, %v465
  %v484 = vpack.c.b16 %v468, %v467
  %v485 = vpack.c.b16 %v469, %v469
  %v487 = vsel %vm167, %v470, 0
  %v490 = vsel %vm167, %v471, 0
  %v493 = vsel %vm167, %v472, 0
  %v496 = vsel %vm167, %v473, 0
  %v499 = vsel %vm167, %v474, 0
  %v502 = vsel %vm167, %v475, 0
  %v505 = vsel %vm167, %v476, 0
  %v508 = vsel %vm167, %v477, 0
  %v511 = vsel %vm167, %v478, 0
  %v514 = vsel %vm167, %v479, 0
  %v517 = vsel %vm167, %v480, 0
  %v520 = vsel %vm167, %v481, 0
  %v523 = vsel %vm167, %v482, 0
  %v526 = vsel %vm167, %v483, 0
  %v529 = vsel %vm167, %v484, 0
  %v532 = vsel %vm167, %v485, 0
  %534 = vmatprep.subr.bf16.mxu0 0
  %535 = vmatpush1.bf16.msra.mxu0 %v157
  %536 = vmatprep.subr.bf16.mxu0 0
  %537 = vmatpush1.bf16.msra.mxu0 %v158
  %538 = vmatprep.subr.bf16.mxu0 0
  %539 = vmatpush1.bf16.msra.mxu0 %v159
  %540 = vmatprep.subr.bf16.mxu0 0
  %541 = vmatpush1.bf16.msra.mxu0 %v160
  %542 = vmatprep.subr.bf16.mxu0 0
  %543 = vmatpush1.bf16.msra.mxu0 %v161
  %544 = vmatprep.subr.bf16.mxu0 0
  %545 = vmatpush1.bf16.msra.mxu0 0
  %546 = vmatprep.subr.bf16.mxu0 0
  %547 = vmatpush1.bf16.msra.mxu0 0
  %548 = vmatprep.subr.bf16.mxu0 0
  %549 = vmatpush1.bf16.msra.mxu0 0
  %550 = vmatprep.subr.bf16.mxu0 0
  %551 = vmatpush1.bf16.msra.mxu0 0
  %552 = vmatprep.subr.bf16.mxu0 0
  %553 = vmatpush1.bf16.msra.mxu0 0
  %554 = vmatprep.subr.bf16.mxu0 0
  %555 = vmatpush1.bf16.msra.mxu0 0
  %556 = vmatprep.subr.bf16.mxu0 0
  %557 = vmatpush1.bf16.msra.mxu0 0
  %558 = vmatprep.subr.bf16.mxu0 0
  %559 = vmatpush1.bf16.msra.mxu0 0
  %560 = vmatprep.subr.bf16.mxu0 0
  %561 = vmatpush1.bf16.msra.mxu0 0
  %562 = vmatprep.subr.bf16.mxu0 0
  %563 = vmatpush1.bf16.msra.mxu0 0
  %564 = vmatprep.subr.bf16.mxu0 0
  %565 = vmatpush1.bf16.msra.mxu0 0
  %566 = vmatprep.mubr.bf16.mxu0 0
  %567 = vmatmul.mubr.bf16.gmra.mrb[0].mxu0 %v487
  %v568 = vpop.f32.mrb[0].mxu0
  %v569 = vadd.f32 0.0, %v568
  %v570 = vpop.f32.mrb[0].mxu0
  %v571 = vpop.f32.mrb[0].mxu0
  %v572 = vadd.f32 0.0, %v571
  %v573 = vpop.f32.mrb[0].mxu0
  %574 = vmatprep.mubr.bf16.mxu0 0
  %575 = vmatmul.mubr.bf16.gmra.mrb[0].mxu0 %v490
  %v576 = vpop.f32.mrb[0].mxu0
  %v577 = vadd.f32 0.0, %v576
  %v578 = vpop.f32.mrb[0].mxu0
  %v579 = vpop.f32.mrb[0].mxu0
  %v580 = vadd.f32 0.0, %v579
  %v581 = vpop.f32.mrb[0].mxu0
  %582 = vmatprep.mubr.bf16.mxu0 0
  %583 = vmatmul.mubr.bf16.gmra.mrb[0].mxu0 %v493
  %v584 = vpop.f32.mrb[0].mxu0
  %v585 = vadd.f32 0.0, %v584
  %v586 = vpop.f32.mrb[0].mxu0
  %v587 = vpop.f32.mrb[0].mxu0
  %v588 = vadd.f32 0.0, %v587
  %v589 = vpop.f32.mrb[0].mxu0
  %590 = vmatprep.mubr.bf16.mxu0 0
  %591 = vmatmul.mubr.bf16.gmra.mrb[0].mxu0 %v496
  %v592 = vpop.f32.mrb[0].mxu0
  %v593 = vadd.f32 0.0, %v592
  %v594 = vpop.f32.mrb[0].mxu0
  %v595 = vpop.f32.mrb[0].mxu0
  %v596 = vadd.f32 0.0, %v595
  %v597 = vpop.f32.mrb[0].mxu0
  %598 = vmatprep.mubr.bf16.mxu0 0
  %599 = vmatmul.mubr.bf16.gmra.mrb[0].mxu0 %v499
  %v600 = vpop.f32.mrb[0].mxu0
  %v601 = vadd.f32 0.0, %v600
  %v602 = vpop.f32.mrb[0].mxu0
  %v603 = vpop.f32.mrb[0].mxu0
  %v604 = vadd.f32 0.0, %v603
  %v605 = vpop.f32.mrb[0].mxu0
  %606 = vmatprep.mubr.bf16.mxu0 0
  %607 = vmatmul.mubr.bf16.gmra.mrb[0].mxu0 %v502
  %v608 = vpop.f32.mrb[0].mxu0
  %v609 = vadd.f32 0.0, %v608
  %v610 = vpop.f32.mrb[0].mxu0
  %v611 = vpop.f32.mrb[0].mxu0
  %v612 = vadd.f32 0.0, %v611
  %v613 = vpop.f32.mrb[0].mxu0
  %614 = vmatprep.mubr.bf16.mxu0 0
  %615 = vmatmul.mubr.bf16.gmra.mrb[0].mxu0 %v505
  %v616 = vpop.f32.mrb[0].mxu0
  %v617 = vadd.f32 0.0, %v616
  %v618 = vpop.f32.mrb[0].mxu0
  %v619 = vpop.f32.mrb[0].mxu0
  %v620 = vadd.f32 0.0, %v619
  %v621 = vpop.f32.mrb[0].mxu0
  %622 = vmatprep.mubr.bf16.mxu0 0
  %623 = vmatmul.mubr.bf16.gmra.mrb[0].mxu0 %v508
  %v624 = vpop.f32.mrb[0].mxu0
  %v625 = vadd.f32 0.0, %v624
  %v626 = vpop.f32.mrb[0].mxu0
  %v627 = vpop.f32.mrb[0].mxu0
  %v628 = vadd.f32 0.0, %v627
  %v629 = vpop.f32.mrb[0].mxu0
  %630 = vmatprep.mubr.bf16.mxu0 0
  %631 = vmatmul.mubr.bf16.gmra.mrb[0].mxu0 %v511
  %v632 = vpop.f32.mrb[0].mxu0
  %v633 = vadd.f32 0.0, %v632
  %v634 = vpop.f32.mrb[0].mxu0
  %v635 = vpop.f32.mrb[0].mxu0
  %v636 = vadd.f32 0.0, %v635
  %v637 = vpop.f32.mrb[0].mxu0
  %638 = vmatprep.mubr.bf16.mxu0 0
  %639 = vmatmul.mubr.bf16.gmra.mrb[0].mxu0 %v514
  %v640 = vpop.f32.mrb[0].mxu0
  %v641 = vadd.f32 0.0, %v640
  %v642 = vpop.f32.mrb[0].mxu0
  %v643 = vpop.f32.mrb[0].mxu0
  %v644 = vadd.f32 0.0, %v643
  %v645 = vpop.f32.mrb[0].mxu0
  %646 = vmatprep.mubr.bf16.mxu0 0
  %647 = vmatmul.mubr.bf16.gmra.mrb[0].mxu0 %v517
  %v648 = vpop.f32.mrb[0].mxu0
  %v649 = vadd.f32 0.0, %v648
  %v650 = vpop.f32.mrb[0].mxu0
  %v651 = vpop.f32.mrb[0].mxu0
  %v652 = vadd.f32 0.0, %v651
  %v653 = vpop.f32.mrb[0].mxu0
  %654 = vmatprep.mubr.bf16.mxu0 0
  %655 = vmatmul.mubr.bf16.gmra.mrb[0].mxu0 %v520
  %v656 = vpop.f32.mrb[0].mxu0
  %v657 = vadd.f32 0.0, %v656
  %v658 = vpop.f32.mrb[0].mxu0
  %v659 = vpop.f32.mrb[0].mxu0
  %v660 = vadd.f32 0.0, %v659
  %v661 = vpop.f32.mrb[0].mxu0
  %662 = vmatprep.mubr.bf16.mxu0 0
  %663 = vmatmul.mubr.bf16.gmra.mrb[0].mxu0 %v523
  %v664 = vpop.f32.mrb[0].mxu0
  %v665 = vadd.f32 0.0, %v664
  %v666 = vpop.f32.mrb[0].mxu0
  %v667 = vpop.f32.mrb[0].mxu0
  %v668 = vadd.f32 0.0, %v667
  %v669 = vpop.f32.mrb[0].mxu0
  %670 = vmatprep.mubr.bf16.mxu0 0
  %671 = vmatmul.mubr.bf16.gmra.mrb[0].mxu0 %v526
  %v672 = vpop.f32.mrb[0].mxu0
  %v673 = vadd.f32 0.0, %v672
  %v674 = vpop.f32.mrb[0].mxu0
  %v675 = vpop.f32.mrb[0].mxu0
  %v676 = vadd.f32 0.0, %v675
  %v677 = vpop.f32.mrb[0].mxu0
  %678 = vmatprep.mubr.bf16.mxu0 0
  %679 = vmatmul.mubr.bf16.gmra.mrb[0].mxu0 %v529
  %v680 = vpop.f32.mrb[0].mxu0
  %v681 = vadd.f32 0.0, %v680
  %v682 = vpop.f32.mrb[0].mxu0
  %v683 = vpop.f32.mrb[0].mxu0
  %v684 = vadd.f32 0.0, %v683
  %v685 = vpop.f32.mrb[0].mxu0
  %686 = vmatprep.mubr.bf16.mxu0 0
  %687 = vmatmul.mubr.bf16.gmra.mrb[0].mxu0 %v532
  %v688 = vpop.f32.mrb[0].mxu0
  %v689 = vadd.f32 0.0, %v688
  %v690 = vpop.f32.mrb[0].mxu0
  %v691 = vpop.f32.mrb[0].mxu0
  %v692 = vpop.f32.mrb[0].mxu0
  %693 = vdwg.mxu0
  %s694 = scalar_lea.vmem %s0, 248
  %v695 = vld [vmem:[%s694] sm:$0xf]
  %v696 = vld [vmem:[%s694 + $0x4] sm:$0xf]
  %v697 = vld [vmem:[%s694 + $0x8] sm:$0xf]
  %v698 = vld [vmem:[%s694 + $0xc] sm:$0xf]
  %v699 = vld [vmem:[%s694 + $0x10] sm:$0xf]
  %v700 = vld [vmem:[%s694 + $0x14] sm:$0xf]
  %v701 = vld [vmem:[%s694 + $0x18] sm:$0xf]
  %v702 = vld [vmem:[%s694 + $0x1c] sm:$0xf]
  %v703 = vld [vmem:[%s694 + $0x20] sm:$0xf]
  %v704 = vld [vmem:[%s694 + $0x24] sm:$0xf]
  %v705 = vld [vmem:[%s694 + $0x28] sm:$0xf]
  %v706 = vld [vmem:[%s694 + $0x2c] sm:$0xf]
  %v707 = vld [vmem:[%s694 + $0x30] sm:$0xf]
  %v708 = vld [vmem:[%s694 + $0x34] sm:$0xf]
  %v709 = vld [vmem:[%s694 + $0x38] sm:$0xf]
  %v710 = vld [vmem:[%s694 + $0x3c] sm:$0xf]
  %v711 = vld [vmem:[%s694 + $0x40] sm:$0xf]
  %v712 = vld [vmem:[%s694 + $0x44] sm:$0xf]
  %v713 = vld [vmem:[%s694 + $0x48] sm:$0xf]
  %v714 = vld [vmem:[%s694 + $0x4c] sm:$0xf]
  %v715 = vld [vmem:[%s694 + $0x50] sm:$0xf]
  %v716 = vld [vmem:[%s694 + $0x54] sm:$0xf]
  %v717 = vld [vmem:[%s694 + $0x58] sm:$0xf]
  %v718 = vld [vmem:[%s694 + $0x5c] sm:$0xf]
  %v719 = vld [vmem:[%s694 + $0x60] sm:$0xf]
  %v720 = vld [vmem:[%s694 + $0x64] sm:$0xf]
  %v721 = vld [vmem:[%s694 + $0x68] sm:$0xf]
  %v722 = vld [vmem:[%s694 + $0x6c] sm:$0xf]
  %v723 = vld [vmem:[%s694 + $0x70] sm:$0xf]
  %v724 = vld [vmem:[%s694 + $0x74] sm:$0xf]
  %v725 = vld [vmem:[%s694 + $0x78] sm:$0xf]
  %v757 = vunpack.c.l.b16 %v695
  %v758 = vunpack.c.l.b16 %v696
  %v759 = vunpack.c.l.b16 %v697
  %v760 = vunpack.c.l.b16 %v698
  %v761 = vunpack.c.l.b16 %v699
  %v762 = vunpack.c.l.b16 %v700
  %v763 = vunpack.c.l.b16 %v701
  %v764 = vunpack.c.l.b16 %v702
  %v765 = vunpack.c.l.b16 %v703
  %v766 = vunpack.c.l.b16 %v704
  %v767 = vunpack.c.l.b16 %v705
  %v768 = vunpack.c.l.b16 %v706
  %v769 = vunpack.c.l.b16 %v707
  %v770 = vunpack.c.l.b16 %v708
  %v771 = vunpack.c.l.b16 %v709
  %v772 = vunpack.c.l.b16 %v710
  %v773 = vunpack.c.l.b16 %v711
  %v774 = vunpack.c.l.b16 %v712
  %v775 = vunpack.c.l.b16 %v713
  %v776 = vunpack.c.l.b16 %v714
  %v777 = vunpack.c.l.b16 %v715
  %v778 = vunpack.c.l.b16 %v716
  %v779 = vunpack.c.l.b16 %v717
  %v780 = vunpack.c.l.b16 %v718
  %v781 = vunpack.c.l.b16 %v719
  %v782 = vunpack.c.l.b16 %v720
  %v783 = vunpack.c.l.b16 %v721
  %v784 = vunpack.c.l.b16 %v722
  %v785 = vunpack.c.l.b16 %v723
  %v786 = vunpack.c.l.b16 %v724
  %v787 = vunpack.c.l.b16 %v725
  %v788 = vpack.c.b16 %v758, %v757
  %v789 = vpack.c.b16 %v760, %v759
  %v790 = vpack.c.b16 %v762, %v761
  %v791 = vpack.c.b16 %v764, %v763
  %v792 = vpack.c.b16 %v766, %v765
  %v793 = vpack.c.b16 %v768, %v767
  %v794 = vpack.c.b16 %v770, %v769
  %v795 = vpack.c.b16 %v772, %v771
  %v796 = vpack.c.b16 %v774, %v773
  %v797 = vpack.c.b16 %v776, %v775
  %v798 = vpack.c.b16 %v778, %v777
  %v799 = vpack.c.b16 %v780, %v779
  %v800 = vpack.c.b16 %v782, %v781
  %v801 = vpack.c.b16 %v784, %v783
  %v802 = vpack.c.b16 %v786, %v785
  %v803 = vpack.c.b16 %v787, %v787
  %v805 = vsel %vm167, %v788, 0
  %v808 = vsel %vm167, %v789, 0
  %v811 = vsel %vm167, %v790, 0
  %v814 = vsel %vm167, %v791, 0
  %v817 = vsel %vm167, %v792, 0
  %v820 = vsel %vm167, %v793, 0
  %v823 = vsel %vm167, %v794, 0
  %v826 = vsel %vm167, %v795, 0
  %v829 = vsel %vm167, %v796, 0
  %v832 = vsel %vm167, %v797, 0
  %v835 = vsel %vm167, %v798, 0
  %v838 = vsel %vm167, %v799, 0
  %v841 = vsel %vm167, %v800, 0
  %v844 = vsel %vm167, %v801, 0
  %v847 = vsel %vm167, %v802, 0
  %v850 = vsel %vm167, %v803, 0
  %852 = vmatprep.subr.bf16.mxu0 0
  %853 = vmatpush1.bf16.msra.mxu0 %v157
  %854 = vmatprep.subr.bf16.mxu0 0
  %855 = vmatpush1.bf16.msra.mxu0 %v158
  %856 = vmatprep.subr.bf16.mxu0 0
  %857 = vmatpush1.bf16.msra.mxu0 %v159
  %858 = vmatprep.subr.bf16.mxu0 0
  %859 = vmatpush1.bf16.msra.mxu0 %v160
  %860 = vmatprep.subr.bf16.mxu0 0
  %861 = vmatpush1.bf16.msra.mxu0 %v161
  %862 = vmatprep.subr.bf16.mxu0 0
  %863 = vmatpush1.bf16.msra.mxu0 0
  %864 = vmatprep.subr.bf16.mxu0 0
  %865 = vmatpush1.bf16.msra.mxu0 0
  %866 = vmatprep.subr.bf16.mxu0 0
  %867 = vmatpush1.bf16.msra.mxu0 0
  %868 = vmatprep.subr.bf16.mxu0 0
  %869 = vmatpush1.bf16.msra.mxu0 0
  %870 = vmatprep.subr.bf16.mxu0 0
  %871 = vmatpush1.bf16.msra.mxu0 0
  %872 = vmatprep.subr.bf16.mxu0 0
  %873 = vmatpush1.bf16.msra.mxu0 0
  %874 = vmatprep.subr.bf16.mxu0 0
  %875 = vmatpush1.bf16.msra.mxu0 0
  %876 = vmatprep.subr.bf16.mxu0 0
  %877 = vmatpush1.bf16.msra.mxu0 0
  %878 = vmatprep.subr.bf16.mxu0 0
  %879 = vmatpush1.bf16.msra.mxu0 0
  %880 = vmatprep.subr.bf16.mxu0 0
  %881 = vmatpush1.bf16.msra.mxu0 0
  %882 = vmatprep.subr.bf16.mxu0 0
  %883 = vmatpush1.bf16.msra.mxu0 0
  %884 = vmatprep.mubr.bf16.mxu0 0
  %885 = vmatmul.mubr.bf16.gmra.mrb[0].mxu0 %v805
  %v886 = vpop.f32.mrb[0].mxu0
  %v887 = vadd.f32 0.0, %v886
  %v888 = vpop.f32.mrb[0].mxu0
  %v889 = vpop.f32.mrb[0].mxu0
  %v890 = vadd.f32 0.0, %v889
  %v891 = vpop.f32.mrb[0].mxu0
  %892 = vmatprep.mubr.bf16.mxu0 0
  %893 = vmatmul.mubr.bf16.gmra.mrb[0].mxu0 %v808
  %v894 = vpop.f32.mrb[0].mxu0
  %v895 = vadd.f32 0.0, %v894
  %v896 = vpop.f32.mrb[0].mxu0
  %v897 = vpop.f32.mrb[0].mxu0
  %v898 = vadd.f32 0.0, %v897
  %v899 = vpop.f32.mrb[0].mxu0
  %900 = vmatprep.mubr.bf16.mxu0 0
  %901 = vmatmul.mubr.bf16.gmra.mrb[0].mxu0 %v811
  %v902 = vpop.f32.mrb[0].mxu0
  %v903 = vadd.f32 0.0, %v902
  %v904 = vpop.f32.mrb[0].mxu0
  %v905 = vpop.f32.mrb[0].mxu0
  %v906 = vadd.f32 0.0, %v905
  %v907 = vpop.f32.mrb[0].mxu0
  %908 = vmatprep.mubr.bf16.mxu0 0
  %909 = vmatmul.mubr.bf16.gmra.mrb[0].mxu0 %v814
  %v910 = vpop.f32.mrb[0].mxu0
  %v911 = vadd.f32 0.0, %v910
  %v912 = vpop.f32.mrb[0].mxu0
  %v913 = vpop.f32.mrb[0].mxu0
  %v914 = vadd.f32 0.0, %v913
  %v915 = vpop.f32.mrb[0].mxu0
  %916 = vmatprep.mubr.bf16.mxu0 0
  %917 = vmatmul.mubr.bf16.gmra.mrb[0].mxu0 %v817
  %v918 = vpop.f32.mrb[0].mxu0
  %v919 = vadd.f32 0.0, %v918
  %v920 = vpop.f32.mrb[0].mxu0
  %v921 = vpop.f32.mrb[0].mxu0
  %v922 = vadd.f32 0.0, %v921
  %v923 = vpop.f32.mrb[0].mxu0
  %924 = vmatprep.mubr.bf16.mxu0 0
  %925 = vmatmul.mubr.bf16.gmra.mrb[0].mxu0 %v820
  %v926 = vpop.f32.mrb[0].mxu0
  %v927 = vadd.f32 0.0, %v926
  %v928 = vpop.f32.mrb[0].mxu0
  %v929 = vpop.f32.mrb[0].mxu0
  %v930 = vadd.f32 0.0, %v929
  %v931 = vpop.f32.mrb[0].mxu0
  %932 = vmatprep.mubr.bf16.mxu0 0
  %933 = vmatmul.mubr.bf16.gmra.mrb[0].mxu0 %v823
  %v934 = vpop.f32.mrb[0].mxu0
  %v935 = vadd.f32 0.0, %v934
  %v936 = vpop.f32.mrb[0].mxu0
  %v937 = vpop.f32.mrb[0].mxu0
  %v938 = vadd.f32 0.0, %v937
  %v939 = vpop.f32.mrb[0].mxu0
  %940 = vmatprep.mubr.bf16.mxu0 0
  %941 = vmatmul.mubr.bf16.gmra.mrb[0].mxu0 %v826
  %v942 = vpop.f32.mrb[0].mxu0
  %v943 = vadd.f32 0.0, %v942
  %v944 = vpop.f32.mrb[0].mxu0
  %v945 = vpop.f32.mrb[0].mxu0
  %v946 = vadd.f32 0.0, %v945
  %v947 = vpop.f32.mrb[0].mxu0
  %948 = vmatprep.mubr.bf16.mxu0 0
  %949 = vmatmul.mubr.bf16.gmra.mrb[0].mxu0 %v829
  %v950 = vpop.f32.mrb[0].mxu0
  %v951 = vadd.f32 0.0, %v950
  %v952 = vpop.f32.mrb[0].mxu0
  %v953 = vpop.f32.mrb[0].mxu0
  %v954 = vadd.f32 0.0, %v953
  %v955 = vpop.f32.mrb[0].mxu0
  %956 = vmatprep.mubr.bf16.mxu0 0
  %957 = vmatmul.mubr.bf16.gmra.mrb[0].mxu0 %v832
  %v958 = vpop.f32.mrb[0].mxu0
  %v959 = vadd.f32 0.0, %v958
  %v960 = vpop.f32.mrb[0].mxu0
  %v961 = vpop.f32.mrb[0].mxu0
  %v962 = vadd.f32 0.0, %v961
  %v963 = vpop.f32.mrb[0].mxu0
  %964 = vmatprep.mubr.bf16.mxu0 0
  %965 = vmatmul.mubr.bf16.gmra.mrb[0].mxu0 %v835
  %v966 = vpop.f32.mrb[0].mxu0
  %v967 = vadd.f32 0.0, %v966
  %v968 = vpop.f32.mrb[0].mxu0
  %v969 = vpop.f32.mrb[0].mxu0
  %v970 = vadd.f32 0.0, %v969
  %v971 = vpop.f32.mrb[0].mxu0
  %972 = vmatprep.mubr.bf16.mxu0 0
  %973 = vmatmul.mubr.bf16.gmra.mrb[0].mxu0 %v838
  %v974 = vpop.f32.mrb[0].mxu0
  %v975 = vadd.f32 0.0, %v974
  %v976 = vpop.f32.mrb[0].mxu0
  %v977 = vpop.f32.mrb[0].mxu0
  %v978 = vadd.f32 0.0, %v977
  %v979 = vpop.f32.mrb[0].mxu0
  %980 = vmatprep.mubr.bf16.mxu0 0
  %981 = vmatmul.mubr.bf16.gmra.mrb[0].mxu0 %v841
  %v982 = vpop.f32.mrb[0].mxu0
  %v983 = vadd.f32 0.0, %v982
  %v984 = vpop.f32.mrb[0].mxu0
  %v985 = vpop.f32.mrb[0].mxu0
  %v986 = vadd.f32 0.0, %v985
  %v987 = vpop.f32.mrb[0].mxu0
  %988 = vmatprep.mubr.bf16.mxu0 0
  %989 = vmatmul.mubr.bf16.gmra.mrb[0].mxu0 %v844
  %v990 = vpop.f32.mrb[0].mxu0
  %v991 = vadd.f32 0.0, %v990
  %v992 = vpop.f32.mrb[0].mxu0
  %v993 = vpop.f32.mrb[0].mxu0
  %v994 = vadd.f32 0.0, %v993
  %v995 = vpop.f32.mrb[0].mxu0
  %996 = vmatprep.mubr.bf16.mxu0 0
  %997 = vmatmul.mubr.bf16.gmra.mrb[0].mxu0 %v847
  %v998 = vpop.f32.mrb[0].mxu0
  %v999 = vadd.f32 0.0, %v998
  %v1000 = vpop.f32.mrb[0].mxu0
  %v1001 = vpop.f32.mrb[0].mxu0
  %v1002 = vadd.f32 0.0, %v1001
  %v1003 = vpop.f32.mrb[0].mxu0
  %1004 = vmatprep.mubr.bf16.mxu0 0
  %1005 = vmatmul.mubr.bf16.gmra.mrb[0].mxu0 %v850
  %v1006 = vpop.f32.mrb[0].mxu0
  %v1007 = vadd.f32 0.0, %v1006
  %v1008 = vpop.f32.mrb[0].mxu0
  %v1009 = vpop.f32.mrb[0].mxu0
  %v1010 = vpop.f32.mrb[0].mxu0
  %1011 = vdwg.mxu0
  %s1012 = scalar_lea.vmem %s0, 372
  %v1013 = vld [vmem:[%s1012] sm:$0xf]
  %v1014 = vld [vmem:[%s1012 + $0x4] sm:$0xf]
  %v1015 = vld [vmem:[%s1012 + $0x8] sm:$0xf]
  %v1016 = vld [vmem:[%s1012 + $0xc] sm:$0xf]
  %v1017 = vld [vmem:[%s1012 + $0x10] sm:$0xf]
  %v1018 = vld [vmem:[%s1012 + $0x14] sm:$0xf]
  %v1019 = vld [vmem:[%s1012 + $0x18] sm:$0xf]
  %v1020 = vld [vmem:[%s1012 + $0x1c] sm:$0xf]
  %v1021 = vld [vmem:[%s1012 + $0x20] sm:$0xf]
  %v1022 = vld [vmem:[%s1012 + $0x24] sm:$0xf]
  %v1023 = vld [vmem:[%s1012 + $0x28] sm:$0xf]
  %v1024 = vld [vmem:[%s1012 + $0x2c] sm:$0xf]
  %v1025 = vld [vmem:[%s1012 + $0x30] sm:$0xf]
  %v1026 = vld [vmem:[%s1012 + $0x34] sm:$0xf]
  %v1027 = vld [vmem:[%s1012 + $0x38] sm:$0xf]
  %v1028 = vld [vmem:[%s1012 + $0x3c] sm:$0xf]
  %v1029 = vld [vmem:[%s1012 + $0x40] sm:$0xf]
  %v1030 = vld [vmem:[%s1012 + $0x44] sm:$0xf]
  %v1031 = vld [vmem:[%s1012 + $0x48] sm:$0xf]
  %v1032 = vld [vmem:[%s1012 + $0x4c] sm:$0xf]
  %v1033 = vld [vmem:[%s1012 + $0x50] sm:$0xf]
  %v1034 = vld [vmem:[%s1012 + $0x54] sm:$0xf]
  %v1035 = vld [vmem:[%s1012 + $0x58] sm:$0xf]
  %v1036 = vld [vmem:[%s1012 + $0x5c] sm:$0xf]
  %v1037 = vld [vmem:[%s1012 + $0x60] sm:$0xf]
  %v1038 = vld [vmem:[%s1012 + $0x64] sm:$0xf]
  %v1039 = vld [vmem:[%s1012 + $0x68] sm:$0xf]
  %v1040 = vld [vmem:[%s1012 + $0x6c] sm:$0xf]
  %v1041 = vld [vmem:[%s1012 + $0x70] sm:$0xf]
  %v1042 = vld [vmem:[%s1012 + $0x74] sm:$0xf]
  %v1043 = vld [vmem:[%s1012 + $0x78] sm:$0xf]
  %v1075 = vunpack.c.l.b16 %v1013
  %v1076 = vunpack.c.l.b16 %v1014
  %v1077 = vunpack.c.l.b16 %v1015
  %v1078 = vunpack.c.l.b16 %v1016
  %v1079 = vunpack.c.l.b16 %v1017
  %v1080 = vunpack.c.l.b16 %v1018
  %v1081 = vunpack.c.l.b16 %v1019
  %v1082 = vunpack.c.l.b16 %v1020
  %v1083 = vunpack.c.l.b16 %v1021
  %v1084 = vunpack.c.l.b16 %v1022
  %v1085 = vunpack.c.l.b16 %v1023
  %v1086 = vunpack.c.l.b16 %v1024
  %v1087 = vunpack.c.l.b16 %v1025
  %v1088 = vunpack.c.l.b16 %v1026
  %v1089 = vunpack.c.l.b16 %v1027
  %v1090 = vunpack.c.l.b16 %v1028
  %v1091 = vunpack.c.l.b16 %v1029
  %v1092 = vunpack.c.l.b16 %v1030
  %v1093 = vunpack.c.l.b16 %v1031
  %v1094 = vunpack.c.l.b16 %v1032
  %v1095 = vunpack.c.l.b16 %v1033
  %v1096 = vunpack.c.l.b16 %v1034
  %v1097 = vunpack.c.l.b16 %v1035
  %v1098 = vunpack.c.l.b16 %v1036
  %v1099 = vunpack.c.l.b16 %v1037
  %v1100 = vunpack.c.l.b16 %v1038
  %v1101 = vunpack.c.l.b16 %v1039
  %v1102 = vunpack.c.l.b16 %v1040
  %v1103 = vunpack.c.l.b16 %v1041
  %v1104 = vunpack.c.l.b16 %v1042
  %v1105 = vunpack.c.l.b16 %v1043
  %v1106 = vpack.c.b16 %v1076, %v1075
  %v1107 = vpack.c.b16 %v1078, %v1077
  %v1108 = vpack.c.b16 %v1080, %v1079
  %v1109 = vpack.c.b16 %v1082, %v1081
  %v1110 = vpack.c.b16 %v1084, %v1083
  %v1111 = vpack.c.b16 %v1086, %v1085
  %v1112 = vpack.c.b16 %v1088, %v1087
  %v1113 = vpack.c.b16 %v1090, %v1089
  %v1114 = vpack.c.b16 %v1092, %v1091
  %v1115 = vpack.c.b16 %v1094, %v1093
  %v1116 = vpack.c.b16 %v1096, %v1095
  %v1117 = vpack.c.b16 %v1098, %v1097
  %v1118 = vpack.c.b16 %v1100, %v1099
  %v1119 = vpack.c.b16 %v1102, %v1101
  %v1120 = vpack.c.b16 %v1104, %v1103
  %v1121 = vpack.c.b16 %v1105, %v1105
  %v1123 = vsel %vm167, %v1106, 0
  %v1126 = vsel %vm167, %v1107, 0
  %v1129 = vsel %vm167, %v1108, 0
  %v1132 = vsel %vm167, %v1109, 0
  %v1135 = vsel %vm167, %v1110, 0
  %v1138 = vsel %vm167, %v1111, 0
  %v1141 = vsel %vm167, %v1112, 0
  %v1144 = vsel %vm167, %v1113, 0
  %v1147 = vsel %vm167, %v1114, 0
  %v1150 = vsel %vm167, %v1115, 0
  %v1153 = vsel %vm167, %v1116, 0
  %v1156 = vsel %vm167, %v1117, 0
  %v1159 = vsel %vm167, %v1118, 0
  %v1162 = vsel %vm167, %v1119, 0
  %v1165 = vsel %vm167, %v1120, 0
  %v1168 = vsel %vm167, %v1121, 0
  %1170 = vmatprep.subr.bf16.mxu0 0
  %1171 = vmatpush1.bf16.msra.mxu0 %v157
  %1172 = vmatprep.subr.bf16.mxu0 0
  %1173 = vmatpush1.bf16.msra.mxu0 %v158
  %1174 = vmatprep.subr.bf16.mxu0 0
  %1175 = vmatpush1.bf16.msra.mxu0 %v159
  %1176 = vmatprep.subr.bf16.mxu0 0
  %1177 = vmatpush1.bf16.msra.mxu0 %v160
  %1178 = vmatprep.subr.bf16.mxu0 0
  %1179 = vmatpush1.bf16.msra.mxu0 %v161
  %1180 = vmatprep.subr.bf16.mxu0 0
  %1181 = vmatpush1.bf16.msra.mxu0 0
  %1182 = vmatprep.subr.bf16.mxu0 0
  %1183 = vmatpush1.bf16.msra.mxu0 0
  %1184 = vmatprep.subr.bf16.mxu0 0
  %1185 = vmatpush1.bf16.msra.mxu0 0
  %1186 = vmatprep.subr.bf16.mxu0 0
  %1187 = vmatpush1.bf16.msra.mxu0 0
  %1188 = vmatprep.subr.bf16.mxu0 0
  %1189 = vmatpush1.bf16.msra.mxu0 0
  %1190 = vmatprep.subr.bf16.mxu0 0
  %1191 = vmatpush1.bf16.msra.mxu0 0
  %1192 = vmatprep.subr.bf16.mxu0 0
  %1193 = vmatpush1.bf16.msra.mxu0 0
  %1194 = vmatprep.subr.bf16.mxu0 0
  %1195 = vmatpush1.bf16.msra.mxu0 0
  %1196 = vmatprep.subr.bf16.mxu0 0
  %1197 = vmatpush1.bf16.msra.mxu0 0
  %1198 = vmatprep.subr.bf16.mxu0 0
  %1199 = vmatpush1.bf16.msra.mxu0 0
  %1200 = vmatprep.subr.bf16.mxu0 0
  %1201 = vmatpush1.bf16.msra.mxu0 0
  %1202 = vmatprep.mubr.bf16.mxu0 0
  %1203 = vmatmul.mubr.bf16.gmra.mrb[0].mxu0 %v1123
  %v1204 = vpop.f32.mrb[0].mxu0
  %v1205 = vadd.f32 0.0, %v1204
  %v1206 = vpop.f32.mrb[0].mxu0
  %v1207 = vpop.f32.mrb[0].mxu0
  %v1208 = vadd.f32 0.0, %v1207
  %v1209 = vpop.f32.mrb[0].mxu0
  %1210 = vmatprep.mubr.bf16.mxu0 0
  %1211 = vmatmul.mubr.bf16.gmra.mrb[0].mxu0 %v1126
  %v1212 = vpop.f32.mrb[0].mxu0
  %v1213 = vadd.f32 0.0, %v1212
  %v1214 = vpop.f32.mrb[0].mxu0
  %v1215 = vpop.f32.mrb[0].mxu0
  %v1216 = vadd.f32 0.0, %v1215
  %v1217 = vpop.f32.mrb[0].mxu0
  %1218 = vmatprep.mubr.bf16.mxu0 0
  %1219 = vmatmul.mubr.bf16.gmra.mrb[0].mxu0 %v1129
  %v1220 = vpop.f32.mrb[0].mxu0
  %v1221 = vadd.f32 0.0, %v1220
  %v1222 = vpop.f32.mrb[0].mxu0
  %v1223 = vpop.f32.mrb[0].mxu0
  %v1224 = vadd.f32 0.0, %v1223
  %v1225 = vpop.f32.mrb[0].mxu0
  %1226 = vmatprep.mubr.bf16.mxu0 0
  %1227 = vmatmul.mubr.bf16.gmra.mrb[0].mxu0 %v1132
  %v1228 = vpop.f32.mrb[0].mxu0
  %v1229 = vadd.f32 0.0, %v1228
  %v1230 = vpop.f32.mrb[0].mxu0
  %v1231 = vpop.f32.mrb[0].mxu0
  %v1232 = vadd.f32 0.0, %v1231
  %v1233 = vpop.f32.mrb[0].mxu0
  %1234 = vmatprep.mubr.bf16.mxu0 0
  %1235 = vmatmul.mubr.bf16.gmra.mrb[0].mxu0 %v1135
  %v1236 = vpop.f32.mrb[0].mxu0
  %v1237 = vadd.f32 0.0, %v1236
  %v1238 = vpop.f32.mrb[0].mxu0
  %v1239 = vpop.f32.mrb[0].mxu0
  %v1240 = vadd.f32 0.0, %v1239
  %v1241 = vpop.f32.mrb[0].mxu0
  %1242 = vmatprep.mubr.bf16.mxu0 0
  %1243 = vmatmul.mubr.bf16.gmra.mrb[0].mxu0 %v1138
  %v1244 = vpop.f32.mrb[0].mxu0
  %v1245 = vadd.f32 0.0, %v1244
  %v1246 = vpop.f32.mrb[0].mxu0
  %v1247 = vpop.f32.mrb[0].mxu0
  %v1248 = vadd.f32 0.0, %v1247
  %v1249 = vpop.f32.mrb[0].mxu0
  %1250 = vmatprep.mubr.bf16.mxu0 0
  %1251 = vmatmul.mubr.bf16.gmra.mrb[0].mxu0 %v1141
  %v1252 = vpop.f32.mrb[0].mxu0
  %v1253 = vadd.f32 0.0, %v1252
  %v1254 = vpop.f32.mrb[0].mxu0
  %v1255 = vpop.f32.mrb[0].mxu0
  %v1256 = vadd.f32 0.0, %v1255
  %v1257 = vpop.f32.mrb[0].mxu0
  %1258 = vmatprep.mubr.bf16.mxu0 0
  %1259 = vmatmul.mubr.bf16.gmra.mrb[0].mxu0 %v1144
  %v1260 = vpop.f32.mrb[0].mxu0
  %v1261 = vadd.f32 0.0, %v1260
  %v1262 = vpop.f32.mrb[0].mxu0
  %v1263 = vpop.f32.mrb[0].mxu0
  %v1264 = vadd.f32 0.0, %v1263
  %v1265 = vpop.f32.mrb[0].mxu0
  %1266 = vmatprep.mubr.bf16.mxu0 0
  %1267 = vmatmul.mubr.bf16.gmra.mrb[0].mxu0 %v1147
  %v1268 = vpop.f32.mrb[0].mxu0
  %v1269 = vadd.f32 0.0, %v1268
  %v1270 = vpop.f32.mrb[0].mxu0
  %v1271 = vpop.f32.mrb[0].mxu0
  %v1272 = vadd.f32 0.0, %v1271
  %v1273 = vpop.f32.mrb[0].mxu0
  %1274 = vmatprep.mubr.bf16.mxu0 0
  %1275 = vmatmul.mubr.bf16.gmra.mrb[0].mxu0 %v1150
  %v1276 = vpop.f32.mrb[0].mxu0
  %v1277 = vadd.f32 0.0, %v1276
  %v1278 = vpop.f32.mrb[0].mxu0
  %v1279 = vpop.f32.mrb[0].mxu0
  %v1280 = vadd.f32 0.0, %v1279
  %v1281 = vpop.f32.mrb[0].mxu0
  %1282 = vmatprep.mubr.bf16.mxu0 0
  %1283 = vmatmul.mubr.bf16.gmra.mrb[0].mxu0 %v1153
  %v1284 = vpop.f32.mrb[0].mxu0
  %v1285 = vadd.f32 0.0, %v1284
  %v1286 = vpop.f32.mrb[0].mxu0
  %v1287 = vpop.f32.mrb[0].mxu0
  %v1288 = vadd.f32 0.0, %v1287
  %v1289 = vpop.f32.mrb[0].mxu0
  %1290 = vmatprep.mubr.bf16.mxu0 0
  %1291 = vmatmul.mubr.bf16.gmra.mrb[0].mxu0 %v1156
  %v1292 = vpop.f32.mrb[0].mxu0
  %v1293 = vadd.f32 0.0, %v1292
  %v1294 = vpop.f32.mrb[0].mxu0
  %v1295 = vpop.f32.mrb[0].mxu0
  %v1296 = vadd.f32 0.0, %v1295
  %v1297 = vpop.f32.mrb[0].mxu0
  %1298 = vmatprep.mubr.bf16.mxu0 0
  %1299 = vmatmul.mubr.bf16.gmra.mrb[0].mxu0 %v1159
  %v1300 = vpop.f32.mrb[0].mxu0
  %v1301 = vadd.f32 0.0, %v1300
  %v1302 = vpop.f32.mrb[0].mxu0
  %v1303 = vpop.f32.mrb[0].mxu0
  %v1304 = vadd.f32 0.0, %v1303
  %v1305 = vpop.f32.mrb[0].mxu0
  %1306 = vmatprep.mubr.bf16.mxu0 0
  %1307 = vmatmul.mubr.bf16.gmra.mrb[0].mxu0 %v1162
  %v1308 = vpop.f32.mrb[0].mxu0
  %v1309 = vadd.f32 0.0, %v1308
  %v1310 = vpop.f32.mrb[0].mxu0
  %v1311 = vpop.f32.mrb[0].mxu0
  %v1312 = vadd.f32 0.0, %v1311
  %v1313 = vpop.f32.mrb[0].mxu0
  %1314 = vmatprep.mubr.bf16.mxu0 0
  %1315 = vmatmul.mubr.bf16.gmra.mrb[0].mxu0 %v1165
  %v1316 = vpop.f32.mrb[0].mxu0
  %v1317 = vadd.f32 0.0, %v1316
  %v1318 = vpop.f32.mrb[0].mxu0
  %v1319 = vpop.f32.mrb[0].mxu0
  %v1320 = vadd.f32 0.0, %v1319
  %v1321 = vpop.f32.mrb[0].mxu0
  %1322 = vmatprep.mubr.bf16.mxu0 0
  %1323 = vmatmul.mubr.bf16.gmra.mrb[0].mxu0 %v1168
  %v1324 = vpop.f32.mrb[0].mxu0
  %v1325 = vadd.f32 0.0, %v1324
  %v1326 = vpop.f32.mrb[0].mxu0
  %v1327 = vpop.f32.mrb[0].mxu0
  %v1328 = vpop.f32.mrb[0].mxu0
  %1329 = vdwg.mxu0
  %v1330 = vadd.f32 %v251, %v254
  %v1331 = vadd.f32 %v1330, %v259
  %v1332 = vadd.f32 %v1331, %v262
  %v1333 = vadd.f32 %v1332, %v267
  %v1334 = vadd.f32 %v1333, %v270
  %v1335 = vadd.f32 %v1334, %v275
  %v1336 = vadd.f32 %v1335, %v278
  %v1337 = vadd.f32 %v1336, %v283
  %v1338 = vadd.f32 %v1337, %v286
  %v1339 = vadd.f32 %v1338, %v291
  %v1340 = vadd.f32 %v1339, %v294
  %v1341 = vadd.f32 %v1340, %v299
  %v1342 = vadd.f32 %v1341, %v302
  %v1343 = vadd.f32 %v1342, %v307
  %v1344 = vadd.f32 %v1343, %v310
  %v1345 = vadd.f32 %v1344, %v315
  %v1346 = vadd.f32 %v1345, %v318
  %v1347 = vadd.f32 %v1346, %v323
  %v1348 = vadd.f32 %v1347, %v326
  %v1349 = vadd.f32 %v1348, %v331
  %v1350 = vadd.f32 %v1349, %v334
  %v1351 = vadd.f32 %v1350, %v339
  %v1352 = vadd.f32 %v1351, %v342
  %v1353 = vadd.f32 %v1352, %v347
  %v1354 = vadd.f32 %v1353, %v350
  %v1355 = vadd.f32 %v1354, %v355
  %v1356 = vadd.f32 %v1355, %v358
  %v1357 = vadd.f32 %v1356, %v363
  %v1358 = vadd.f32 %v1357, %v366
  %v1359 = vadd.f32 %v1358, %v371
  %v1360 = vrot.slane %v1359, 4
  %v1361 = vadd.f32 %v1359, %v1360
  %v1362 = vrot.slane %v1361, 2
  %v1363 = vadd.f32 %v1361, %v1362
  %v1364 = vrot.slane %v1363, 1
  %v1365 = vadd.f32 %v1363, %v1364
  %v1366 = vadd.f32 %v569, %v572
  %v1367 = vadd.f32 %v1366, %v577
  %v1368 = vadd.f32 %v1367, %v580
  %v1369 = vadd.f32 %v1368, %v585
  %v1370 = vadd.f32 %v1369, %v588
  %v1371 = vadd.f32 %v1370, %v593
  %v1372 = vadd.f32 %v1371, %v596
  %v1373 = vadd.f32 %v1372, %v601
  %v1374 = vadd.f32 %v1373, %v604
  %v1375 = vadd.f32 %v1374, %v609
  %v1376 = vadd.f32 %v1375, %v612
  %v1377 = vadd.f32 %v1376, %v617
  %v1378 = vadd.f32 %v1377, %v620
  %v1379 = vadd.f32 %v1378, %v625
  %v1380 = vadd.f32 %v1379, %v628
  %v1381 = vadd.f32 %v1380, %v633
  %v1382 = vadd.f32 %v1381, %v636
  %v1383 = vadd.f32 %v1382, %v641
  %v1384 = vadd.f32 %v1383, %v644
  %v1385 = vadd.f32 %v1384, %v649
  %v1386 = vadd.f32 %v1385, %v652
  %v1387 = vadd.f32 %v1386, %v657
  %v1388 = vadd.f32 %v1387, %v660
  %v1389 = vadd.f32 %v1388, %v665
  %v1390 = vadd.f32 %v1389, %v668
  %v1391 = vadd.f32 %v1390, %v673
  %v1392 = vadd.f32 %v1391, %v676
  %v1393 = vadd.f32 %v1392, %v681
  %v1394 = vadd.f32 %v1393, %v684
  %v1395 = vadd.f32 %v1394, %v689
  %v1396 = vrot.slane %v1395, 4
  %v1397 = vadd.f32 %v1395, %v1396
  %v1398 = vrot.slane %v1397, 2
  %v1399 = vadd.f32 %v1397, %v1398
  %v1400 = vrot.slane %v1399, 1
  %v1401 = vadd.f32 %v1399, %v1400
  %v1402 = vadd.f32 %v1365, %v1401
  %v1403 = vadd.f32 %v887, %v890
  %v1404 = vadd.f32 %v1403, %v895
  %v1405 = vadd.f32 %v1404, %v898
  %v1406 = vadd.f32 %v1405, %v903
  %v1407 = vadd.f32 %v1406, %v906
  %v1408 = vadd.f32 %v1407, %v911
  %v1409 = vadd.f32 %v1408, %v914
  %v1410 = vadd.f32 %v1409, %v919
  %v1411 = vadd.f32 %v1410, %v922
  %v1412 = vadd.f32 %v1411, %v927
  %v1413 = vadd.f32 %v1412, %v930
  %v1414 = vadd.f32 %v1413, %v935
  %v1415 = vadd.f32 %v1414, %v938
  %v1416 = vadd.f32 %v1415, %v943
  %v1417 = vadd.f32 %v1416, %v946
  %v1418 = vadd.f32 %v1417, %v951
  %v1419 = vadd.f32 %v1418, %v954
  %v1420 = vadd.f32 %v1419, %v959
  %v1421 = vadd.f32 %v1420, %v962
  %v1422 = vadd.f32 %v1421, %v967
  %v1423 = vadd.f32 %v1422, %v970
  %v1424 = vadd.f32 %v1423, %v975
  %v1425 = vadd.f32 %v1424, %v978
  %v1426 = vadd.f32 %v1425, %v983
  %v1427 = vadd.f32 %v1426, %v986
  %v1428 = vadd.f32 %v1427, %v991
  %v1429 = vadd.f32 %v1428, %v994
  %v1430 = vadd.f32 %v1429, %v999
  %v1431 = vadd.f32 %v1430, %v1002
  %v1432 = vadd.f32 %v1431, %v1007
  %v1433 = vrot.slane %v1432, 4
  %v1434 = vadd.f32 %v1432, %v1433
  %v1435 = vrot.slane %v1434, 2
  %v1436 = vadd.f32 %v1434, %v1435
  %v1437 = vrot.slane %v1436, 1
  %v1438 = vadd.f32 %v1436, %v1437
  %v1439 = vadd.f32 %v1402, %v1438
  %v1440 = vadd.f32 %v1205, %v1208
  %v1441 = vadd.f32 %v1440, %v1213
  %v1442 = vadd.f32 %v1441, %v1216
  %v1443 = vadd.f32 %v1442, %v1221
  %v1444 = vadd.f32 %v1443, %v1224
  %v1445 = vadd.f32 %v1444, %v1229
  %v1446 = vadd.f32 %v1445, %v1232
  %v1447 = vadd.f32 %v1446, %v1237
  %v1448 = vadd.f32 %v1447, %v1240
  %v1449 = vadd.f32 %v1448, %v1245
  %v1450 = vadd.f32 %v1449, %v1248
  %v1451 = vadd.f32 %v1450, %v1253
  %v1452 = vadd.f32 %v1451, %v1256
  %v1453 = vadd.f32 %v1452, %v1261
  %v1454 = vadd.f32 %v1453, %v1264
  %v1455 = vadd.f32 %v1454, %v1269
  %v1456 = vadd.f32 %v1455, %v1272
  %v1457 = vadd.f32 %v1456, %v1277
  %v1458 = vadd.f32 %v1457, %v1280
  %v1459 = vadd.f32 %v1458, %v1285
  %v1460 = vadd.f32 %v1459, %v1288
  %v1461 = vadd.f32 %v1460, %v1293
  %v1462 = vadd.f32 %v1461, %v1296
  %v1463 = vadd.f32 %v1462, %v1301
  %v1464 = vadd.f32 %v1463, %v1304
  %v1465 = vadd.f32 %v1464, %v1309
  %v1466 = vadd.f32 %v1465, %v1312
  %v1467 = vadd.f32 %v1466, %v1317
  %v1468 = vadd.f32 %v1467, %v1320
  %v1469 = vadd.f32 %v1468, %v1325
  %v1470 = vrot.slane %v1469, 4
  %v1471 = vadd.f32 %v1469, %v1470
  %v1472 = vrot.slane %v1471, 2
  %v1473 = vadd.f32 %v1471, %v1472
  %v1474 = vrot.slane %v1473, 1
  %v1475 = vadd.f32 %v1473, %v1474
  %v1476 = vadd.f32 %v1439, %v1475
  %v1477 = vmul.f32 %v1476, 0.0010080645
  %v1478 = vsub.f32 %v251, %v1477
  %v1479 = vsub.f32 %v254, %v1477
  %v1480 = vsub.f32 %v259, %v1477
  %v1481 = vsub.f32 %v262, %v1477
  %v1482 = vsub.f32 %v267, %v1477
  %v1483 = vsub.f32 %v270, %v1477
  %v1484 = vsub.f32 %v275, %v1477
  %v1485 = vsub.f32 %v278, %v1477
  %v1486 = vsub.f32 %v283, %v1477
  %v1487 = vsub.f32 %v286, %v1477
  %v1488 = vsub.f32 %v291, %v1477
  %v1489 = vsub.f32 %v294, %v1477
  %v1490 = vsub.f32 %v299, %v1477
  %v1491 = vsub.f32 %v302, %v1477
  %v1492 = vsub.f32 %v307, %v1477
  %v1493 = vsub.f32 %v310, %v1477
  %v1494 = vsub.f32 %v315, %v1477
  %v1495 = vsub.f32 %v318, %v1477
  %v1496 = vsub.f32 %v323, %v1477
  %v1497 = vsub.f32 %v326, %v1477
  %v1498 = vsub.f32 %v331, %v1477
  %v1499 = vsub.f32 %v334, %v1477
  %v1500 = vsub.f32 %v339, %v1477
  %v1501 = vsub.f32 %v342, %v1477
  %v1502 = vsub.f32 %v347, %v1477
  %v1503 = vsub.f32 %v350, %v1477
  %v1504 = vsub.f32 %v355, %v1477
  %v1505 = vsub.f32 %v358, %v1477
  %v1506 = vsub.f32 %v363, %v1477
  %v1507 = vsub.f32 %v366, %v1477
  %v1508 = vsub.f32 %v371, %v1477
  %v1509 = vmul.f32 %v1478, %v1478
  %v1510 = vmul.f32 %v1479, %v1479
  %v1511 = vmul.f32 %v1480, %v1480
  %v1512 = vmul.f32 %v1481, %v1481
  %v1513 = vmul.f32 %v1482, %v1482
  %v1514 = vmul.f32 %v1483, %v1483
  %v1515 = vmul.f32 %v1484, %v1484
  %v1516 = vmul.f32 %v1485, %v1485
  %v1517 = vmul.f32 %v1486, %v1486
  %v1518 = vmul.f32 %v1487, %v1487
  %v1519 = vmul.f32 %v1488, %v1488
  %v1520 = vmul.f32 %v1489, %v1489
  %v1521 = vmul.f32 %v1490, %v1490
  %v1522 = vmul.f32 %v1491, %v1491
  %v1523 = vmul.f32 %v1492, %v1492
  %v1524 = vmul.f32 %v1493, %v1493
  %v1525 = vmul.f32 %v1494, %v1494
  %v1526 = vmul.f32 %v1495, %v1495
  %v1527 = vmul.f32 %v1496, %v1496
  %v1528 = vmul.f32 %v1497, %v1497
  %v1529 = vmul.f32 %v1498, %v1498
  %v1530 = vmul.f32 %v1499, %v1499
  %v1531 = vmul.f32 %v1500, %v1500
  %v1532 = vmul.f32 %v1501, %v1501
  %v1533 = vmul.f32 %v1502, %v1502
  %v1534 = vmul.f32 %v1503, %v1503
  %v1535 = vmul.f32 %v1504, %v1504
  %v1536 = vmul.f32 %v1505, %v1505
  %v1537 = vmul.f32 %v1506, %v1506
  %v1538 = vmul.f32 %v1507, %v1507
  %v1539 = vmul.f32 %v1508, %v1508
  %v1540 = vadd.f32 %v1509, %v1510
  %v1541 = vadd.f32 %v1540, %v1511
  %v1542 = vadd.f32 %v1541, %v1512
  %v1543 = vadd.f32 %v1542, %v1513
  %v1544 = vadd.f32 %v1543, %v1514
  %v1545 = vadd.f32 %v1544, %v1515
  %v1546 = vadd.f32 %v1545, %v1516
  %v1547 = vadd.f32 %v1546, %v1517
  %v1548 = vadd.f32 %v1547, %v1518
  %v1549 = vadd.f32 %v1548, %v1519
  %v1550 = vadd.f32 %v1549, %v1520
  %v1551 = vadd.f32 %v1550, %v1521
  %v1552 = vadd.f32 %v1551, %v1522
  %v1553 = vadd.f32 %v1552, %v1523
  %v1554 = vadd.f32 %v1553, %v1524
  %v1555 = vadd.f32 %v1554, %v1525
  %v1556 = vadd.f32 %v1555, %v1526
  %v1557 = vadd.f32 %v1556, %v1527
  %v1558 = vadd.f32 %v1557, %v1528
  %v1559 = vadd.f32 %v1558, %v1529
  %v1560 = vadd.f32 %v1559, %v1530
  %v1561 = vadd.f32 %v1560, %v1531
  %v1562 = vadd.f32 %v1561, %v1532
  %v1563 = vadd.f32 %v1562, %v1533
  %v1564 = vadd.f32 %v1563, %v1534
  %v1565 = vadd.f32 %v1564, %v1535
  %v1566 = vadd.f32 %v1565, %v1536
  %v1567 = vadd.f32 %v1566, %v1537
  %v1568 = vadd.f32 %v1567, %v1538
  %v1569 = vadd.f32 %v1568, %v1539
  %v1570 = vrot.slane %v1569, 4
  %v1571 = vadd.f32 %v1569, %v1570
  %v1572 = vrot.slane %v1571, 2
  %v1573 = vadd.f32 %v1571, %v1572
  %v1574 = vrot.slane %v1573, 1
  %v1575 = vadd.f32 %v1573, %v1574
  %v1576 = vsub.f32 %v569, %v1477
  %v1577 = vsub.f32 %v572, %v1477
  %v1578 = vsub.f32 %v577, %v1477
  %v1579 = vsub.f32 %v580, %v1477
  %v1580 = vsub.f32 %v585, %v1477
  %v1581 = vsub.f32 %v588, %v1477
  %v1582 = vsub.f32 %v593, %v1477
  %v1583 = vsub.f32 %v596, %v1477
  %v1584 = vsub.f32 %v601, %v1477
  %v1585 = vsub.f32 %v604, %v1477
  %v1586 = vsub.f32 %v609, %v1477
  %v1587 = vsub.f32 %v612, %v1477
  %v1588 = vsub.f32 %v617, %v1477
  %v1589 = vsub.f32 %v620, %v1477
  %v1590 = vsub.f32 %v625, %v1477
  %v1591 = vsub.f32 %v628, %v1477
  %v1592 = vsub.f32 %v633, %v1477
  %v1593 = vsub.f32 %v636, %v1477
  %v1594 = vsub.f32 %v641, %v1477
  %v1595 = vsub.f32 %v644, %v1477
  %v1596 = vsub.f32 %v649, %v1477
  %v1597 = vsub.f32 %v652, %v1477
  %v1598 = vsub.f32 %v657, %v1477
  %v1599 = vsub.f32 %v660, %v1477
  %v1600 = vsub.f32 %v665, %v1477
  %v1601 = vsub.f32 %v668, %v1477
  %v1602 = vsub.f32 %v673, %v1477
  %v1603 = vsub.f32 %v676, %v1477
  %v1604 = vsub.f32 %v681, %v1477
  %v1605 = vsub.f32 %v684, %v1477
  %v1606 = vsub.f32 %v689, %v1477
  %v1607 = vmul.f32 %v1576, %v1576
  %v1608 = vmul.f32 %v1577, %v1577
  %v1609 = vmul.f32 %v1578, %v1578
  %v1610 = vmul.f32 %v1579, %v1579
  %v1611 = vmul.f32 %v1580, %v1580
  %v1612 = vmul.f32 %v1581, %v1581
  %v1613 = vmul.f32 %v1582, %v1582
  %v1614 = vmul.f32 %v1583, %v1583
  %v1615 = vmul.f32 %v1584, %v1584
  %v1616 = vmul.f32 %v1585, %v1585
  %v1617 = vmul.f32 %v1586, %v1586
  %v1618 = vmul.f32 %v1587, %v1587
  %v1619 = vmul.f32 %v1588, %v1588
  %v1620 = vmul.f32 %v1589, %v1589
  %v1621 = vmul.f32 %v1590, %v1590
  %v1622 = vmul.f32 %v1591, %v1591
  %v1623 = vmul.f32 %v1592, %v1592
  %v1624 = vmul.f32 %v1593, %v1593
  %v1625 = vmul.f32 %v1594, %v1594
  %v1626 = vmul.f32 %v1595, %v1595
  %v1627 = vmul.f32 %v1596, %v1596
  %v1628 = vmul.f32 %v1597, %v1597
  %v1629 = vmul.f32 %v1598, %v1598
  %v1630 = vmul.f32 %v1599, %v1599
  %v1631 = vmul.f32 %v1600, %v1600
  %v1632 = vmul.f32 %v1601, %v1601
  %v1633 = vmul.f32 %v1602, %v1602
  %v1634 = vmul.f32 %v1603, %v1603
  %v1635 = vmul.f32 %v1604, %v1604
  %v1636 = vmul.f32 %v1605, %v1605
  %v1637 = vmul.f32 %v1606, %v1606
  %v1638 = vadd.f32 %v1607, %v1608
  %v1639 = vadd.f32 %v1638, %v1609
  %v1640 = vadd.f32 %v1639, %v1610
  %v1641 = vadd.f32 %v1640, %v1611
  %v1642 = vadd.f32 %v1641, %v1612
  %v1643 = vadd.f32 %v1642, %v1613
  %v1644 = vadd.f32 %v1643, %v1614
  %v1645 = vadd.f32 %v1644, %v1615
  %v1646 = vadd.f32 %v1645, %v1616
  %v1647 = vadd.f32 %v1646, %v1617
  %v1648 = vadd.f32 %v1647, %v1618
  %v1649 = vadd.f32 %v1648, %v1619
  %v1650 = vadd.f32 %v1649, %v1620
  %v1651 = vadd.f32 %v1650, %v1621
  %v1652 = vadd.f32 %v1651, %v1622
  %v1653 = vadd.f32 %v1652, %v1623
  %v1654 = vadd.f32 %v1653, %v1624
  %v1655 = vadd.f32 %v1654, %v1625
  %v1656 = vadd.f32 %v1655, %v1626
  %v1657 = vadd.f32 %v1656, %v1627
  %v1658 = vadd.f32 %v1657, %v1628
  %v1659 = vadd.f32 %v1658, %v1629
  %v1660 = vadd.f32 %v1659, %v1630
  %v1661 = vadd.f32 %v1660, %v1631
  %v1662 = vadd.f32 %v1661, %v1632
  %v1663 = vadd.f32 %v1662, %v1633
  %v1664 = vadd.f32 %v1663, %v1634
  %v1665 = vadd.f32 %v1664, %v1635
  %v1666 = vadd.f32 %v1665, %v1636
  %v1667 = vadd.f32 %v1666, %v1637
  %v1668 = vrot.slane %v1667, 4
  %v1669 = vadd.f32 %v1667, %v1668
  %v1670 = vrot.slane %v1669, 2
  %v1671 = vadd.f32 %v1669, %v1670
  %v1672 = vrot.slane %v1671, 1
  %v1673 = vadd.f32 %v1671, %v1672
  %v1674 = vadd.f32 %v1575, %v1673
  %v1675 = vsub.f32 %v887, %v1477
  %v1676 = vsub.f32 %v890, %v1477
  %v1677 = vsub.f32 %v895, %v1477
  %v1678 = vsub.f32 %v898, %v1477
  %v1679 = vsub.f32 %v903, %v1477
  %v1680 = vsub.f32 %v906, %v1477
  %v1681 = vsub.f32 %v911, %v1477
  %v1682 = vsub.f32 %v914, %v1477
  %v1683 = vsub.f32 %v919, %v1477
  %v1684 = vsub.f32 %v922, %v1477
  %v1685 = vsub.f32 %v927, %v1477
  %v1686 = vsub.f32 %v930, %v1477
  %v1687 = vsub.f32 %v935, %v1477
  %v1688 = vsub.f32 %v938, %v1477
  %v1689 = vsub.f32 %v943, %v1477
  %v1690 = vsub.f32 %v946, %v1477
  %v1691 = vsub.f32 %v951, %v1477
  %v1692 = vsub.f32 %v954, %v1477
  %v1693 = vsub.f32 %v959, %v1477
  %v1694 = vsub.f32 %v962, %v1477
  %v1695 = vsub.f32 %v967, %v1477
  %v1696 = vsub.f32 %v970, %v1477
  %v1697 = vsub.f32 %v975, %v1477
  %v1698 = vsub.f32 %v978, %v1477
  %v1699 = vsub.f32 %v983, %v1477
  %v1700 = vsub.f32 %v986, %v1477
  %v1701 = vsub.f32 %v991, %v1477
  %v1702 = vsub.f32 %v994, %v1477
  %v1703 = vsub.f32 %v999, %v1477
  %v1704 = vsub.f32 %v1002, %v1477
  %v1705 = vsub.f32 %v1007, %v1477
  %v1706 = vmul.f32 %v1675, %v1675
  %v1707 = vmul.f32 %v1676, %v1676
  %v1708 = vmul.f32 %v1677, %v1677
  %v1709 = vmul.f32 %v1678, %v1678
  %v1710 = vmul.f32 %v1679, %v1679
  %v1711 = vmul.f32 %v1680, %v1680
  %v1712 = vmul.f32 %v1681, %v1681
  %v1713 = vmul.f32 %v1682, %v1682
  %v1714 = vmul.f32 %v1683, %v1683
  %v1715 = vmul.f32 %v1684, %v1684
  %v1716 = vmul.f32 %v1685, %v1685
  %v1717 = vmul.f32 %v1686, %v1686
  %v1718 = vmul.f32 %v1687, %v1687
  %v1719 = vmul.f32 %v1688, %v1688
  %v1720 = vmul.f32 %v1689, %v1689
  %v1721 = vmul.f32 %v1690, %v1690
  %v1722 = vmul.f32 %v1691, %v1691
  %v1723 = vmul.f32 %v1692, %v1692
  %v1724 = vmul.f32 %v1693, %v1693
  %v1725 = vmul.f32 %v1694, %v1694
  %v1726 = vmul.f32 %v1695, %v1695
  %v1727 = vmul.f32 %v1696, %v1696
  %v1728 = vmul.f32 %v1697, %v1697
  %v1729 = vmul.f32 %v1698, %v1698
  %v1730 = vmul.f32 %v1699, %v1699
  %v1731 = vmul.f32 %v1700, %v1700
  %v1732 = vmul.f32 %v1701, %v1701
  %v1733 = vmul.f32 %v1702, %v1702
  %v1734 = vmul.f32 %v1703, %v1703
  %v1735 = vmul.f32 %v1704, %v1704
  %v1736 = vmul.f32 %v1705, %v1705
  %v1737 = vadd.f32 %v1706, %v1707
  %v1738 = vadd.f32 %v1737, %v1708
  %v1739 = vadd.f32 %v1738, %v1709
  %v1740 = vadd.f32 %v1739, %v1710
  %v1741 = vadd.f32 %v1740, %v1711
  %v1742 = vadd.f32 %v1741, %v1712
  %v1743 = vadd.f32 %v1742, %v1713
  %v1744 = vadd.f32 %v1743, %v1714
  %v1745 = vadd.f32 %v1744, %v1715
  %v1746 = vadd.f32 %v1745, %v1716
  %v1747 = vadd.f32 %v1746, %v1717
  %v1748 = vadd.f32 %v1747, %v1718
  %v1749 = vadd.f32 %v1748, %v1719
  %v1750 = vadd.f32 %v1749, %v1720
  %v1751 = vadd.f32 %v1750, %v1721
  %v1752 = vadd.f32 %v1751, %v1722
  %v1753 = vadd.f32 %v1752, %v1723
  %v1754 = vadd.f32 %v1753, %v1724
  %v1755 = vadd.f32 %v1754, %v1725
  %v1756 = vadd.f32 %v1755, %v1726
  %v1757 = vadd.f32 %v1756, %v1727
  %v1758 = vadd.f32 %v1757, %v1728
  %v1759 = vadd.f32 %v1758, %v1729
  %v1760 = vadd.f32 %v1759, %v1730
  %v1761 = vadd.f32 %v1760, %v1731
  %v1762 = vadd.f32 %v1761, %v1732
  %v1763 = vadd.f32 %v1762, %v1733
  %v1764 = vadd.f32 %v1763, %v1734
  %v1765 = vadd.f32 %v1764, %v1735
  %v1766 = vadd.f32 %v1765, %v1736
  %v1767 = vrot.slane %v1766, 4
  %v1768 = vadd.f32 %v1766, %v1767
  %v1769 = vrot.slane %v1768, 2
  %v1770 = vadd.f32 %v1768, %v1769
  %v1771 = vrot.slane %v1770, 1
  %v1772 = vadd.f32 %v1770, %v1771
  %v1773 = vadd.f32 %v1674, %v1772
  %v1774 = vsub.f32 %v1205, %v1477
  %v1775 = vsub.f32 %v1208, %v1477
  %v1776 = vsub.f32 %v1213, %v1477
  %v1777 = vsub.f32 %v1216, %v1477
  %v1778 = vsub.f32 %v1221, %v1477
  %v1779 = vsub.f32 %v1224, %v1477
  %v1780 = vsub.f32 %v1229, %v1477
  %v1781 = vsub.f32 %v1232, %v1477
  %v1782 = vsub.f32 %v1237, %v1477
  %v1783 = vsub.f32 %v1240, %v1477
  %v1784 = vsub.f32 %v1245, %v1477
  %v1785 = vsub.f32 %v1248, %v1477
  %v1786 = vsub.f32 %v1253, %v1477
  %v1787 = vsub.f32 %v1256, %v1477
  %v1788 = vsub.f32 %v1261, %v1477
  %v1789 = vsub.f32 %v1264, %v1477
  %v1790 = vsub.f32 %v1269, %v1477
  %v1791 = vsub.f32 %v1272, %v1477
  %v1792 = vsub.f32 %v1277, %v1477
  %v1793 = vsub.f32 %v1280, %v1477
  %v1794 = vsub.f32 %v1285, %v1477
  %v1795 = vsub.f32 %v1288, %v1477
  %v1796 = vsub.f32 %v1293, %v1477
  %v1797 = vsub.f32 %v1296, %v1477
  %v1798 = vsub.f32 %v1301, %v1477
  %v1799 = vsub.f32 %v1304, %v1477
  %v1800 = vsub.f32 %v1309, %v1477
  %v1801 = vsub.f32 %v1312, %v1477
  %v1802 = vsub.f32 %v1317, %v1477
  %v1803 = vsub.f32 %v1320, %v1477
  %v1804 = vsub.f32 %v1325, %v1477
  %v1805 = vmul.f32 %v1774, %v1774
  %v1806 = vmul.f32 %v1775, %v1775
  %v1807 = vmul.f32 %v1776, %v1776
  %v1808 = vmul.f32 %v1777, %v1777
  %v1809 = vmul.f32 %v1778, %v1778
  %v1810 = vmul.f32 %v1779, %v1779
  %v1811 = vmul.f32 %v1780, %v1780
  %v1812 = vmul.f32 %v1781, %v1781
  %v1813 = vmul.f32 %v1782, %v1782
  %v1814 = vmul.f32 %v1783, %v1783
  %v1815 = vmul.f32 %v1784, %v1784
  %v1816 = vmul.f32 %v1785, %v1785
  %v1817 = vmul.f32 %v1786, %v1786
  %v1818 = vmul.f32 %v1787, %v1787
  %v1819 = vmul.f32 %v1788, %v1788
  %v1820 = vmul.f32 %v1789, %v1789
  %v1821 = vmul.f32 %v1790, %v1790
  %v1822 = vmul.f32 %v1791, %v1791
  %v1823 = vmul.f32 %v1792, %v1792
  %v1824 = vmul.f32 %v1793, %v1793
  %v1825 = vmul.f32 %v1794, %v1794
  %v1826 = vmul.f32 %v1795, %v1795
  %v1827 = vmul.f32 %v1796, %v1796
  %v1828 = vmul.f32 %v1797, %v1797
  %v1829 = vmul.f32 %v1798, %v1798
  %v1830 = vmul.f32 %v1799, %v1799
  %v1831 = vmul.f32 %v1800, %v1800
  %v1832 = vmul.f32 %v1801, %v1801
  %v1833 = vmul.f32 %v1802, %v1802
  %v1834 = vmul.f32 %v1803, %v1803
  %v1835 = vmul.f32 %v1804, %v1804
  %v1836 = vadd.f32 %v1805, %v1806
  %v1837 = vadd.f32 %v1836, %v1807
  %v1838 = vadd.f32 %v1837, %v1808
  %v1839 = vadd.f32 %v1838, %v1809
  %v1840 = vadd.f32 %v1839, %v1810
  %v1841 = vadd.f32 %v1840, %v1811
  %v1842 = vadd.f32 %v1841, %v1812
  %v1843 = vadd.f32 %v1842, %v1813
  %v1844 = vadd.f32 %v1843, %v1814
  %v1845 = vadd.f32 %v1844, %v1815
  %v1846 = vadd.f32 %v1845, %v1816
  %v1847 = vadd.f32 %v1846, %v1817
  %v1848 = vadd.f32 %v1847, %v1818
  %v1849 = vadd.f32 %v1848, %v1819
  %v1850 = vadd.f32 %v1849, %v1820
  %v1851 = vadd.f32 %v1850, %v1821
  %v1852 = vadd.f32 %v1851, %v1822
  %v1853 = vadd.f32 %v1852, %v1823
  %v1854 = vadd.f32 %v1853, %v1824
  %v1855 = vadd.f32 %v1854, %v1825
  %v1856 = vadd.f32 %v1855, %v1826
  %v1857 = vadd.f32 %v1856, %v1827
  %v1858 = vadd.f32 %v1857, %v1828
  %v1859 = vadd.f32 %v1858, %v1829
  %v1860 = vadd.f32 %v1859, %v1830
  %v1861 = vadd.f32 %v1860, %v1831
  %v1862 = vadd.f32 %v1861, %v1832
  %v1863 = vadd.f32 %v1862, %v1833
  %v1864 = vadd.f32 %v1863, %v1834
  %v1865 = vadd.f32 %v1864, %v1835
  %v1866 = vrot.slane %v1865, 4
  %v1867 = vadd.f32 %v1865, %v1866
  %v1868 = vrot.slane %v1867, 2
  %v1869 = vadd.f32 %v1867, %v1868
  %v1870 = vrot.slane %v1869, 1
  %v1871 = vadd.f32 %v1869, %v1870
  %v1872 = vadd.f32 %v1773, %v1871
  %v1873 = vmul.f32 %v1872, 0.0010080645
  %v1874 = vld [vmem:[%s2] sm:$0x1]
  %v1875 = vadd.f32 %v1873, 1e-05
  %v1876 = vrsqrt.pop %v1875
  %v1877 = vmul.f32 %v1874, %v1876
  %v1878 = vld [vmem:[%s3] sm:$0x1]
  %v1879 = vmul.f32 %v1477, %v1877
  %v1880 = vsub.f32 %v1878, %v1879
  %v1882 = vlaneseq
  %v1883 = vshrl.u32 %v1882, 7
  %v1884 = vsub.s32 0, %v1883
  %v1885 = vrot.slane %v1877, %v1884
  %v1887 = vmul.f32 %v251, %v1885
  %v1888 = vmul.f32 %v254, %v1885
  %v1889 = vmul.f32 %v259, %v1885
  %v1890 = vmul.f32 %v262, %v1885
  %v1891 = vmul.f32 %v267, %v1885
  %v1892 = vmul.f32 %v270, %v1885
  %v1893 = vmul.f32 %v275, %v1885
  %v1894 = vmul.f32 %v278, %v1885
  %v1895 = vmul.f32 %v283, %v1885
  %v1896 = vmul.f32 %v286, %v1885
  %v1897 = vmul.f32 %v291, %v1885
  %v1898 = vmul.f32 %v294, %v1885
  %v1899 = vmul.f32 %v299, %v1885
  %v1900 = vmul.f32 %v302, %v1885
  %v1901 = vmul.f32 %v307, %v1885
  %v1902 = vmul.f32 %v310, %v1885
  %v1903 = vmul.f32 %v315, %v1885
  %v1904 = vmul.f32 %v318, %v1885
  %v1905 = vmul.f32 %v323, %v1885
  %v1906 = vmul.f32 %v326, %v1885
  %v1907 = vmul.f32 %v331, %v1885
  %v1908 = vmul.f32 %v334, %v1885
  %v1909 = vmul.f32 %v339, %v1885
  %v1910 = vmul.f32 %v342, %v1885
  %v1911 = vmul.f32 %v347, %v1885
  %v1912 = vmul.f32 %v350, %v1885
  %v1913 = vmul.f32 %v355, %v1885
  %v1914 = vmul.f32 %v358, %v1885
  %v1915 = vmul.f32 %v363, %v1885
  %v1916 = vmul.f32 %v366, %v1885
  %v1917 = vmul.f32 %v371, %v1885
  %v1919 = vlaneseq
  %v1920 = vshrl.u32 %v1919, 7
  %v1921 = vsub.s32 0, %v1920
  %v1922 = vrot.slane %v1880, %v1921
  %v1924 = vadd.f32 %v1887, %v1922
  %v1925 = vadd.f32 %v1888, %v1922
  %v1926 = vadd.f32 %v1889, %v1922
  %v1927 = vadd.f32 %v1890, %v1922
  %v1928 = vadd.f32 %v1891, %v1922
  %v1929 = vadd.f32 %v1892, %v1922
  %v1930 = vadd.f32 %v1893, %v1922
  %v1931 = vadd.f32 %v1894, %v1922
  %v1932 = vadd.f32 %v1895, %v1922
  %v1933 = vadd.f32 %v1896, %v1922
  %v1934 = vadd.f32 %v1897, %v1922
  %v1935 = vadd.f32 %v1898, %v1922
  %v1936 = vadd.f32 %v1899, %v1922
  %v1937 = vadd.f32 %v1900, %v1922
  %v1938 = vadd.f32 %v1901, %v1922
  %v1939 = vadd.f32 %v1902, %v1922
  %v1940 = vadd.f32 %v1903, %v1922
  %v1941 = vadd.f32 %v1904, %v1922
  %v1942 = vadd.f32 %v1905, %v1922
  %v1943 = vadd.f32 %v1906, %v1922
  %v1944 = vadd.f32 %v1907, %v1922
  %v1945 = vadd.f32 %v1908, %v1922
  %v1946 = vadd.f32 %v1909, %v1922
  %v1947 = vadd.f32 %v1910, %v1922
  %v1948 = vadd.f32 %v1911, %v1922
  %v1949 = vadd.f32 %v1912, %v1922
  %v1950 = vadd.f32 %v1913, %v1922
  %v1951 = vadd.f32 %v1914, %v1922
  %v1952 = vadd.f32 %v1915, %v1922
  %v1953 = vadd.f32 %v1916, %v1922
  %v1954 = vadd.f32 %v1917, %v1922
  %v1955 = vmax.f32 %v1924, 0.0
  %v1956 = vmax.f32 %v1925, 0.0
  %v1957 = vmax.f32 %v1926, 0.0
  %v1958 = vmax.f32 %v1927, 0.0
  %v1959 = vmax.f32 %v1928, 0.0
  %v1960 = vmax.f32 %v1929, 0.0
  %v1961 = vmax.f32 %v1930, 0.0
  %v1962 = vmax.f32 %v1931, 0.0
  %v1963 = vmax.f32 %v1932, 0.0
  %v1964 = vmax.f32 %v1933, 0.0
  %v1965 = vmax.f32 %v1934, 0.0
  %v1966 = vmax.f32 %v1935, 0.0
  %v1967 = vmax.f32 %v1936, 0.0
  %v1968 = vmax.f32 %v1937, 0.0
  %v1969 = vmax.f32 %v1938, 0.0
  %v1970 = vmax.f32 %v1939, 0.0
  %v1971 = vmax.f32 %v1940, 0.0
  %v1972 = vmax.f32 %v1941, 0.0
  %v1973 = vmax.f32 %v1942, 0.0
  %v1974 = vmax.f32 %v1943, 0.0
  %v1975 = vmax.f32 %v1944, 0.0
  %v1976 = vmax.f32 %v1945, 0.0
  %v1977 = vmax.f32 %v1946, 0.0
  %v1978 = vmax.f32 %v1947, 0.0
  %v1979 = vmax.f32 %v1948, 0.0
  %v1980 = vmax.f32 %v1949, 0.0
  %v1981 = vmax.f32 %v1950, 0.0
  %v1982 = vmax.f32 %v1951, 0.0
  %v1983 = vmax.f32 %v1952, 0.0
  %v1984 = vmax.f32 %v1953, 0.0
  %v1985 = vmax.f32 %v1954, 0.0
  %v1986 = vmul.f32 %v569, %v1885
  %v1987 = vmul.f32 %v572, %v1885
  %v1988 = vmul.f32 %v577, %v1885
  %v1989 = vmul.f32 %v580, %v1885
  %v1990 = vmul.f32 %v585, %v1885
  %v1991 = vmul.f32 %v588, %v1885
  %v1992 = vmul.f32 %v593, %v1885
  %v1993 = vmul.f32 %v596, %v1885
  %v1994 = vmul.f32 %v601, %v1885
  %v1995 = vmul.f32 %v604, %v1885
  %v1996 = vmul.f32 %v609, %v1885
  %v1997 = vmul.f32 %v612, %v1885
  %v1998 = vmul.f32 %v617, %v1885
  %v1999 = vmul.f32 %v620, %v1885
  %v2000 = vmul.f32 %v625, %v1885
  %v2001 = vmul.f32 %v628, %v1885
  %v2002 = vmul.f32 %v633, %v1885
  %v2003 = vmul.f32 %v636, %v1885
  %v2004 = vmul.f32 %v641, %v1885
  %v2005 = vmul.f32 %v644, %v1885
  %v2006 = vmul.f32 %v649, %v1885
  %v2007 = vmul.f32 %v652, %v1885
  %v2008 = vmul.f32 %v657, %v1885
  %v2009 = vmul.f32 %v660, %v1885
  %v2010 = vmul.f32 %v665, %v1885
  %v2011 = vmul.f32 %v668, %v1885
  %v2012 = vmul.f32 %v673, %v1885
  %v2013 = vmul.f32 %v676, %v1885
  %v2014 = vmul.f32 %v681, %v1885
  %v2015 = vmul.f32 %v684, %v1885
  %v2016 = vmul.f32 %v689, %v1885
  %v2017 = vadd.f32 %v1986, %v1922
  %v2018 = vadd.f32 %v1987, %v1922
  %v2019 = vadd.f32 %v1988, %v1922
  %v2020 = vadd.f32 %v1989, %v1922
  %v2021 = vadd.f32 %v1990, %v1922
  %v2022 = vadd.f32 %v1991, %v1922
  %v2023 = vadd.f32 %v1992, %v1922
  %v2024 = vadd.f32 %v1993, %v1922
  %v2025 = vadd.f32 %v1994, %v1922
  %v2026 = vadd.f32 %v1995, %v1922
  %v2027 = vadd.f32 %v1996, %v1922
  %v2028 = vadd.f32 %v1997, %v1922
  %v2029 = vadd.f32 %v1998, %v1922
  %v2030 = vadd.f32 %v1999, %v1922
  %v2031 = vadd.f32 %v2000, %v1922
  %v2032 = vadd.f32 %v2001, %v1922
  %v2033 = vadd.f32 %v2002, %v1922
  %v2034 = vadd.f32 %v2003, %v1922
  %v2035 = vadd.f32 %v2004, %v1922
  %v2036 = vadd.f32 %v2005, %v1922
  %v2037 = vadd.f32 %v2006, %v1922
  %v2038 = vadd.f32 %v2007, %v1922
  %v2039 = vadd.f32 %v2008, %v1922
  %v2040 = vadd.f32 %v2009, %v1922
  %v2041 = vadd.f32 %v2010, %v1922
  %v2042 = vadd.f32 %v2011, %v1922
  %v2043 = vadd.f32 %v2012, %v1922
  %v2044 = vadd.f32 %v2013, %v1922
  %v2045 = vadd.f32 %v2014, %v1922
  %v2046 = vadd.f32 %v2015, %v1922
  %v2047 = vadd.f32 %v2016, %v1922
  %v2048 = vmax.f32 %v2017, 0.0
  %v2049 = vmax.f32 %v2018, 0.0
  %v2050 = vmax.f32 %v2019, 0.0
  %v2051 = vmax.f32 %v2020, 0.0
  %v2052 = vmax.f32 %v2021, 0.0
  %v2053 = vmax.f32 %v2022, 0.0
  %v2054 = vmax.f32 %v2023, 0.0
  %v2055 = vmax.f32 %v2024, 0.0
  %v2056 = vmax.f32 %v2025, 0.0
  %v2057 = vmax.f32 %v2026, 0.0
  %v2058 = vmax.f32 %v2027, 0.0
  %v2059 = vmax.f32 %v2028, 0.0
  %v2060 = vmax.f32 %v2029, 0.0
  %v2061 = vmax.f32 %v2030, 0.0
  %v2062 = vmax.f32 %v2031, 0.0
  %v2063 = vmax.f32 %v2032, 0.0
  %v2064 = vmax.f32 %v2033, 0.0
  %v2065 = vmax.f32 %v2034, 0.0
  %v2066 = vmax.f32 %v2035, 0.0
  %v2067 = vmax.f32 %v2036, 0.0
  %v2068 = vmax.f32 %v2037, 0.0
  %v2069 = vmax.f32 %v2038, 0.0
  %v2070 = vmax.f32 %v2039, 0.0
  %v2071 = vmax.f32 %v2040, 0.0
  %v2072 = vmax.f32 %v2041, 0.0
  %v2073 = vmax.f32 %v2042, 0.0
  %v2074 = vmax.f32 %v2043, 0.0
  %v2075 = vmax.f32 %v2044, 0.0
  %v2076 = vmax.f32 %v2045, 0.0
  %v2077 = vmax.f32 %v2046, 0.0
  %v2078 = vmax.f32 %v2047, 0.0
  %v2079 = vmul.f32 %v887, %v1885
  %v2080 = vmul.f32 %v890, %v1885
  %v2081 = vmul.f32 %v895, %v1885
  %v2082 = vmul.f32 %v898, %v1885
  %v2083 = vmul.f32 %v903, %v1885
  %v2084 = vmul.f32 %v906, %v1885
  %v2085 = vmul.f32 %v911, %v1885
  %v2086 = vmul.f32 %v914, %v1885
  %v2087 = vmul.f32 %v919, %v1885
  %v2088 = vmul.f32 %v922, %v1885
  %v2089 = vmul.f32 %v927, %v1885
  %v2090 = vmul.f32 %v930, %v1885
  %v2091 = vmul.f32 %v935, %v1885
  %v2092 = vmul.f32 %v938, %v1885
  %v2093 = vmul.f32 %v943, %v1885
  %v2094 = vmul.f32 %v946, %v1885
  %v2095 = vmul.f32 %v951, %v1885
  %v2096 = vmul.f32 %v954, %v1885
  %v2097 = vmul.f32 %v959, %v1885
  %v2098 = vmul.f32 %v962, %v1885
  %v2099 = vmul.f32 %v967, %v1885
  %v2100 = vmul.f32 %v970, %v1885
  %v2101 = vmul.f32 %v975, %v1885
  %v2102 = vmul.f32 %v978, %v1885
  %v2103 = vmul.f32 %v983, %v1885
  %v2104 = vmul.f32 %v986, %v1885
  %v2105 = vmul.f32 %v991, %v1885
  %v2106 = vmul.f32 %v994, %v1885
  %v2107 = vmul.f32 %v999, %v1885
  %v2108 = vmul.f32 %v1002, %v1885
  %v2109 = vmul.f32 %v1007, %v1885
  %v2110 = vadd.f32 %v2079, %v1922
  %v2111 = vadd.f32 %v2080, %v1922
  %v2112 = vadd.f32 %v2081, %v1922
  %v2113 = vadd.f32 %v2082, %v1922
  %v2114 = vadd.f32 %v2083, %v1922
  %v2115 = vadd.f32 %v2084, %v1922
  %v2116 = vadd.f32 %v2085, %v1922
  %v2117 = vadd.f32 %v2086, %v1922
  %v2118 = vadd.f32 %v2087, %v1922
  %v2119 = vadd.f32 %v2088, %v1922
  %v2120 = vadd.f32 %v2089, %v1922
  %v2121 = vadd.f32 %v2090, %v1922
  %v2122 = vadd.f32 %v2091, %v1922
  %v2123 = vadd.f32 %v2092, %v1922
  %v2124 = vadd.f32 %v2093, %v1922
  %v2125 = vadd.f32 %v2094, %v1922
  %v2126 = vadd.f32 %v2095, %v1922
  %v2127 = vadd.f32 %v2096, %v1922
  %v2128 = vadd.f32 %v2097, %v1922
  %v2129 = vadd.f32 %v2098, %v1922
  %v2130 = vadd.f32 %v2099, %v1922
  %v2131 = vadd.f32 %v2100, %v1922
  %v2132 = vadd.f32 %v2101, %v1922
  %v2133 = vadd.f32 %v2102, %v1922
  %v2134 = vadd.f32 %v2103, %v1922
  %v2135 = vadd.f32 %v2104, %v1922
  %v2136 = vadd.f32 %v2105, %v1922
  %v2137 = vadd.f32 %v2106, %v1922
  %v2138 = vadd.f32 %v2107, %v1922
  %v2139 = vadd.f32 %v2108, %v1922
  %v2140 = vadd.f32 %v2109, %v1922
  %v2141 = vmax.f32 %v2110, 0.0
  %v2142 = vmax.f32 %v2111, 0.0
  %v2143 = vmax.f32 %v2112, 0.0
  %v2144 = vmax.f32 %v2113, 0.0
  %v2145 = vmax.f32 %v2114, 0.0
  %v2146 = vmax.f32 %v2115, 0.0
  %v2147 = vmax.f32 %v2116, 0.0
  %v2148 = vmax.f32 %v2117, 0.0
  %v2149 = vmax.f32 %v2118, 0.0
  %v2150 = vmax.f32 %v2119, 0.0
  %v2151 = vmax.f32 %v2120, 0.0
  %v2152 = vmax.f32 %v2121, 0.0
  %v2153 = vmax.f32 %v2122, 0.0
  %v2154 = vmax.f32 %v2123, 0.0
  %v2155 = vmax.f32 %v2124, 0.0
  %v2156 = vmax.f32 %v2125, 0.0
  %v2157 = vmax.f32 %v2126, 0.0
  %v2158 = vmax.f32 %v2127, 0.0
  %v2159 = vmax.f32 %v2128, 0.0
  %v2160 = vmax.f32 %v2129, 0.0
  %v2161 = vmax.f32 %v2130, 0.0
  %v2162 = vmax.f32 %v2131, 0.0
  %v2163 = vmax.f32 %v2132, 0.0
  %v2164 = vmax.f32 %v2133, 0.0
  %v2165 = vmax.f32 %v2134, 0.0
  %v2166 = vmax.f32 %v2135, 0.0
  %v2167 = vmax.f32 %v2136, 0.0
  %v2168 = vmax.f32 %v2137, 0.0
  %v2169 = vmax.f32 %v2138, 0.0
  %v2170 = vmax.f32 %v2139, 0.0
  %v2171 = vmax.f32 %v2140, 0.0
  %v2172 = vmul.f32 %v1205, %v1885
  %v2173 = vmul.f32 %v1208, %v1885
  %v2174 = vmul.f32 %v1213, %v1885
  %v2175 = vmul.f32 %v1216, %v1885
  %v2176 = vmul.f32 %v1221, %v1885
  %v2177 = vmul.f32 %v1224, %v1885
  %v2178 = vmul.f32 %v1229, %v1885
  %v2179 = vmul.f32 %v1232, %v1885
  %v2180 = vmul.f32 %v1237, %v1885
  %v2181 = vmul.f32 %v1240, %v1885
  %v2182 = vmul.f32 %v1245, %v1885
  %v2183 = vmul.f32 %v1248, %v1885
  %v2184 = vmul.f32 %v1253, %v1885
  %v2185 = vmul.f32 %v1256, %v1885
  %v2186 = vmul.f32 %v1261, %v1885
  %v2187 = vmul.f32 %v1264, %v1885
  %v2188 = vmul.f32 %v1269, %v1885
  %v2189 = vmul.f32 %v1272, %v1885
  %v2190 = vmul.f32 %v1277, %v1885
  %v2191 = vmul.f32 %v1280, %v1885
  %v2192 = vmul.f32 %v1285, %v1885
  %v2193 = vmul.f32 %v1288, %v1885
  %v2194 = vmul.f32 %v1293, %v1885
  %v2195 = vmul.f32 %v1296, %v1885
  %v2196 = vmul.f32 %v1301, %v1885
  %v2197 = vmul.f32 %v1304, %v1885
  %v2198 = vmul.f32 %v1309, %v1885
  %v2199 = vmul.f32 %v1312, %v1885
  %v2200 = vmul.f32 %v1317, %v1885
  %v2201 = vmul.f32 %v1320, %v1885
  %v2202 = vmul.f32 %v1325, %v1885
  %v2203 = vadd.f32 %v2172, %v1922
  %v2204 = vadd.f32 %v2173, %v1922
  %v2205 = vadd.f32 %v2174, %v1922
  %v2206 = vadd.f32 %v2175, %v1922
  %v2207 = vadd.f32 %v2176, %v1922
  %v2208 = vadd.f32 %v2177, %v1922
  %v2209 = vadd.f32 %v2178, %v1922
  %v2210 = vadd.f32 %v2179, %v1922
  %v2211 = vadd.f32 %v2180, %v1922
  %v2212 = vadd.f32 %v2181, %v1922
  %v2213 = vadd.f32 %v2182, %v1922
  %v2214 = vadd.f32 %v2183, %v1922
  %v2215 = vadd.f32 %v2184, %v1922
  %v2216 = vadd.f32 %v2185, %v1922
  %v2217 = vadd.f32 %v2186, %v1922
  %v2218 = vadd.f32 %v2187, %v1922
  %v2219 = vadd.f32 %v2188, %v1922
  %v2220 = vadd.f32 %v2189, %v1922
  %v2221 = vadd.f32 %v2190, %v1922
  %v2222 = vadd.f32 %v2191, %v1922
  %v2223 = vadd.f32 %v2192, %v1922
  %v2224 = vadd.f32 %v2193, %v1922
  %v2225 = vadd.f32 %v2194, %v1922
  %v2226 = vadd.f32 %v2195, %v1922
  %v2227 = vadd.f32 %v2196, %v1922
  %v2228 = vadd.f32 %v2197, %v1922
  %v2229 = vadd.f32 %v2198, %v1922
  %v2230 = vadd.f32 %v2199, %v1922
  %v2231 = vadd.f32 %v2200, %v1922
  %v2232 = vadd.f32 %v2201, %v1922
  %v2233 = vadd.f32 %v2202, %v1922
  %v2234 = vmax.f32 %v2203, 0.0
  %v2235 = vmax.f32 %v2204, 0.0
  %v2236 = vmax.f32 %v2205, 0.0
  %v2237 = vmax.f32 %v2206, 0.0
  %v2238 = vmax.f32 %v2207, 0.0
  %v2239 = vmax.f32 %v2208, 0.0
  %v2240 = vmax.f32 %v2209, 0.0
  %v2241 = vmax.f32 %v2210, 0.0
  %v2242 = vmax.f32 %v2211, 0.0
  %v2243 = vmax.f32 %v2212, 0.0
  %v2244 = vmax.f32 %v2213, 0.0
  %v2245 = vmax.f32 %v2214, 0.0
  %v2246 = vmax.f32 %v2215, 0.0
  %v2247 = vmax.f32 %v2216, 0.0
  %v2248 = vmax.f32 %v2217, 0.0
  %v2249 = vmax.f32 %v2218, 0.0
  %v2250 = vmax.f32 %v2219, 0.0
  %v2251 = vmax.f32 %v2220, 0.0
  %v2252 = vmax.f32 %v2221, 0.0
  %v2253 = vmax.f32 %v2222, 0.0
  %v2254 = vmax.f32 %v2223, 0.0
  %v2255 = vmax.f32 %v2224, 0.0
  %v2256 = vmax.f32 %v2225, 0.0
  %v2257 = vmax.f32 %v2226, 0.0
  %v2258 = vmax.f32 %v2227, 0.0
  %v2259 = vmax.f32 %v2228, 0.0
  %v2260 = vmax.f32 %v2229, 0.0
  %v2261 = vmax.f32 %v2230, 0.0
  %v2262 = vmax.f32 %v2231, 0.0
  %v2263 = vmax.f32 %v2232, 0.0
  %v2264 = vmax.f32 %v2233, 0.0
  %v2265 = vmax.f32 %v1955, %v2048
  %v2266 = vmax.f32 %v1956, %v2049
  %v2267 = vmax.f32 %v1957, %v2050
  %v2268 = vmax.f32 %v1958, %v2051
  %v2269 = vmax.f32 %v1959, %v2052
  %v2270 = vmax.f32 %v1960, %v2053
  %v2271 = vmax.f32 %v1961, %v2054
  %v2272 = vmax.f32 %v1962, %v2055
  %v2273 = vmax.f32 %v1963, %v2056
  %v2274 = vmax.f32 %v1964, %v2057
  %v2275 = vmax.f32 %v1965, %v2058
  %v2276 = vmax.f32 %v1966, %v2059
  %v2277 = vmax.f32 %v1967, %v2060
  %v2278 = vmax.f32 %v1968, %v2061
  %v2279 = vmax.f32 %v1969, %v2062
  %v2280 = vmax.f32 %v1970, %v2063
  %v2281 = vmax.f32 %v1971, %v2064
  %v2282 = vmax.f32 %v1972, %v2065
  %v2283 = vmax.f32 %v1973, %v2066
  %v2284 = vmax.f32 %v1974, %v2067
  %v2285 = vmax.f32 %v1975, %v2068
  %v2286 = vmax.f32 %v1976, %v2069
  %v2287 = vmax.f32 %v1977, %v2070
  %v2288 = vmax.f32 %v1978, %v2071
  %v2289 = vmax.f32 %v1979, %v2072
  %v2290 = vmax.f32 %v1980, %v2073
  %v2291 = vmax.f32 %v1981, %v2074
  %v2292 = vmax.f32 %v1982, %v2075
  %v2293 = vmax.f32 %v1983, %v2076
  %v2294 = vmax.f32 %v1984, %v2077
  %v2295 = vmax.f32 %v1985, %v2078
  %v2296 = vmax.f32 %v2141, %v2234
  %v2297 = vmax.f32 %v2142, %v2235
  %v2298 = vmax.f32 %v2143, %v2236
  %v2299 = vmax.f32 %v2144, %v2237
  %v2300 = vmax.f32 %v2145, %v2238
  %v2301 = vmax.f32 %v2146, %v2239
  %v2302 = vmax.f32 %v2147, %v2240
  %v2303 = vmax.f32 %v2148, %v2241
  %v2304 = vmax.f32 %v2149, %v2242
  %v2305 = vmax.f32 %v2150, %v2243
  %v2306 = vmax.f32 %v2151, %v2244
  %v2307 = vmax.f32 %v2152, %v2245
  %v2308 = vmax.f32 %v2153, %v2246
  %v2309 = vmax.f32 %v2154, %v2247
  %v2310 = vmax.f32 %v2155, %v2248
  %v2311 = vmax.f32 %v2156, %v2249
  %v2312 = vmax.f32 %v2157, %v2250
  %v2313 = vmax.f32 %v2158, %v2251
  %v2314 = vmax.f32 %v2159, %v2252
  %v2315 = vmax.f32 %v2160, %v2253
  %v2316 = vmax.f32 %v2161, %v2254
  %v2317 = vmax.f32 %v2162, %v2255
  %v2318 = vmax.f32 %v2163, %v2256
  %v2319 = vmax.f32 %v2164, %v2257
  %v2320 = vmax.f32 %v2165, %v2258
  %v2321 = vmax.f32 %v2166, %v2259
  %v2322 = vmax.f32 %v2167, %v2260
  %v2323 = vmax.f32 %v2168, %v2261
  %v2324 = vmax.f32 %v2169, %v2262
  %v2325 = vmax.f32 %v2170, %v2263
  %v2326 = vmax.f32 %v2171, %v2264
  %v2327 = vmax.f32 %v2265, %v2296
  %v2328 = vmax.f32 %v2266, %v2297
  %v2329 = vmax.f32 %v2267, %v2298
  %v2330 = vmax.f32 %v2268, %v2299
  %v2331 = vmax.f32 %v2269, %v2300
  %v2332 = vmax.f32 %v2270, %v2301
  %v2333 = vmax.f32 %v2271, %v2302
  %v2334 = vmax.f32 %v2272, %v2303
  %v2335 = vmax.f32 %v2273, %v2304
  %v2336 = vmax.f32 %v2274, %v2305
  %v2337 = vmax.f32 %v2275, %v2306
  %v2338 = vmax.f32 %v2276, %v2307
  %v2339 = vmax.f32 %v2277, %v2308
  %v2340 = vmax.f32 %v2278, %v2309
  %v2341 = vmax.f32 %v2279, %v2310
  %v2342 = vmax.f32 %v2280, %v2311
  %v2343 = vmax.f32 %v2281, %v2312
  %v2344 = vmax.f32 %v2282, %v2313
  %v2345 = vmax.f32 %v2283, %v2314
  %v2346 = vmax.f32 %v2284, %v2315
  %v2347 = vmax.f32 %v2285, %v2316
  %v2348 = vmax.f32 %v2286, %v2317
  %v2349 = vmax.f32 %v2287, %v2318
  %v2350 = vmax.f32 %v2288, %v2319
  %v2351 = vmax.f32 %v2289, %v2320
  %v2352 = vmax.f32 %v2290, %v2321
  %v2353 = vmax.f32 %v2291, %v2322
  %v2354 = vmax.f32 %v2292, %v2323
  %v2355 = vmax.f32 %v2293, %v2324
  %v2356 = vmax.f32 %v2294, %v2325
  %v2357 = vmax.f32 %v2295, %v2326
  %v2358 = vpack.c.bf16 %v2328, %v2327
  %v2359 = vpack.c.bf16 %v2330, %v2329
  %v2360 = vpack.c.bf16 %v2332, %v2331
  %v2361 = vpack.c.bf16 %v2334, %v2333
  %v2362 = vpack.c.bf16 %v2336, %v2335
  %v2363 = vpack.c.bf16 %v2338, %v2337
  %v2364 = vpack.c.bf16 %v2340, %v2339
  %v2365 = vpack.c.bf16 %v2342, %v2341
  %v2366 = vpack.c.bf16 %v2344, %v2343
  %v2367 = vpack.c.bf16 %v2346, %v2345
  %v2368 = vpack.c.bf16 %v2348, %v2347
  %v2369 = vpack.c.bf16 %v2350, %v2349
  %v2370 = vpack.c.bf16 %v2352, %v2351
  %v2371 = vpack.c.bf16 %v2354, %v2353
  %v2372 = vpack.c.bf16 %v2356, %v2355
  %v2373 = vpack.c.bf16 %v2357, %v2357
  %v2390 = vunpack.c.l.b16 %v2358
  %v2391 = vunpack.c.h.b16 %v2358
  %v2392 = vunpack.c.l.b16 %v2359
  %v2393 = vunpack.c.h.b16 %v2359
  %v2394 = vunpack.c.l.b16 %v2360
  %v2395 = vunpack.c.h.b16 %v2360
  %v2396 = vunpack.c.l.b16 %v2361
  %v2397 = vunpack.c.h.b16 %v2361
  %v2398 = vunpack.c.l.b16 %v2362
  %v2399 = vunpack.c.h.b16 %v2362
  %v2400 = vunpack.c.l.b16 %v2363
  %v2401 = vunpack.c.h.b16 %v2363
  %v2402 = vunpack.c.l.b16 %v2364
  %v2403 = vunpack.c.h.b16 %v2364
  %v2404 = vunpack.c.l.b16 %v2365
  %v2405 = vunpack.c.h.b16 %v2365
  %v2406 = vunpack.c.l.b16 %v2366
  %v2407 = vunpack.c.h.b16 %v2366
  %v2408 = vunpack.c.l.b16 %v2367
  %v2409 = vunpack.c.h.b16 %v2367
  %v2410 = vunpack.c.l.b16 %v2368
  %v2411 = vunpack.c.h.b16 %v2368
  %v2412 = vunpack.c.l.b16 %v2369
  %v2413 = vunpack.c.h.b16 %v2369
  %v2414 = vunpack.c.l.b16 %v2370
  %v2415 = vunpack.c.h.b16 %v2370
  %v2416 = vunpack.c.l.b16 %v2371
  %v2417 = vunpack.c.h.b16 %v2371
  %v2418 = vunpack.c.l.b16 %v2372
  %v2419 = vunpack.c.h.b16 %v2372
  %v2420 = vunpack.c.l.b16 %v2373
  %v2421 = vpack.c.b16 %v2390, %v2390
  %v2422 = vpack.c.b16 %v2391, %v2391
  %v2423 = vpack.c.b16 %v2392, %v2392
  %v2424 = vpack.c.b16 %v2393, %v2393
  %v2425 = vpack.c.b16 %v2394, %v2394
  %v2426 = vpack.c.b16 %v2395, %v2395
  %v2427 = vpack.c.b16 %v2396, %v2396
  %v2428 = vpack.c.b16 %v2397, %v2397
  %v2429 = vpack.c.b16 %v2398, %v2398
  %v2430 = vpack.c.b16 %v2399, %v2399
  %v2431 = vpack.c.b16 %v2400, %v2400
  %v2432 = vpack.c.b16 %v2401, %v2401
  %v2433 = vpack.c.b16 %v2402, %v2402
  %v2434 = vpack.c.b16 %v2403, %v2403
  %v2435 = vpack.c.b16 %v2404, %v2404
  %v2436 = vpack.c.b16 %v2405, %v2405
  %v2437 = vpack.c.b16 %v2406, %v2406
  %v2438 = vpack.c.b16 %v2407, %v2407
  %v2439 = vpack.c.b16 %v2408, %v2408
  %v2440 = vpack.c.b16 %v2409, %v2409
  %v2441 = vpack.c.b16 %v2410, %v2410
  %v2442 = vpack.c.b16 %v2411, %v2411
  %v2443 = vpack.c.b16 %v2412, %v2412
  %v2444 = vpack.c.b16 %v2413, %v2413
  %v2445 = vpack.c.b16 %v2414, %v2414
  %v2446 = vpack.c.b16 %v2415, %v2415
  %v2447 = vpack.c.b16 %v2416, %v2416
  %v2448 = vpack.c.b16 %v2417, %v2417
  %v2449 = vpack.c.b16 %v2418, %v2418
  %v2450 = vpack.c.b16 %v2419, %v2419
  %v2451 = vpack.c.b16 %v2420, %v2420
  %2483 = vst [vmem:[%s4] sm:$0xf] %v2421
  %2484 = vst [vmem:[%s4 + $0x4] sm:$0xf] %v2422
  %2485 = vst [vmem:[%s4 + $0x8] sm:$0xf] %v2423
  %2486 = vst [vmem:[%s4 + $0xc] sm:$0xf] %v2424
  %2487 = vst [vmem:[%s4 + $0x10] sm:$0xf] %v2425
  %2488 = vst [vmem:[%s4 + $0x14] sm:$0xf] %v2426
  %2489 = vst [vmem:[%s4 + $0x18] sm:$0xf] %v2427
  %2490 = vst [vmem:[%s4 + $0x1c] sm:$0xf] %v2428
  %2491 = vst [vmem:[%s4 + $0x20] sm:$0xf] %v2429
  %2492 = vst [vmem:[%s4 + $0x24] sm:$0xf] %v2430
  %2493 = vst [vmem:[%s4 + $0x28] sm:$0xf] %v2431
  %2494 = vst [vmem:[%s4 + $0x2c] sm:$0xf] %v2432
  %2495 = vst [vmem:[%s4 + $0x30] sm:$0xf] %v2433
  %2496 = vst [vmem:[%s4 + $0x34] sm:$0xf] %v2434
  %2497 = vst [vmem:[%s4 + $0x38] sm:$0xf] %v2435
  %2498 = vst [vmem:[%s4 + $0x3c] sm:$0xf] %v2436
  %2499 = vst [vmem:[%s4 + $0x40] sm:$0xf] %v2437
  %2500 = vst [vmem:[%s4 + $0x44] sm:$0xf] %v2438
  %2501 = vst [vmem:[%s4 + $0x48] sm:$0xf] %v2439
  %2502 = vst [vmem:[%s4 + $0x4c] sm:$0xf] %v2440
  %2503 = vst [vmem:[%s4 + $0x50] sm:$0xf] %v2441
  %2504 = vst [vmem:[%s4 + $0x54] sm:$0xf] %v2442
  %2505 = vst [vmem:[%s4 + $0x58] sm:$0xf] %v2443
  %2506 = vst [vmem:[%s4 + $0x5c] sm:$0xf] %v2444
  %2507 = vst [vmem:[%s4 + $0x60] sm:$0xf] %v2445
  %2508 = vst [vmem:[%s4 + $0x64] sm:$0xf] %v2446
  %2509 = vst [vmem:[%s4 + $0x68] sm:$0xf] %v2447
  %2510 = vst [vmem:[%s4 + $0x6c] sm:$0xf] %v2448
  %2511 = vst [vmem:[%s4 + $0x70] sm:$0xf] %v2449
  %2512 = vst [vmem:[%s4 + $0x74] sm:$0xf] %v2450
  %2513 = vst [vmem:[%s4 + $0x78] sm:$0xf] %v2451
  // Predicated region
  $region18: #{m5_forward.4} parent=0 // pred_check
    _
  $region19: #{m5_forward.4} parent=0 // pred_check_branch
    %2515 = sbr.rel (0) target = $region21
  $region20: #{m5_forward.4} parent=0 // pred_region
    _
  $region21: #{m5_forward.4} parent=0 // pred_fallthru
    _
  // Predicated region
  $region22: #{m5_forward.4} parent=0 // pred_check
    _
  $region23: #{m5_forward.4} parent=0 // pred_check_branch
    %2517 = sbr.rel (0) target = $region25
  $region24: #{m5_forward.4} parent=0 // pred_region
    _
  $region25: #{m5_forward.4} parent=0 // pred_fallthru
    _

// kernel: m5_forward.5
$region0: #{m5_forward.5}
  #allocation0 [shape = 'u32[]', space=smem, size = 0x4, offset = 0x4, fixed_abs, tag = 'smem constant byte address 0x4 - core index']
  #allocation1 [shape = 'u32[144,128]{1,0:T(1,128)}', space=vmem, size = 0x12000, scoped, tag = 'internal scratch']
  %s0 = inlined_call_operand.vmem [shape: bf16[4,60,384], index: 0, kind: input, shape index: {}]
  %s1 = inlined_call_operand.vmem [shape: bf16[4,384], index: 1, kind: input, shape index: {}]
  %s2 = inlined_call_operand.vmem [shape: bf16[384,128], index: 2, kind: input, shape index: {}]
  %s3 = inlined_call_operand.vmem [shape: f32[1,128], index: 3, kind: input, shape index: {}]
  %s4 = inlined_call_operand.vmem [shape: f32[1,128], index: 4, kind: input, shape index: {}]
  %s5 = inlined_call_operand.vmem [shape: bf16[60,128], index: 5, kind: output, shape index: {}]
  %s6 = sld [smem:[#allocation0]]
  $region30: #{m5_forward.5} parent=0
    _
  %s8 = ssub.s32 1, %s6
  %s9 = scalar_select 0, %s8, %s6
  // Predicated region
  $region2: #{m5_forward.5} parent=0 // pred_check
    _
  $region3: #{m5_forward.5} parent=0 // pred_check_branch
    %11 = sbr.rel (0) target = $region5
  $region4: #{m5_forward.5} parent=0 // pred_region
    _
  $region5: #{m5_forward.5} parent=0 // pred_fallthru
    _
  // Predicated region
  $region6: #{m5_forward.5} parent=0 // pred_check
    _
  $region7: #{m5_forward.5} parent=0 // pred_check_branch
    %13 = sbr.rel (0) target = $region9
  $region8: #{m5_forward.5} parent=0 // pred_region
    _
  $region9: #{m5_forward.5} parent=0 // pred_fallthru
    _
  // Predicated region
  $region10: #{m5_forward.5} parent=0 // pred_check
    _
  $region11: #{m5_forward.5} parent=0 // pred_check_branch
    %15 = sbr.rel (0) target = $region13
  $region12: #{m5_forward.5} parent=0 // pred_region
    _
  $region13: #{m5_forward.5} parent=0 // pred_fallthru
    _
  // Predicated region
  $region14: #{m5_forward.5} parent=0 // pred_check
    _
  $region15: #{m5_forward.5} parent=0 // pred_check_branch
    %17 = sbr.rel (0) target = $region17
  $region16: #{m5_forward.5} parent=0 // pred_region
    _
  $region17: #{m5_forward.5} parent=0 // pred_fallthru
    _
  // Predicated region
  $region18: #{m5_forward.5} parent=0 // pred_check
    _
  $region19: #{m5_forward.5} parent=0 // pred_check_branch
    %19 = sbr.rel (0) target = $region21
  $region20: #{m5_forward.5} parent=0 // pred_region
    _
  $region21: #{m5_forward.5} parent=0 // pred_fallthru
    _
  %v21 = vld [vmem:[%s2] sm:$0xf]
  %v22 = vld [vmem:[%s2 + $0x4] sm:$0xf]
  %v23 = vld [vmem:[%s2 + $0x8] sm:$0xf]
  %v24 = vld [vmem:[%s2 + $0xc] sm:$0xf]
  %v25 = vld [vmem:[%s2 + $0x10] sm:$0xf]
  %v26 = vld [vmem:[%s2 + $0x14] sm:$0xf]
  %v27 = vld [vmem:[%s2 + $0x18] sm:$0xf]
  %v28 = vld [vmem:[%s2 + $0x1c] sm:$0xf]
  %v29 = vld [vmem:[%s2 + $0x20] sm:$0xf]
  %v30 = vld [vmem:[%s2 + $0x24] sm:$0xf]
  %v31 = vld [vmem:[%s2 + $0x28] sm:$0xf]
  %v32 = vld [vmem:[%s2 + $0x2c] sm:$0xf]
  %v33 = vld [vmem:[%s2 + $0x30] sm:$0xf]
  %v34 = vld [vmem:[%s2 + $0x34] sm:$0xf]
  %v35 = vld [vmem:[%s2 + $0x38] sm:$0xf]
  %v36 = vld [vmem:[%s2 + $0x3c] sm:$0xf]
  %v37 = vld [vmem:[%s2 + $0x40] sm:$0xf]
  %v38 = vld [vmem:[%s2 + $0x44] sm:$0xf]
  %v39 = vld [vmem:[%s2 + $0x48] sm:$0xf]
  %v40 = vld [vmem:[%s2 + $0x4c] sm:$0xf]
  %v41 = vld [vmem:[%s2 + $0x50] sm:$0xf]
  %v42 = vld [vmem:[%s2 + $0x54] sm:$0xf]
  %v43 = vld [vmem:[%s2 + $0x58] sm:$0xf]
  %v44 = vld [vmem:[%s2 + $0x5c] sm:$0xf]
  %v45 = vld [vmem:[%s2 + $0x60] sm:$0xf]
  %v46 = vld [vmem:[%s2 + $0x64] sm:$0xf]
  %v47 = vld [vmem:[%s2 + $0x68] sm:$0xf]
  %v48 = vld [vmem:[%s2 + $0x6c] sm:$0xf]
  %v49 = vld [vmem:[%s2 + $0x70] sm:$0xf]
  %v50 = vld [vmem:[%s2 + $0x74] sm:$0xf]
  %v51 = vld [vmem:[%s2 + $0x78] sm:$0xf]
  %v52 = vld [vmem:[%s2 + $0x7c] sm:$0xf]
  %v53 = vld [vmem:[%s2 + $0x80] sm:$0xf]
  %v54 = vld [vmem:[%s2 + $0x84] sm:$0xf]
  %v55 = vld [vmem:[%s2 + $0x88] sm:$0xf]
  %v56 = vld [vmem:[%s2 + $0x8c] sm:$0xf]
  %v57 = vld [vmem:[%s2 + $0x90] sm:$0xf]
  %v58 = vld [vmem:[%s2 + $0x94] sm:$0xf]
  %v59 = vld [vmem:[%s2 + $0x98] sm:$0xf]
  %v60 = vld [vmem:[%s2 + $0x9c] sm:$0xf]
  %v61 = vld [vmem:[%s2 + $0xa0] sm:$0xf]
  %v62 = vld [vmem:[%s2 + $0xa4] sm:$0xf]
  %v63 = vld [vmem:[%s2 + $0xa8] sm:$0xf]
  %v64 = vld [vmem:[%s2 + $0xac] sm:$0xf]
  %v65 = vld [vmem:[%s2 + $0xb0] sm:$0xf]
  %v66 = vld [vmem:[%s2 + $0xb4] sm:$0xf]
  %v67 = vld [vmem:[%s2 + $0xb8] sm:$0xf]
  %v68 = vld [vmem:[%s2 + $0xbc] sm:$0xf]
  %v69 = vld [vmem:[%s0] sm:$0xff]
  %v70 = vld [vmem:[%s0 + $0x8] sm:$0xf]
  %v71 = vld [vmem:[%s0 + $0xc] sm:$0xff]
  %v72 = vld [vmem:[%s0 + $0x14] sm:$0xf]
  %v73 = vld [vmem:[%s0 + $0x18] sm:$0xff]
  %v74 = vld [vmem:[%s0 + $0x20] sm:$0xf]
  %v75 = vld [vmem:[%s0 + $0x24] sm:$0xff]
  %v76 = vld [vmem:[%s0 + $0x2c] sm:$0xf]
  %v77 = vld [vmem:[%s0 + $0x30] sm:$0xff]
  %v78 = vld [vmem:[%s0 + $0x38] sm:$0xf]
  %v79 = vld [vmem:[%s0 + $0x3c] sm:$0xff]
  %v80 = vld [vmem:[%s0 + $0x44] sm:$0xf]
  %v81 = vld [vmem:[%s0 + $0x48] sm:$0xff]
  %v82 = vld [vmem:[%s0 + $0x50] sm:$0xf]
  %v83 = vld [vmem:[%s0 + $0x54] sm:$0x33]
  %v84 = vld [vmem:[%s0 + $0x5c] sm:$0x3]
  %v101 = vunpack.c.l.b16 %v69
  %v102 = vunpack.c.h.b16 %v69
  %v103 = vunpack.c.l.b16 %v70
  %v104 = vunpack.c.l.b16 %v71
  %v105 = vunpack.c.h.b16 %v71
  %v106 = vunpack.c.l.b16 %v72
  %v107 = vunpack.c.l.b16 %v73
  %v108 = vunpack.c.h.b16 %v73
  %v109 = vunpack.c.l.b16 %v74
  %v110 = vunpack.c.l.b16 %v75
  %v111 = vunpack.c.h.b16 %v75
  %v112 = vunpack.c.l.b16 %v76
  %v113 = vunpack.c.l.b16 %v77
  %v114 = vunpack.c.h.b16 %v77
  %v115 = vunpack.c.l.b16 %v78
  %v116 = vunpack.c.l.b16 %v79
  %v117 = vunpack.c.h.b16 %v79
  %v118 = vunpack.c.l.b16 %v80
  %v119 = vunpack.c.l.b16 %v81
  %v120 = vunpack.c.h.b16 %v81
  %v121 = vunpack.c.l.b16 %v82
  %v122 = vunpack.c.l.b16 %v83
  %v123 = vunpack.c.h.b16 %v83
  %v124 = vunpack.c.l.b16 %v84
  %v125 = vpack.c.b16 %v104, %v101
  %v126 = vpack.c.b16 %v105, %v102
  %v127 = vpack.c.b16 %v106, %v103
  %v128 = vpack.c.b16 %v110, %v107
  %v129 = vpack.c.b16 %v111, %v108
  %v130 = vpack.c.b16 %v112, %v109
  %v131 = vpack.c.b16 %v116, %v113
  %v132 = vpack.c.b16 %v117, %v114
  %v133 = vpack.c.b16 %v118, %v115
  %v134 = vpack.c.b16 %v122, %v119
  %v135 = vpack.c.b16 %v123, %v120
  %v136 = vpack.c.b16 %v124, %v121
  %v197 = vunpack.c.l.b16 %v21
  %v198 = vunpack.c.l.b16 %v22
  %v199 = vunpack.c.l.b16 %v23
  %v200 = vunpack.c.l.b16 %v24
  %v201 = vunpack.c.l.b16 %v25
  %v202 = vunpack.c.l.b16 %v26
  %v203 = vunpack.c.l.b16 %v27
  %v204 = vunpack.c.l.b16 %v28
  %v205 = vunpack.c.l.b16 %v29
  %v206 = vunpack.c.l.b16 %v30
  %v207 = vunpack.c.l.b16 %v31
  %v208 = vunpack.c.l.b16 %v32
  %v209 = vunpack.c.l.b16 %v33
  %v210 = vunpack.c.l.b16 %v34
  %v211 = vunpack.c.l.b16 %v35
  %v212 = vunpack.c.l.b16 %v36
  %v213 = vunpack.c.l.b16 %v37
  %v214 = vunpack.c.l.b16 %v38
  %v215 = vunpack.c.l.b16 %v39
  %v216 = vunpack.c.l.b16 %v40
  %v217 = vunpack.c.l.b16 %v41
  %v218 = vunpack.c.l.b16 %v42
  %v219 = vunpack.c.l.b16 %v43
  %v220 = vunpack.c.l.b16 %v44
  %v221 = vunpack.c.l.b16 %v45
  %v222 = vunpack.c.l.b16 %v46
  %v223 = vunpack.c.l.b16 %v47
  %v224 = vunpack.c.l.b16 %v48
  %v225 = vunpack.c.l.b16 %v49
  %v226 = vunpack.c.l.b16 %v50
  %v227 = vunpack.c.l.b16 %v51
  %v228 = vunpack.c.l.b16 %v52
  %v229 = vunpack.c.l.b16 %v53
  %v230 = vunpack.c.l.b16 %v54
  %v231 = vunpack.c.l.b16 %v55
  %v232 = vunpack.c.l.b16 %v56
  %v233 = vunpack.c.l.b16 %v57
  %v234 = vunpack.c.l.b16 %v58
  %v235 = vunpack.c.l.b16 %v59
  %v236 = vunpack.c.l.b16 %v60
  %v237 = vunpack.c.l.b16 %v61
  %v238 = vunpack.c.l.b16 %v62
  %v239 = vunpack.c.l.b16 %v63
  %v240 = vunpack.c.l.b16 %v64
  %v241 = vunpack.c.l.b16 %v65
  %v242 = vunpack.c.l.b16 %v66
  %v243 = vunpack.c.l.b16 %v67
  %v244 = vunpack.c.l.b16 %v68
  %v245 = vpack.c.b16 %v198, %v197
  %v246 = vpack.c.b16 %v200, %v199
  %v247 = vpack.c.b16 %v202, %v201
  %v248 = vpack.c.b16 %v204, %v203
  %v249 = vpack.c.b16 %v206, %v205
  %v250 = vpack.c.b16 %v208, %v207
  %v251 = vpack.c.b16 %v210, %v209
  %v252 = vpack.c.b16 %v212, %v211
  %v253 = vpack.c.b16 %v214, %v213
  %v254 = vpack.c.b16 %v216, %v215
  %v255 = vpack.c.b16 %v218, %v217
  %v256 = vpack.c.b16 %v220, %v219
  %v257 = vpack.c.b16 %v222, %v221
  %v258 = vpack.c.b16 %v224, %v223
  %v259 = vpack.c.b16 %v226, %v225
  %v260 = vpack.c.b16 %v228, %v227
  %v261 = vpack.c.b16 %v230, %v229
  %v262 = vpack.c.b16 %v232, %v231
  %v263 = vpack.c.b16 %v234, %v233
  %v264 = vpack.c.b16 %v236, %v235
  %v265 = vpack.c.b16 %v238, %v237
  %v266 = vpack.c.b16 %v240, %v239
  %v267 = vpack.c.b16 %v242, %v241
  %v268 = vpack.c.b16 %v244, %v243
  %293 = vmatprep.subr.bf16.mxu0 0
  %294 = vmatpush1.bf16.msra.mxu0 %v245
  %295 = vmatprep.subr.bf16.mxu0 0
  %296 = vmatpush1.bf16.msra.mxu0 %v246
  %297 = vmatprep.subr.bf16.mxu0 0
  %298 = vmatpush1.bf16.msra.mxu0 %v247
  %299 = vmatprep.subr.bf16.mxu0 0
  %300 = vmatpush1.bf16.msra.mxu0 %v248
  %301 = vmatprep.subr.bf16.mxu0 0
  %302 = vmatpush1.bf16.msra.mxu0 %v249
  %303 = vmatprep.subr.bf16.mxu0 0
  %304 = vmatpush1.bf16.msra.mxu0 %v250
  %305 = vmatprep.subr.bf16.mxu0 0
  %306 = vmatpush1.bf16.msra.mxu0 %v251
  %307 = vmatprep.subr.bf16.mxu0 0
  %308 = vmatpush1.bf16.msra.mxu0 %v252
  %309 = vmatprep.subr.bf16.mxu0 0
  %310 = vmatpush1.bf16.msra.mxu0 %v253
  %311 = vmatprep.subr.bf16.mxu0 0
  %312 = vmatpush1.bf16.msra.mxu0 %v254
  %313 = vmatprep.subr.bf16.mxu0 0
  %314 = vmatpush1.bf16.msra.mxu0 %v255
  %315 = vmatprep.subr.bf16.mxu0 0
  %316 = vmatpush1.bf16.msra.mxu0 %v256
  %317 = vmatprep.subr.bf16.mxu0 0
  %318 = vmatpush1.bf16.msra.mxu0 %v257
  %319 = vmatprep.subr.bf16.mxu0 0
  %320 = vmatpush1.bf16.msra.mxu0 %v258
  %321 = vmatprep.subr.bf16.mxu0 0
  %322 = vmatpush1.bf16.msra.mxu0 %v259
  %323 = vmatprep.subr.bf16.mxu0 0
  %324 = vmatpush1.bf16.msra.mxu0 %v260
  %325 = vmatprep.mubr.bf16.mxu0 %v126
  %326 = vmatmul.mubr.bf16.gmra.mrb[0].mxu0 %v125
  %v327 = vpop.f32.mrb[0].mxu0
  %v328 = vadd.f32 0.0, %v327
  %v329 = vpop.f32.mrb[0].mxu0
  %v330 = vpop.f32.mrb[0].mxu0
  %v331 = vadd.f32 0.0, %v330
  %v332 = vpop.f32.mrb[0].mxu0
  %333 = vmatprep.mubr.bf16.mxu0 %v129
  %334 = vmatmul.mubr.bf16.gmra.mrb[0].mxu0 %v128
  %v335 = vpop.f32.mrb[0].mxu0
  %v336 = vadd.f32 0.0, %v335
  %v337 = vpop.f32.mrb[0].mxu0
  %v338 = vpop.f32.mrb[0].mxu0
  %v339 = vadd.f32 0.0, %v338
  %v340 = vpop.f32.mrb[0].mxu0
  %341 = vmatprep.mubr.bf16.mxu0 %v132
  %342 = vmatmul.mubr.bf16.gmra.mrb[0].mxu0 %v131
  %v343 = vpop.f32.mrb[0].mxu0
  %v344 = vadd.f32 0.0, %v343
  %v345 = vpop.f32.mrb[0].mxu0
  %v346 = vpop.f32.mrb[0].mxu0
  %v347 = vadd.f32 0.0, %v346
  %v348 = vpop.f32.mrb[0].mxu0
  %349 = vmatprep.mubr.bf16.mxu0 %v135
  %350 = vmatmul.mubr.bf16.gmra.mrb[0].mxu0 %v134
  %v351 = vpop.f32.mrb[0].mxu0
  %v352 = vadd.f32 0.0, %v351
  %v353 = vpop.f32.mrb[0].mxu0
  %v354 = vpop.f32.mrb[0].mxu0
  %v355 = vadd.f32 0.0, %v354
  %v356 = vpop.f32.mrb[0].mxu0
  %357 = vdwg.mxu0
  %358 = vmatprep.subr.bf16.mxu0 0
  %359 = vmatpush1.bf16.msra.mxu0 %v261
  %360 = vmatprep.subr.bf16.mxu0 0
  %361 = vmatpush1.bf16.msra.mxu0 %v262
  %362 = vmatprep.subr.bf16.mxu0 0
  %363 = vmatpush1.bf16.msra.mxu0 %v263
  %364 = vmatprep.subr.bf16.mxu0 0
  %365 = vmatpush1.bf16.msra.mxu0 %v264
  %366 = vmatprep.subr.bf16.mxu0 0
  %367 = vmatpush1.bf16.msra.mxu0 %v265
  %368 = vmatprep.subr.bf16.mxu0 0
  %369 = vmatpush1.bf16.msra.mxu0 %v266
  %370 = vmatprep.subr.bf16.mxu0 0
  %371 = vmatpush1.bf16.msra.mxu0 %v267
  %372 = vmatprep.subr.bf16.mxu0 0
  %373 = vmatpush1.bf16.msra.mxu0 %v268
  %374 = vmatprep.subr.bf16.mxu0 0
  %375 = vmatpush1.bf16.msra.mxu0 0
  %376 = vmatprep.subr.bf16.mxu0 0
  %377 = vmatpush1.bf16.msra.mxu0 0
  %378 = vmatprep.subr.bf16.mxu0 0
  %379 = vmatpush1.bf16.msra.mxu0 0
  %380 = vmatprep.subr.bf16.mxu0 0
  %381 = vmatpush1.bf16.msra.mxu0 0
  %382 = vmatprep.subr.bf16.mxu0 0
  %383 = vmatpush1.bf16.msra.mxu0 0
  %384 = vmatprep.subr.bf16.mxu0 0
  %385 = vmatpush1.bf16.msra.mxu0 0
  %386 = vmatprep.subr.bf16.mxu0 0
  %387 = vmatpush1.bf16.msra.mxu0 0
  %388 = vmatprep.subr.bf16.mxu0 0
  %389 = vmatpush1.bf16.msra.mxu0 0
  %390 = vmatprep.mubr.bf16.mxu0 0
  %391 = vmatmul.mubr.bf16.gmra.mrb[0].mxu0 %v127
  %v392 = vpop.f32.mrb[0].mxu0
  %v393 = vadd.f32 %v328, %v392
  %v394 = vpop.f32.mrb[0].mxu0
  %v395 = vpop.f32.mrb[0].mxu0
  %v396 = vadd.f32 %v331, %v395
  %v397 = vpop.f32.mrb[0].mxu0
  %398 = vmatprep.mubr.bf16.mxu0 0
  %399 = vmatmul.mubr.bf16.gmra.mrb[0].mxu0 %v130
  %v400 = vpop.f32.mrb[0].mxu0
  %v401 = vadd.f32 %v336, %v400
  %v402 = vpop.f32.mrb[0].mxu0
  %v403 = vpop.f32.mrb[0].mxu0
  %v404 = vadd.f32 %v339, %v403
  %v405 = vpop.f32.mrb[0].mxu0
  %406 = vmatprep.mubr.bf16.mxu0 0
  %407 = vmatmul.mubr.bf16.gmra.mrb[0].mxu0 %v133
  %v408 = vpop.f32.mrb[0].mxu0
  %v409 = vadd.f32 %v344, %v408
  %v410 = vpop.f32.mrb[0].mxu0
  %v411 = vpop.f32.mrb[0].mxu0
  %v412 = vadd.f32 %v347, %v411
  %v413 = vpop.f32.mrb[0].mxu0
  %414 = vmatprep.mubr.bf16.mxu0 0
  %415 = vmatmul.mubr.bf16.gmra.mrb[0].mxu0 %v136
  %v416 = vpop.f32.mrb[0].mxu0
  %v417 = vadd.f32 %v352, %v416
  %v418 = vpop.f32.mrb[0].mxu0
  %v419 = vpop.f32.mrb[0].mxu0
  %v420 = vadd.f32 %v355, %v419
  %v421 = vpop.f32.mrb[0].mxu0
  %422 = vdwg.mxu0
  %s423 = scalar_lea.vmem %s0, 96
  %v424 = vld [vmem:[%s423] sm:$0xff]
  %v425 = vld [vmem:[%s423 + $0x8] sm:$0xf]
  %v426 = vld [vmem:[%s423 + $0xc] sm:$0xff]
  %v427 = vld [vmem:[%s423 + $0x14] sm:$0xf]
  %v428 = vld [vmem:[%s423 + $0x18] sm:$0xff]
  %v429 = vld [vmem:[%s423 + $0x20] sm:$0xf]
  %v430 = vld [vmem:[%s423 + $0x24] sm:$0xff]
  %v431 = vld [vmem:[%s423 + $0x2c] sm:$0xf]
  %v432 = vld [vmem:[%s423 + $0x30] sm:$0xff]
  %v433 = vld [vmem:[%s423 + $0x38] sm:$0xf]
  %v434 = vld [vmem:[%s423 + $0x3c] sm:$0xff]
  %v435 = vld [vmem:[%s423 + $0x44] sm:$0xf]
  %v436 = vld [vmem:[%s423 + $0x48] sm:$0xff]
  %v437 = vld [vmem:[%s423 + $0x50] sm:$0xf]
  %v438 = vld [vmem:[%s423 + $0x54] sm:$0x33]
  %v439 = vld [vmem:[%s423 + $0x5c] sm:$0x3]
  %v456 = vunpack.c.l.b16 %v424
  %v457 = vunpack.c.h.b16 %v424
  %v458 = vunpack.c.l.b16 %v425
  %v459 = vunpack.c.l.b16 %v426
  %v460 = vunpack.c.h.b16 %v426
  %v461 = vunpack.c.l.b16 %v427
  %v462 = vunpack.c.l.b16 %v428
  %v463 = vunpack.c.h.b16 %v428
  %v464 = vunpack.c.l.b16 %v429
  %v465 = vunpack.c.l.b16 %v430
  %v466 = vunpack.c.h.b16 %v430
  %v467 = vunpack.c.l.b16 %v431
  %v468 = vunpack.c.l.b16 %v432
  %v469 = vunpack.c.h.b16 %v432
  %v470 = vunpack.c.l.b16 %v433
  %v471 = vunpack.c.l.b16 %v434
  %v472 = vunpack.c.h.b16 %v434
  %v473 = vunpack.c.l.b16 %v435
  %v474 = vunpack.c.l.b16 %v436
  %v475 = vunpack.c.h.b16 %v436
  %v476 = vunpack.c.l.b16 %v437
  %v477 = vunpack.c.l.b16 %v438
  %v478 = vunpack.c.h.b16 %v438
  %v479 = vunpack.c.l.b16 %v439
  %v480 = vpack.c.b16 %v459, %v456
  %v481 = vpack.c.b16 %v460, %v457
  %v482 = vpack.c.b16 %v461, %v458
  %v483 = vpack.c.b16 %v465, %v462
  %v484 = vpack.c.b16 %v466, %v463
  %v485 = vpack.c.b16 %v467, %v464
  %v486 = vpack.c.b16 %v471, %v468
  %v487 = vpack.c.b16 %v472, %v469
  %v488 = vpack.c.b16 %v473, %v470
  %v489 = vpack.c.b16 %v477, %v474
  %v490 = vpack.c.b16 %v478, %v475
  %v491 = vpack.c.b16 %v479, %v476
  %504 = vmatprep.subr.bf16.mxu0 0
  %505 = vmatpush1.bf16.msra.mxu0 %v245
  %506 = vmatprep.subr.bf16.mxu0 0
  %507 = vmatpush1.bf16.msra.mxu0 %v246
  %508 = vmatprep.subr.bf16.mxu0 0
  %509 = vmatpush1.bf16.msra.mxu0 %v247
  %510 = vmatprep.subr.bf16.mxu0 0
  %511 = vmatpush1.bf16.msra.mxu0 %v248
  %512 = vmatprep.subr.bf16.mxu0 0
  %513 = vmatpush1.bf16.msra.mxu0 %v249
  %514 = vmatprep.subr.bf16.mxu0 0
  %515 = vmatpush1.bf16.msra.mxu0 %v250
  %516 = vmatprep.subr.bf16.mxu0 0
  %517 = vmatpush1.bf16.msra.mxu0 %v251
  %518 = vmatprep.subr.bf16.mxu0 0
  %519 = vmatpush1.bf16.msra.mxu0 %v252
  %520 = vmatprep.subr.bf16.mxu0 0
  %521 = vmatpush1.bf16.msra.mxu0 %v253
  %522 = vmatprep.subr.bf16.mxu0 0
  %523 = vmatpush1.bf16.msra.mxu0 %v254
  %524 = vmatprep.subr.bf16.mxu0 0
  %525 = vmatpush1.bf16.msra.mxu0 %v255
  %526 = vmatprep.subr.bf16.mxu0 0
  %527 = vmatpush1.bf16.msra.mxu0 %v256
  %528 = vmatprep.subr.bf16.mxu0 0
  %529 = vmatpush1.bf16.msra.mxu0 %v257
  %530 = vmatprep.subr.bf16.mxu0 0
  %531 = vmatpush1.bf16.msra.mxu0 %v258
  %532 = vmatprep.subr.bf16.mxu0 0
  %533 = vmatpush1.bf16.msra.mxu0 %v259
  %534 = vmatprep.subr.bf16.mxu0 0
  %535 = vmatpush1.bf16.msra.mxu0 %v260
  %536 = vmatprep.mubr.bf16.mxu0 %v481
  %537 = vmatmul.mubr.bf16.gmra.mrb[0].mxu0 %v480
  %v538 = vpop.f32.mrb[0].mxu0
  %v539 = vadd.f32 0.0, %v538
  %v540 = vpop.f32.mrb[0].mxu0
  %v541 = vpop.f32.mrb[0].mxu0
  %v542 = vadd.f32 0.0, %v541
  %v543 = vpop.f32.mrb[0].mxu0
  %544 = vmatprep.mubr.bf16.mxu0 %v484
  %545 = vmatmul.mubr.bf16.gmra.mrb[0].mxu0 %v483
  %v546 = vpop.f32.mrb[0].mxu0
  %v547 = vadd.f32 0.0, %v546
  %v548 = vpop.f32.mrb[0].mxu0
  %v549 = vpop.f32.mrb[0].mxu0
  %v550 = vadd.f32 0.0, %v549
  %v551 = vpop.f32.mrb[0].mxu0
  %552 = vmatprep.mubr.bf16.mxu0 %v487
  %553 = vmatmul.mubr.bf16.gmra.mrb[0].mxu0 %v486
  %v554 = vpop.f32.mrb[0].mxu0
  %v555 = vadd.f32 0.0, %v554
  %v556 = vpop.f32.mrb[0].mxu0
  %v557 = vpop.f32.mrb[0].mxu0
  %v558 = vadd.f32 0.0, %v557
  %v559 = vpop.f32.mrb[0].mxu0
  %560 = vmatprep.mubr.bf16.mxu0 %v490
  %561 = vmatmul.mubr.bf16.gmra.mrb[0].mxu0 %v489
  %v562 = vpop.f32.mrb[0].mxu0
  %v563 = vadd.f32 0.0, %v562
  %v564 = vpop.f32.mrb[0].mxu0
  %v565 = vpop.f32.mrb[0].mxu0
  %v566 = vadd.f32 0.0, %v565
  %v567 = vpop.f32.mrb[0].mxu0
  %568 = vdwg.mxu0
  %569 = vmatprep.subr.bf16.mxu0 0
  %570 = vmatpush1.bf16.msra.mxu0 %v261
  %571 = vmatprep.subr.bf16.mxu0 0
  %572 = vmatpush1.bf16.msra.mxu0 %v262
  %573 = vmatprep.subr.bf16.mxu0 0
  %574 = vmatpush1.bf16.msra.mxu0 %v263
  %575 = vmatprep.subr.bf16.mxu0 0
  %576 = vmatpush1.bf16.msra.mxu0 %v264
  %577 = vmatprep.subr.bf16.mxu0 0
  %578 = vmatpush1.bf16.msra.mxu0 %v265
  %579 = vmatprep.subr.bf16.mxu0 0
  %580 = vmatpush1.bf16.msra.mxu0 %v266
  %581 = vmatprep.subr.bf16.mxu0 0
  %582 = vmatpush1.bf16.msra.mxu0 %v267
  %583 = vmatprep.subr.bf16.mxu0 0
  %584 = vmatpush1.bf16.msra.mxu0 %v268
  %585 = vmatprep.subr.bf16.mxu0 0
  %586 = vmatpush1.bf16.msra.mxu0 0
  %587 = vmatprep.subr.bf16.mxu0 0
  %588 = vmatpush1.bf16.msra.mxu0 0
  %589 = vmatprep.subr.bf16.mxu0 0
  %590 = vmatpush1.bf16.msra.mxu0 0
  %591 = vmatprep.subr.bf16.mxu0 0
  %592 = vmatpush1.bf16.msra.mxu0 0
  %593 = vmatprep.subr.bf16.mxu0 0
  %594 = vmatpush1.bf16.msra.mxu0 0
  %595 = vmatprep.subr.bf16.mxu0 0
  %596 = vmatpush1.bf16.msra.mxu0 0
  %597 = vmatprep.subr.bf16.mxu0 0
  %598 = vmatpush1.bf16.msra.mxu0 0
  %599 = vmatprep.subr.bf16.mxu0 0
  %600 = vmatpush1.bf16.msra.mxu0 0
  %601 = vmatprep.mubr.bf16.mxu0 0
  %602 = vmatmul.mubr.bf16.gmra.mrb[0].mxu0 %v482
  %v603 = vpop.f32.mrb[0].mxu0
  %v604 = vadd.f32 %v539, %v603
  %v605 = vpop.f32.mrb[0].mxu0
  %v606 = vpop.f32.mrb[0].mxu0
  %v607 = vadd.f32 %v542, %v606
  %v608 = vpop.f32.mrb[0].mxu0
  %609 = vmatprep.mubr.bf16.mxu0 0
  %610 = vmatmul.mubr.bf16.gmra.mrb[0].mxu0 %v485
  %v611 = vpop.f32.mrb[0].mxu0
  %v612 = vadd.f32 %v547, %v611
  %v613 = vpop.f32.mrb[0].mxu0
  %v614 = vpop.f32.mrb[0].mxu0
  %v615 = vadd.f32 %v550, %v614
  %v616 = vpop.f32.mrb[0].mxu0
  %617 = vmatprep.mubr.bf16.mxu0 0
  %618 = vmatmul.mubr.bf16.gmra.mrb[0].mxu0 %v488
  %v619 = vpop.f32.mrb[0].mxu0
  %v620 = vadd.f32 %v555, %v619
  %v621 = vpop.f32.mrb[0].mxu0
  %v622 = vpop.f32.mrb[0].mxu0
  %v623 = vadd.f32 %v558, %v622
  %v624 = vpop.f32.mrb[0].mxu0
  %625 = vmatprep.mubr.bf16.mxu0 0
  %626 = vmatmul.mubr.bf16.gmra.mrb[0].mxu0 %v491
  %v627 = vpop.f32.mrb[0].mxu0
  %v628 = vadd.f32 %v563, %v627
  %v629 = vpop.f32.mrb[0].mxu0
  %v630 = vpop.f32.mrb[0].mxu0
  %v631 = vadd.f32 %v566, %v630
  %v632 = vpop.f32.mrb[0].mxu0
  %633 = vdwg.mxu0
  %s634 = scalar_lea.vmem %s0, 192
  %v635 = vld [vmem:[%s634] sm:$0xff]
  %v636 = vld [vmem:[%s634 + $0x8] sm:$0xf]
  %v637 = vld [vmem:[%s634 + $0xc] sm:$0xff]
  %v638 = vld [vmem:[%s634 + $0x14] sm:$0xf]
  %v639 = vld [vmem:[%s634 + $0x18] sm:$0xff]
  %v640 = vld [vmem:[%s634 + $0x20] sm:$0xf]
  %v641 = vld [vmem:[%s634 + $0x24] sm:$0xff]
  %v642 = vld [vmem:[%s634 + $0x2c] sm:$0xf]
  %v643 = vld [vmem:[%s634 + $0x30] sm:$0xff]
  %v644 = vld [vmem:[%s634 + $0x38] sm:$0xf]
  %v645 = vld [vmem:[%s634 + $0x3c] sm:$0xff]
  %v646 = vld [vmem:[%s634 + $0x44] sm:$0xf]
  %v647 = vld [vmem:[%s634 + $0x48] sm:$0xff]
  %v648 = vld [vmem:[%s634 + $0x50] sm:$0xf]
  %v649 = vld [vmem:[%s634 + $0x54] sm:$0x33]
  %v650 = vld [vmem:[%s634 + $0x5c] sm:$0x3]
  %v667 = vunpack.c.l.b16 %v635
  %v668 = vunpack.c.h.b16 %v635
  %v669 = vunpack.c.l.b16 %v636
  %v670 = vunpack.c.l.b16 %v637
  %v671 = vunpack.c.h.b16 %v637
  %v672 = vunpack.c.l.b16 %v638
  %v673 = vunpack.c.l.b16 %v639
  %v674 = vunpack.c.h.b16 %v639
  %v675 = vunpack.c.l.b16 %v640
  %v676 = vunpack.c.l.b16 %v641
  %v677 = vunpack.c.h.b16 %v641
  %v678 = vunpack.c.l.b16 %v642
  %v679 = vunpack.c.l.b16 %v643
  %v680 = vunpack.c.h.b16 %v643
  %v681 = vunpack.c.l.b16 %v644
  %v682 = vunpack.c.l.b16 %v645
  %v683 = vunpack.c.h.b16 %v645
  %v684 = vunpack.c.l.b16 %v646
  %v685 = vunpack.c.l.b16 %v647
  %v686 = vunpack.c.h.b16 %v647
  %v687 = vunpack.c.l.b16 %v648
  %v688 = vunpack.c.l.b16 %v649
  %v689 = vunpack.c.h.b16 %v649
  %v690 = vunpack.c.l.b16 %v650
  %v691 = vpack.c.b16 %v670, %v667
  %v692 = vpack.c.b16 %v671, %v668
  %v693 = vpack.c.b16 %v672, %v669
  %v694 = vpack.c.b16 %v676, %v673
  %v695 = vpack.c.b16 %v677, %v674
  %v696 = vpack.c.b16 %v678, %v675
  %v697 = vpack.c.b16 %v682, %v679
  %v698 = vpack.c.b16 %v683, %v680
  %v699 = vpack.c.b16 %v684, %v681
  %v700 = vpack.c.b16 %v688, %v685
  %v701 = vpack.c.b16 %v689, %v686
  %v702 = vpack.c.b16 %v690, %v687
  %715 = vmatprep.subr.bf16.mxu0 0
  %716 = vmatpush1.bf16.msra.mxu0 %v245
  %717 = vmatprep.subr.bf16.mxu0 0
  %718 = vmatpush1.bf16.msra.mxu0 %v246
  %719 = vmatprep.subr.bf16.mxu0 0
  %720 = vmatpush1.bf16.msra.mxu0 %v247
  %721 = vmatprep.subr.bf16.mxu0 0
  %722 = vmatpush1.bf16.msra.mxu0 %v248
  %723 = vmatprep.subr.bf16.mxu0 0
  %724 = vmatpush1.bf16.msra.mxu0 %v249
  %725 = vmatprep.subr.bf16.mxu0 0
  %726 = vmatpush1.bf16.msra.mxu0 %v250
  %727 = vmatprep.subr.bf16.mxu0 0
  %728 = vmatpush1.bf16.msra.mxu0 %v251
  %729 = vmatprep.subr.bf16.mxu0 0
  %730 = vmatpush1.bf16.msra.mxu0 %v252
  %731 = vmatprep.subr.bf16.mxu0 0
  %732 = vmatpush1.bf16.msra.mxu0 %v253
  %733 = vmatprep.subr.bf16.mxu0 0
  %734 = vmatpush1.bf16.msra.mxu0 %v254
  %735 = vmatprep.subr.bf16.mxu0 0
  %736 = vmatpush1.bf16.msra.mxu0 %v255
  %737 = vmatprep.subr.bf16.mxu0 0
  %738 = vmatpush1.bf16.msra.mxu0 %v256
  %739 = vmatprep.subr.bf16.mxu0 0
  %740 = vmatpush1.bf16.msra.mxu0 %v257
  %741 = vmatprep.subr.bf16.mxu0 0
  %742 = vmatpush1.bf16.msra.mxu0 %v258
  %743 = vmatprep.subr.bf16.mxu0 0
  %744 = vmatpush1.bf16.msra.mxu0 %v259
  %745 = vmatprep.subr.bf16.mxu0 0
  %746 = vmatpush1.bf16.msra.mxu0 %v260
  %747 = vmatprep.mubr.bf16.mxu0 %v692
  %748 = vmatmul.mubr.bf16.gmra.mrb[0].mxu0 %v691
  %v749 = vpop.f32.mrb[0].mxu0
  %v750 = vadd.f32 0.0, %v749
  %v751 = vpop.f32.mrb[0].mxu0
  %v752 = vpop.f32.mrb[0].mxu0
  %v753 = vadd.f32 0.0, %v752
  %v754 = vpop.f32.mrb[0].mxu0
  %755 = vmatprep.mubr.bf16.mxu0 %v695
  %756 = vmatmul.mubr.bf16.gmra.mrb[0].mxu0 %v694
  %v757 = vpop.f32.mrb[0].mxu0
  %v758 = vadd.f32 0.0, %v757
  %v759 = vpop.f32.mrb[0].mxu0
  %v760 = vpop.f32.mrb[0].mxu0
  %v761 = vadd.f32 0.0, %v760
  %v762 = vpop.f32.mrb[0].mxu0
  %763 = vmatprep.mubr.bf16.mxu0 %v698
  %764 = vmatmul.mubr.bf16.gmra.mrb[0].mxu0 %v697
  %v765 = vpop.f32.mrb[0].mxu0
  %v766 = vadd.f32 0.0, %v765
  %v767 = vpop.f32.mrb[0].mxu0
  %v768 = vpop.f32.mrb[0].mxu0
  %v769 = vadd.f32 0.0, %v768
  %v770 = vpop.f32.mrb[0].mxu0
  %771 = vmatprep.mubr.bf16.mxu0 %v701
  %772 = vmatmul.mubr.bf16.gmra.mrb[0].mxu0 %v700
  %v773 = vpop.f32.mrb[0].mxu0
  %v774 = vadd.f32 0.0, %v773
  %v775 = vpop.f32.mrb[0].mxu0
  %v776 = vpop.f32.mrb[0].mxu0
  %v777 = vadd.f32 0.0, %v776
  %v778 = vpop.f32.mrb[0].mxu0
  %779 = vdwg.mxu0
  %780 = vmatprep.subr.bf16.mxu0 0
  %781 = vmatpush1.bf16.msra.mxu0 %v261
  %782 = vmatprep.subr.bf16.mxu0 0
  %783 = vmatpush1.bf16.msra.mxu0 %v262
  %784 = vmatprep.subr.bf16.mxu0 0
  %785 = vmatpush1.bf16.msra.mxu0 %v263
  %786 = vmatprep.subr.bf16.mxu0 0
  %787 = vmatpush1.bf16.msra.mxu0 %v264
  %788 = vmatprep.subr.bf16.mxu0 0
  %789 = vmatpush1.bf16.msra.mxu0 %v265
  %790 = vmatprep.subr.bf16.mxu0 0
  %791 = vmatpush1.bf16.msra.mxu0 %v266
  %792 = vmatprep.subr.bf16.mxu0 0
  %793 = vmatpush1.bf16.msra.mxu0 %v267
  %794 = vmatprep.subr.bf16.mxu0 0
  %795 = vmatpush1.bf16.msra.mxu0 %v268
  %796 = vmatprep.subr.bf16.mxu0 0
  %797 = vmatpush1.bf16.msra.mxu0 0
  %798 = vmatprep.subr.bf16.mxu0 0
  %799 = vmatpush1.bf16.msra.mxu0 0
  %800 = vmatprep.subr.bf16.mxu0 0
  %801 = vmatpush1.bf16.msra.mxu0 0
  %802 = vmatprep.subr.bf16.mxu0 0
  %803 = vmatpush1.bf16.msra.mxu0 0
  %804 = vmatprep.subr.bf16.mxu0 0
  %805 = vmatpush1.bf16.msra.mxu0 0
  %806 = vmatprep.subr.bf16.mxu0 0
  %807 = vmatpush1.bf16.msra.mxu0 0
  %808 = vmatprep.subr.bf16.mxu0 0
  %809 = vmatpush1.bf16.msra.mxu0 0
  %810 = vmatprep.subr.bf16.mxu0 0
  %811 = vmatpush1.bf16.msra.mxu0 0
  %812 = vmatprep.mubr.bf16.mxu0 0
  %813 = vmatmul.mubr.bf16.gmra.mrb[0].mxu0 %v693
  %v814 = vpop.f32.mrb[0].mxu0
  %v815 = vadd.f32 %v750, %v814
  %v816 = vpop.f32.mrb[0].mxu0
  %v817 = vpop.f32.mrb[0].mxu0
  %v818 = vadd.f32 %v753, %v817
  %v819 = vpop.f32.mrb[0].mxu0
  %820 = vmatprep.mubr.bf16.mxu0 0
  %821 = vmatmul.mubr.bf16.gmra.mrb[0].mxu0 %v696
  %v822 = vpop.f32.mrb[0].mxu0
  %v823 = vadd.f32 %v758, %v822
  %v824 = vpop.f32.mrb[0].mxu0
  %v825 = vpop.f32.mrb[0].mxu0
  %v826 = vadd.f32 %v761, %v825
  %v827 = vpop.f32.mrb[0].mxu0
  %828 = vmatprep.mubr.bf16.mxu0 0
  %829 = vmatmul.mubr.bf16.gmra.mrb[0].mxu0 %v699
  %v830 = vpop.f32.mrb[0].mxu0
  %v831 = vadd.f32 %v766, %v830
  %v832 = vpop.f32.mrb[0].mxu0
  %v833 = vpop.f32.mrb[0].mxu0
  %v834 = vadd.f32 %v769, %v833
  %v835 = vpop.f32.mrb[0].mxu0
  %836 = vmatprep.mubr.bf16.mxu0 0
  %837 = vmatmul.mubr.bf16.gmra.mrb[0].mxu0 %v702
  %v838 = vpop.f32.mrb[0].mxu0
  %v839 = vadd.f32 %v774, %v838
  %v840 = vpop.f32.mrb[0].mxu0
  %v841 = vpop.f32.mrb[0].mxu0
  %v842 = vadd.f32 %v777, %v841
  %v843 = vpop.f32.mrb[0].mxu0
  %844 = vdwg.mxu0
  %s845 = scalar_lea.vmem %s0, 288
  %v846 = vld [vmem:[%s845] sm:$0xff]
  %v847 = vld [vmem:[%s845 + $0x8] sm:$0xf]
  %v848 = vld [vmem:[%s845 + $0xc] sm:$0xff]
  %v849 = vld [vmem:[%s845 + $0x14] sm:$0xf]
  %v850 = vld [vmem:[%s845 + $0x18] sm:$0xff]
  %v851 = vld [vmem:[%s845 + $0x20] sm:$0xf]
  %v852 = vld [vmem:[%s845 + $0x24] sm:$0xff]
  %v853 = vld [vmem:[%s845 + $0x2c] sm:$0xf]
  %v854 = vld [vmem:[%s845 + $0x30] sm:$0xff]
  %v855 = vld [vmem:[%s845 + $0x38] sm:$0xf]
  %v856 = vld [vmem:[%s845 + $0x3c] sm:$0xff]
  %v857 = vld [vmem:[%s845 + $0x44] sm:$0xf]
  %v858 = vld [vmem:[%s845 + $0x48] sm:$0xff]
  %v859 = vld [vmem:[%s845 + $0x50] sm:$0xf]
  %v860 = vld [vmem:[%s845 + $0x54] sm:$0x33]
  %v861 = vld [vmem:[%s845 + $0x5c] sm:$0x3]
  %v878 = vunpack.c.l.b16 %v846
  %v879 = vunpack.c.h.b16 %v846
  %v880 = vunpack.c.l.b16 %v847
  %v881 = vunpack.c.l.b16 %v848
  %v882 = vunpack.c.h.b16 %v848
  %v883 = vunpack.c.l.b16 %v849
  %v884 = vunpack.c.l.b16 %v850
  %v885 = vunpack.c.h.b16 %v850
  %v886 = vunpack.c.l.b16 %v851
  %v887 = vunpack.c.l.b16 %v852
  %v888 = vunpack.c.h.b16 %v852
  %v889 = vunpack.c.l.b16 %v853
  %v890 = vunpack.c.l.b16 %v854
  %v891 = vunpack.c.h.b16 %v854
  %v892 = vunpack.c.l.b16 %v855
  %v893 = vunpack.c.l.b16 %v856
  %v894 = vunpack.c.h.b16 %v856
  %v895 = vunpack.c.l.b16 %v857
  %v896 = vunpack.c.l.b16 %v858
  %v897 = vunpack.c.h.b16 %v858
  %v898 = vunpack.c.l.b16 %v859
  %v899 = vunpack.c.l.b16 %v860
  %v900 = vunpack.c.h.b16 %v860
  %v901 = vunpack.c.l.b16 %v861
  %v902 = vpack.c.b16 %v881, %v878
  %v903 = vpack.c.b16 %v882, %v879
  %v904 = vpack.c.b16 %v883, %v880
  %v905 = vpack.c.b16 %v887, %v884
  %v906 = vpack.c.b16 %v888, %v885
  %v907 = vpack.c.b16 %v889, %v886
  %v908 = vpack.c.b16 %v893, %v890
  %v909 = vpack.c.b16 %v894, %v891
  %v910 = vpack.c.b16 %v895, %v892
  %v911 = vpack.c.b16 %v899, %v896
  %v912 = vpack.c.b16 %v900, %v897
  %v913 = vpack.c.b16 %v901, %v898
  %926 = vmatprep.subr.bf16.mxu0 0
  %927 = vmatpush1.bf16.msra.mxu0 %v245
  %928 = vmatprep.subr.bf16.mxu0 0
  %929 = vmatpush1.bf16.msra.mxu0 %v246
  %930 = vmatprep.subr.bf16.mxu0 0
  %931 = vmatpush1.bf16.msra.mxu0 %v247
  %932 = vmatprep.subr.bf16.mxu0 0
  %933 = vmatpush1.bf16.msra.mxu0 %v248
  %934 = vmatprep.subr.bf16.mxu0 0
  %935 = vmatpush1.bf16.msra.mxu0 %v249
  %936 = vmatprep.subr.bf16.mxu0 0
  %937 = vmatpush1.bf16.msra.mxu0 %v250
  %938 = vmatprep.subr.bf16.mxu0 0
  %939 = vmatpush1.bf16.msra.mxu0 %v251
  %940 = vmatprep.subr.bf16.mxu0 0
  %941 = vmatpush1.bf16.msra.mxu0 %v252
  %942 = vmatprep.subr.bf16.mxu0 0
  %943 = vmatpush1.bf16.msra.mxu0 %v253
  %944 = vmatprep.subr.bf16.mxu0 0
  %945 = vmatpush1.bf16.msra.mxu0 %v254
  %946 = vmatprep.subr.bf16.mxu0 0
  %947 = vmatpush1.bf16.msra.mxu0 %v255
  %948 = vmatprep.subr.bf16.mxu0 0
  %949 = vmatpush1.bf16.msra.mxu0 %v256
  %950 = vmatprep.subr.bf16.mxu0 0
  %951 = vmatpush1.bf16.msra.mxu0 %v257
  %952 = vmatprep.subr.bf16.mxu0 0
  %953 = vmatpush1.bf16.msra.mxu0 %v258
  %954 = vmatprep.subr.bf16.mxu0 0
  %955 = vmatpush1.bf16.msra.mxu0 %v259
  %956 = vmatprep.subr.bf16.mxu0 0
  %957 = vmatpush1.bf16.msra.mxu0 %v260
  %958 = vmatprep.mubr.bf16.mxu0 %v903
  %959 = vmatmul.mubr.bf16.gmra.mrb[0].mxu0 %v902
  %v960 = vpop.f32.mrb[0].mxu0
  %v961 = vadd.f32 0.0, %v960
  %v962 = vpop.f32.mrb[0].mxu0
  %v963 = vpop.f32.mrb[0].mxu0
  %v964 = vadd.f32 0.0, %v963
  %v965 = vpop.f32.mrb[0].mxu0
  %966 = vmatprep.mubr.bf16.mxu0 %v906
  %967 = vmatmul.mubr.bf16.gmra.mrb[0].mxu0 %v905
  %v968 = vpop.f32.mrb[0].mxu0
  %v969 = vadd.f32 0.0, %v968
  %v970 = vpop.f32.mrb[0].mxu0
  %v971 = vpop.f32.mrb[0].mxu0
  %v972 = vadd.f32 0.0, %v971
  %v973 = vpop.f32.mrb[0].mxu0
  %974 = vmatprep.mubr.bf16.mxu0 %v909
  %975 = vmatmul.mubr.bf16.gmra.mrb[0].mxu0 %v908
  %v976 = vpop.f32.mrb[0].mxu0
  %v977 = vadd.f32 0.0, %v976
  %v978 = vpop.f32.mrb[0].mxu0
  %v979 = vpop.f32.mrb[0].mxu0
  %v980 = vadd.f32 0.0, %v979
  %v981 = vpop.f32.mrb[0].mxu0
  %982 = vmatprep.mubr.bf16.mxu0 %v912
  %983 = vmatmul.mubr.bf16.gmra.mrb[0].mxu0 %v911
  %v984 = vpop.f32.mrb[0].mxu0
  %v985 = vadd.f32 0.0, %v984
  %v986 = vpop.f32.mrb[0].mxu0
  %v987 = vpop.f32.mrb[0].mxu0
  %v988 = vadd.f32 0.0, %v987
  %v989 = vpop.f32.mrb[0].mxu0
  %990 = vdwg.mxu0
  %991 = vmatprep.subr.bf16.mxu0 0
  %992 = vmatpush1.bf16.msra.mxu0 %v261
  %993 = vmatprep.subr.bf16.mxu0 0
  %994 = vmatpush1.bf16.msra.mxu0 %v262
  %995 = vmatprep.subr.bf16.mxu0 0
  %996 = vmatpush1.bf16.msra.mxu0 %v263
  %997 = vmatprep.subr.bf16.mxu0 0
  %998 = vmatpush1.bf16.msra.mxu0 %v264
  %999 = vmatprep.subr.bf16.mxu0 0
  %1000 = vmatpush1.bf16.msra.mxu0 %v265
  %1001 = vmatprep.subr.bf16.mxu0 0
  %1002 = vmatpush1.bf16.msra.mxu0 %v266
  %1003 = vmatprep.subr.bf16.mxu0 0
  %1004 = vmatpush1.bf16.msra.mxu0 %v267
  %1005 = vmatprep.subr.bf16.mxu0 0
  %1006 = vmatpush1.bf16.msra.mxu0 %v268
  %1007 = vmatprep.subr.bf16.mxu0 0
  %1008 = vmatpush1.bf16.msra.mxu0 0
  %1009 = vmatprep.subr.bf16.mxu0 0
  %1010 = vmatpush1.bf16.msra.mxu0 0
  %1011 = vmatprep.subr.bf16.mxu0 0
  %1012 = vmatpush1.bf16.msra.mxu0 0
  %1013 = vmatprep.subr.bf16.mxu0 0
  %1014 = vmatpush1.bf16.msra.mxu0 0
  %1015 = vmatprep.subr.bf16.mxu0 0
  %1016 = vmatpush1.bf16.msra.mxu0 0
  %1017 = vmatprep.subr.bf16.mxu0 0
  %1018 = vmatpush1.bf16.msra.mxu0 0
  %1019 = vmatprep.subr.bf16.mxu0 0
  %1020 = vmatpush1.bf16.msra.mxu0 0
  %1021 = vmatprep.subr.bf16.mxu0 0
  %1022 = vmatpush1.bf16.msra.mxu0 0
  %1023 = vmatprep.mubr.bf16.mxu0 0
  %1024 = vmatmul.mubr.bf16.gmra.mrb[0].mxu0 %v904
  %v1025 = vpop.f32.mrb[0].mxu0
  %v1026 = vadd.f32 %v961, %v1025
  %v1027 = vpop.f32.mrb[0].mxu0
  %v1028 = vpop.f32.mrb[0].mxu0
  %v1029 = vadd.f32 %v964, %v1028
  %v1030 = vpop.f32.mrb[0].mxu0
  %1031 = vmatprep.mubr.bf16.mxu0 0
  %1032 = vmatmul.mubr.bf16.gmra.mrb[0].mxu0 %v907
  %v1033 = vpop.f32.mrb[0].mxu0
  %v1034 = vadd.f32 %v969, %v1033
  %v1035 = vpop.f32.mrb[0].mxu0
  %v1036 = vpop.f32.mrb[0].mxu0
  %v1037 = vadd.f32 %v972, %v1036
  %v1038 = vpop.f32.mrb[0].mxu0
  %1039 = vmatprep.mubr.bf16.mxu0 0
  %1040 = vmatmul.mubr.bf16.gmra.mrb[0].mxu0 %v910
  %v1041 = vpop.f32.mrb[0].mxu0
  %v1042 = vadd.f32 %v977, %v1041
  %v1043 = vpop.f32.mrb[0].mxu0
  %v1044 = vpop.f32.mrb[0].mxu0
  %v1045 = vadd.f32 %v980, %v1044
  %v1046 = vpop.f32.mrb[0].mxu0
  %1047 = vmatprep.mubr.bf16.mxu0 0
  %1048 = vmatmul.mubr.bf16.gmra.mrb[0].mxu0 %v913
  %v1049 = vpop.f32.mrb[0].mxu0
  %v1050 = vadd.f32 %v985, %v1049
  %v1051 = vpop.f32.mrb[0].mxu0
  %v1052 = vpop.f32.mrb[0].mxu0
  %v1053 = vadd.f32 %v988, %v1052
  %v1054 = vpop.f32.mrb[0].mxu0
  %1055 = vdwg.mxu0
  %v1056 = vld [vmem:[%s1] sm:$0x3f]
  %v1058 = vcombine.high %v1056, %v1056
  %v1060 = vunpack.c.l.s4 1983009808
  %v1061 = vunpack.c.0.s8 %v1060
  %v1062 = vlaneseq
  %v1063 = vshrl.u32 %v1062, 7
  %v1064 = vsub.s32 %v1061, %v1063
  %v1065 = vrot.slane %v1056, %v1064
  %v1067 = vunpack.c.l.s4 1983009808
  %v1068 = vunpack.c.0.s8 %v1067
  %v1069 = vlaneseq
  %v1070 = vshrl.u32 %v1069, 7
  %v1071 = vsub.s32 %v1068, %v1070
  %v1072 = vrot.slane %v1058, %v1071
  %v1073 = vcombine.high %v1065, %v1065
  %1077 = vmatprep.subr.bf16.mxu0 0
  %1078 = vmatpush1.bf16.msra.mxu0 %v245
  %1079 = vmatprep.subr.bf16.mxu0 0
  %1080 = vmatpush1.bf16.msra.mxu0 %v246
  %1081 = vmatprep.subr.bf16.mxu0 0
  %1082 = vmatpush1.bf16.msra.mxu0 %v247
  %1083 = vmatprep.subr.bf16.mxu0 0
  %1084 = vmatpush1.bf16.msra.mxu0 %v248
  %1085 = vmatprep.subr.bf16.mxu0 0
  %1086 = vmatpush1.bf16.msra.mxu0 %v249
  %1087 = vmatprep.subr.bf16.mxu0 0
  %1088 = vmatpush1.bf16.msra.mxu0 %v250
  %1089 = vmatprep.subr.bf16.mxu0 0
  %1090 = vmatpush1.bf16.msra.mxu0 %v251
  %1091 = vmatprep.subr.bf16.mxu0 0
  %1092 = vmatpush1.bf16.msra.mxu0 %v252
  %1093 = vmatprep.subr.bf16.mxu0 0
  %1094 = vmatpush1.bf16.msra.mxu0 %v253
  %1095 = vmatprep.subr.bf16.mxu0 0
  %1096 = vmatpush1.bf16.msra.mxu0 %v254
  %1097 = vmatprep.subr.bf16.mxu0 0
  %1098 = vmatpush1.bf16.msra.mxu0 %v255
  %1099 = vmatprep.subr.bf16.mxu0 0
  %1100 = vmatpush1.bf16.msra.mxu0 %v256
  %1101 = vmatprep.subr.bf16.mxu0 0
  %1102 = vmatpush1.bf16.msra.mxu0 %v257
  %1103 = vmatprep.subr.bf16.mxu0 0
  %1104 = vmatpush1.bf16.msra.mxu0 %v258
  %1105 = vmatprep.subr.bf16.mxu0 0
  %1106 = vmatpush1.bf16.msra.mxu0 %v259
  %1107 = vmatprep.subr.bf16.mxu0 0
  %1108 = vmatpush1.bf16.msra.mxu0 %v260
  %1109 = vmatprep.mubr.bf16.mxu0 %v1073
  %1110 = vmatmul.mubr.bf16.gmra.mrb[0].mxu0 %v1065
  %v1111 = vpop.f32.mrb[0].mxu0
  %v1112 = vadd.f32 0.0, %v1111
  %v1113 = vpop.f32.mrb[0].mxu0
  %v1114 = vpop.f32.mrb[0].mxu0
  %v1115 = vpop.f32.mrb[0].mxu0
  %1116 = vdwg.mxu0
  %1117 = vmatprep.subr.bf16.mxu0 0
  %1118 = vmatpush1.bf16.msra.mxu0 %v261
  %1119 = vmatprep.subr.bf16.mxu0 0
  %1120 = vmatpush1.bf16.msra.mxu0 %v262
  %1121 = vmatprep.subr.bf16.mxu0 0
  %1122 = vmatpush1.bf16.msra.mxu0 %v263
  %1123 = vmatprep.subr.bf16.mxu0 0
  %1124 = vmatpush1.bf16.msra.mxu0 %v264
  %1125 = vmatprep.subr.bf16.mxu0 0
  %1126 = vmatpush1.bf16.msra.mxu0 %v265
  %1127 = vmatprep.subr.bf16.mxu0 0
  %1128 = vmatpush1.bf16.msra.mxu0 %v266
  %1129 = vmatprep.subr.bf16.mxu0 0
  %1130 = vmatpush1.bf16.msra.mxu0 %v267
  %1131 = vmatprep.subr.bf16.mxu0 0
  %1132 = vmatpush1.bf16.msra.mxu0 %v268
  %1133 = vmatprep.subr.bf16.mxu0 0
  %1134 = vmatpush1.bf16.msra.mxu0 0
  %1135 = vmatprep.subr.bf16.mxu0 0
  %1136 = vmatpush1.bf16.msra.mxu0 0
  %1137 = vmatprep.subr.bf16.mxu0 0
  %1138 = vmatpush1.bf16.msra.mxu0 0
  %1139 = vmatprep.subr.bf16.mxu0 0
  %1140 = vmatpush1.bf16.msra.mxu0 0
  %1141 = vmatprep.subr.bf16.mxu0 0
  %1142 = vmatpush1.bf16.msra.mxu0 0
  %1143 = vmatprep.subr.bf16.mxu0 0
  %1144 = vmatpush1.bf16.msra.mxu0 0
  %1145 = vmatprep.subr.bf16.mxu0 0
  %1146 = vmatpush1.bf16.msra.mxu0 0
  %1147 = vmatprep.subr.bf16.mxu0 0
  %1148 = vmatpush1.bf16.msra.mxu0 0
  %1149 = vmatprep.mubr.bf16.mxu0 0
  %1150 = vmatmul.mubr.bf16.gmra.mrb[0].mxu0 %v1072
  %v1151 = vpop.f32.mrb[0].mxu0
  %v1152 = vadd.f32 %v1112, %v1151
  %v1153 = vpop.f32.mrb[0].mxu0
  %v1154 = vpop.f32.mrb[0].mxu0
  %v1155 = vpop.f32.mrb[0].mxu0
  %1156 = vdwg.mxu0
  %v1157 = vadd.f32 %v393, %v396
  %v1158 = vadd.f32 %v1157, %v401
  %v1159 = vadd.f32 %v1158, %v404
  %v1160 = vadd.f32 %v1159, %v409
  %v1161 = vadd.f32 %v1160, %v412
  %v1162 = vadd.f32 %v1161, %v417
  %vm1163 = vcmask 1043456
  %v1164 = vsel %vm1163, %v420, 0.0
  %v1165 = vadd.f32 %v1162, %v1164
  %v1166 = vrot.slane %v1165, 4
  %v1167 = vadd.f32 %v1165, %v1166
  %v1168 = vrot.slane %v1167, 2
  %v1169 = vadd.f32 %v1167, %v1168
  %v1170 = vrot.slane %v1169, 1
  %v1171 = vadd.f32 %v1169, %v1170
  %v1172 = vadd.f32 %v604, %v607
  %v1173 = vadd.f32 %v1172, %v612
  %v1174 = vadd.f32 %v1173, %v615
  %v1175 = vadd.f32 %v1174, %v620
  %v1176 = vadd.f32 %v1175, %v623
  %v1177 = vadd.f32 %v1176, %v628
  %v1178 = vsel %vm1163, %v631, 0.0
  %v1179 = vadd.f32 %v1177, %v1178
  %v1180 = vrot.slane %v1179, 4
  %v1181 = vadd.f32 %v1179, %v1180
  %v1182 = vrot.slane %v1181, 2
  %v1183 = vadd.f32 %v1181, %v1182
  %v1184 = vrot.slane %v1183, 1
  %v1185 = vadd.f32 %v1183, %v1184
  %v1186 = vadd.f32 %v1171, %v1185
  %v1187 = vadd.f32 %v815, %v818
  %v1188 = vadd.f32 %v1187, %v823
  %v1189 = vadd.f32 %v1188, %v826
  %v1190 = vadd.f32 %v1189, %v831
  %v1191 = vadd.f32 %v1190, %v834
  %v1192 = vadd.f32 %v1191, %v839
  %v1193 = vsel %vm1163, %v842, 0.0
  %v1194 = vadd.f32 %v1192, %v1193
  %v1195 = vrot.slane %v1194, 4
  %v1196 = vadd.f32 %v1194, %v1195
  %v1197 = vrot.slane %v1196, 2
  %v1198 = vadd.f32 %v1196, %v1197
  %v1199 = vrot.slane %v1198, 1
  %v1200 = vadd.f32 %v1198, %v1199
  %v1201 = vadd.f32 %v1186, %v1200
  %v1202 = vadd.f32 %v1026, %v1029
  %v1203 = vadd.f32 %v1202, %v1034
  %v1204 = vadd.f32 %v1203, %v1037
  %v1205 = vadd.f32 %v1204, %v1042
  %v1206 = vadd.f32 %v1205, %v1045
  %v1207 = vadd.f32 %v1206, %v1050
  %v1208 = vsel %vm1163, %v1053, 0.0
  %v1209 = vadd.f32 %v1207, %v1208
  %v1210 = vrot.slane %v1209, 4
  %v1211 = vadd.f32 %v1209, %v1210
  %v1212 = vrot.slane %v1211, 2
  %v1213 = vadd.f32 %v1211, %v1212
  %v1214 = vrot.slane %v1213, 1
  %v1215 = vadd.f32 %v1213, %v1214
  %v1216 = vadd.f32 %v1201, %v1215
  %v1217 = vsel %vm1163, %v1152, 0.0
  %v1218 = vrot.slane %v1217, 4
  %v1219 = vadd.f32 %v1217, %v1218
  %v1220 = vrot.slane %v1219, 2
  %v1221 = vadd.f32 %v1219, %v1220
  %v1222 = vrot.slane %v1221, 1
  %v1223 = vadd.f32 %v1221, %v1222
  %v1224 = vadd.f32 %v1216, %v1223
  %v1225 = vmul.f32 %v1224, 0.0040983604
  %v1226 = vsub.f32 %v393, %v1225
  %v1227 = vsub.f32 %v396, %v1225
  %v1228 = vsub.f32 %v401, %v1225
  %v1229 = vsub.f32 %v404, %v1225
  %v1230 = vsub.f32 %v409, %v1225
  %v1231 = vsub.f32 %v412, %v1225
  %v1232 = vsub.f32 %v417, %v1225
  %v1233 = vsub.f32 %v420, %v1225
  %v1234 = vmul.f32 %v1226, %v1226
  %v1235 = vmul.f32 %v1227, %v1227
  %v1236 = vmul.f32 %v1228, %v1228
  %v1237 = vmul.f32 %v1229, %v1229
  %v1238 = vmul.f32 %v1230, %v1230
  %v1239 = vmul.f32 %v1231, %v1231
  %v1240 = vmul.f32 %v1232, %v1232
  %v1241 = vmul.f32 %v1233, %v1233
  %v1242 = vadd.f32 %v1234, %v1235
  %v1243 = vadd.f32 %v1242, %v1236
  %v1244 = vadd.f32 %v1243, %v1237
  %v1245 = vadd.f32 %v1244, %v1238
  %v1246 = vadd.f32 %v1245, %v1239
  %v1247 = vadd.f32 %v1246, %v1240
  %v1248 = vsel %vm1163, %v1241, 0.0
  %v1249 = vadd.f32 %v1247, %v1248
  %v1250 = vrot.slane %v1249, 4
  %v1251 = vadd.f32 %v1249, %v1250
  %v1252 = vrot.slane %v1251, 2
  %v1253 = vadd.f32 %v1251, %v1252
  %v1254 = vrot.slane %v1253, 1
  %v1255 = vadd.f32 %v1253, %v1254
  %v1256 = vsub.f32 %v604, %v1225
  %v1257 = vsub.f32 %v607, %v1225
  %v1258 = vsub.f32 %v612, %v1225
  %v1259 = vsub.f32 %v615, %v1225
  %v1260 = vsub.f32 %v620, %v1225
  %v1261 = vsub.f32 %v623, %v1225
  %v1262 = vsub.f32 %v628, %v1225
  %v1263 = vsub.f32 %v631, %v1225
  %v1264 = vmul.f32 %v1256, %v1256
  %v1265 = vmul.f32 %v1257, %v1257
  %v1266 = vmul.f32 %v1258, %v1258
  %v1267 = vmul.f32 %v1259, %v1259
  %v1268 = vmul.f32 %v1260, %v1260
  %v1269 = vmul.f32 %v1261, %v1261
  %v1270 = vmul.f32 %v1262, %v1262
  %v1271 = vmul.f32 %v1263, %v1263
  %v1272 = vadd.f32 %v1264, %v1265
  %v1273 = vadd.f32 %v1272, %v1266
  %v1274 = vadd.f32 %v1273, %v1267
  %v1275 = vadd.f32 %v1274, %v1268
  %v1276 = vadd.f32 %v1275, %v1269
  %v1277 = vadd.f32 %v1276, %v1270
  %v1278 = vsel %vm1163, %v1271, 0.0
  %v1279 = vadd.f32 %v1277, %v1278
  %v1280 = vrot.slane %v1279, 4
  %v1281 = vadd.f32 %v1279, %v1280
  %v1282 = vrot.slane %v1281, 2
  %v1283 = vadd.f32 %v1281, %v1282
  %v1284 = vrot.slane %v1283, 1
  %v1285 = vadd.f32 %v1283, %v1284
  %v1286 = vadd.f32 %v1255, %v1285
  %v1287 = vsub.f32 %v815, %v1225
  %v1288 = vsub.f32 %v818, %v1225
  %v1289 = vsub.f32 %v823, %v1225
  %v1290 = vsub.f32 %v826, %v1225
  %v1291 = vsub.f32 %v831, %v1225
  %v1292 = vsub.f32 %v834, %v1225
  %v1293 = vsub.f32 %v839, %v1225
  %v1294 = vsub.f32 %v842, %v1225
  %v1295 = vmul.f32 %v1287, %v1287
  %v1296 = vmul.f32 %v1288, %v1288
  %v1297 = vmul.f32 %v1289, %v1289
  %v1298 = vmul.f32 %v1290, %v1290
  %v1299 = vmul.f32 %v1291, %v1291
  %v1300 = vmul.f32 %v1292, %v1292
  %v1301 = vmul.f32 %v1293, %v1293
  %v1302 = vmul.f32 %v1294, %v1294
  %v1303 = vadd.f32 %v1295, %v1296
  %v1304 = vadd.f32 %v1303, %v1297
  %v1305 = vadd.f32 %v1304, %v1298
  %v1306 = vadd.f32 %v1305, %v1299
  %v1307 = vadd.f32 %v1306, %v1300
  %v1308 = vadd.f32 %v1307, %v1301
  %v1309 = vsel %vm1163, %v1302, 0.0
  %v1310 = vadd.f32 %v1308, %v1309
  %v1311 = vrot.slane %v1310, 4
  %v1312 = vadd.f32 %v1310, %v1311
  %v1313 = vrot.slane %v1312, 2
  %v1314 = vadd.f32 %v1312, %v1313
  %v1315 = vrot.slane %v1314, 1
  %v1316 = vadd.f32 %v1314, %v1315
  %v1317 = vadd.f32 %v1286, %v1316
  %v1318 = vsub.f32 %v1026, %v1225
  %v1319 = vsub.f32 %v1029, %v1225
  %v1320 = vsub.f32 %v1034, %v1225
  %v1321 = vsub.f32 %v1037, %v1225
  %v1322 = vsub.f32 %v1042, %v1225
  %v1323 = vsub.f32 %v1045, %v1225
  %v1324 = vsub.f32 %v1050, %v1225
  %v1325 = vsub.f32 %v1053, %v1225
  %v1326 = vmul.f32 %v1318, %v1318
  %v1327 = vmul.f32 %v1319, %v1319
  %v1328 = vmul.f32 %v1320, %v1320
  %v1329 = vmul.f32 %v1321, %v1321
  %v1330 = vmul.f32 %v1322, %v1322
  %v1331 = vmul.f32 %v1323, %v1323
  %v1332 = vmul.f32 %v1324, %v1324
  %v1333 = vmul.f32 %v1325, %v1325
  %v1334 = vadd.f32 %v1326, %v1327
  %v1335 = vadd.f32 %v1334, %v1328
  %v1336 = vadd.f32 %v1335, %v1329
  %v1337 = vadd.f32 %v1336, %v1330
  %v1338 = vadd.f32 %v1337, %v1331
  %v1339 = vadd.f32 %v1338, %v1332
  %v1340 = vsel %vm1163, %v1333, 0.0
  %v1341 = vadd.f32 %v1339, %v1340
  %v1342 = vrot.slane %v1341, 4
  %v1343 = vadd.f32 %v1341, %v1342
  %v1344 = vrot.slane %v1343, 2
  %v1345 = vadd.f32 %v1343, %v1344
  %v1346 = vrot.slane %v1345, 1
  %v1347 = vadd.f32 %v1345, %v1346
  %v1348 = vadd.f32 %v1317, %v1347
  %v1349 = vsub.f32 %v1152, %v1225
  %v1350 = vmul.f32 %v1349, %v1349
  %v1351 = vsel %vm1163, %v1350, 0.0
  %v1352 = vrot.slane %v1351, 4
  %v1353 = vadd.f32 %v1351, %v1352
  %v1354 = vrot.slane %v1353, 2
  %v1355 = vadd.f32 %v1353, %v1354
  %v1356 = vrot.slane %v1355, 1
  %v1357 = vadd.f32 %v1355, %v1356
  %v1358 = vadd.f32 %v1348, %v1357
  %v1359 = vmul.f32 %v1358, 0.0040983604
  %v1360 = vld [vmem:[%s3] sm:$0x1]
  %v1361 = vadd.f32 %v1359, 1e-05
  %v1362 = vrsqrt.pop %v1361
  %v1363 = vmul.f32 %v1360, %v1362
  %v1364 = vld [vmem:[%s4] sm:$0x1]
  %v1365 = vmul.f32 %v1225, %v1363
  %v1366 = vsub.f32 %v1364, %v1365
  %v1368 = vlaneseq
  %v1369 = vshrl.u32 %v1368, 7
  %v1370 = vsub.s32 0, %v1369
  %v1371 = vrot.slane %v1363, %v1370
  %v1373 = vmul.f32 %v393, %v1371
  %v1374 = vmul.f32 %v396, %v1371
  %v1375 = vmul.f32 %v401, %v1371
  %v1376 = vmul.f32 %v404, %v1371
  %v1377 = vmul.f32 %v409, %v1371
  %v1378 = vmul.f32 %v412, %v1371
  %v1379 = vmul.f32 %v417, %v1371
  %v1380 = vmul.f32 %v420, %v1371
  %v1382 = vlaneseq
  %v1383 = vshrl.u32 %v1382, 7
  %v1384 = vsub.s32 0, %v1383
  %v1385 = vrot.slane %v1366, %v1384
  %v1387 = vadd.f32 %v1373, %v1385
  %v1388 = vadd.f32 %v1374, %v1385
  %v1389 = vadd.f32 %v1375, %v1385
  %v1390 = vadd.f32 %v1376, %v1385
  %v1391 = vadd.f32 %v1377, %v1385
  %v1392 = vadd.f32 %v1378, %v1385
  %v1393 = vadd.f32 %v1379, %v1385
  %v1394 = vadd.f32 %v1380, %v1385
  %v1395 = vmax.f32 %v1387, 0.0
  %v1396 = vmax.f32 %v1388, 0.0
  %v1397 = vmax.f32 %v1389, 0.0
  %v1398 = vmax.f32 %v1390, 0.0
  %v1399 = vmax.f32 %v1391, 0.0
  %v1400 = vmax.f32 %v1392, 0.0
  %v1401 = vmax.f32 %v1393, 0.0
  %v1402 = vmax.f32 %v1394, 0.0
  %v1403 = vmul.f32 %v604, %v1371
  %v1404 = vmul.f32 %v607, %v1371
  %v1405 = vmul.f32 %v612, %v1371
  %v1406 = vmul.f32 %v615, %v1371
  %v1407 = vmul.f32 %v620, %v1371
  %v1408 = vmul.f32 %v623, %v1371
  %v1409 = vmul.f32 %v628, %v1371
  %v1410 = vmul.f32 %v631, %v1371
  %v1411 = vadd.f32 %v1403, %v1385
  %v1412 = vadd.f32 %v1404, %v1385
  %v1413 = vadd.f32 %v1405, %v1385
  %v1414 = vadd.f32 %v1406, %v1385
  %v1415 = vadd.f32 %v1407, %v1385
  %v1416 = vadd.f32 %v1408, %v1385
  %v1417 = vadd.f32 %v1409, %v1385
  %v1418 = vadd.f32 %v1410, %v1385
  %v1419 = vmax.f32 %v1411, 0.0
  %v1420 = vmax.f32 %v1412, 0.0
  %v1421 = vmax.f32 %v1413, 0.0
  %v1422 = vmax.f32 %v1414, 0.0
  %v1423 = vmax.f32 %v1415, 0.0
  %v1424 = vmax.f32 %v1416, 0.0
  %v1425 = vmax.f32 %v1417, 0.0
  %v1426 = vmax.f32 %v1418, 0.0
  %v1427 = vmul.f32 %v815, %v1371
  %v1428 = vmul.f32 %v818, %v1371
  %v1429 = vmul.f32 %v823, %v1371
  %v1430 = vmul.f32 %v826, %v1371
  %v1431 = vmul.f32 %v831, %v1371
  %v1432 = vmul.f32 %v834, %v1371
  %v1433 = vmul.f32 %v839, %v1371
  %v1434 = vmul.f32 %v842, %v1371
  %v1435 = vadd.f32 %v1427, %v1385
  %v1436 = vadd.f32 %v1428, %v1385
  %v1437 = vadd.f32 %v1429, %v1385
  %v1438 = vadd.f32 %v1430, %v1385
  %v1439 = vadd.f32 %v1431, %v1385
  %v1440 = vadd.f32 %v1432, %v1385
  %v1441 = vadd.f32 %v1433, %v1385
  %v1442 = vadd.f32 %v1434, %v1385
  %v1443 = vmax.f32 %v1435, 0.0
  %v1444 = vmax.f32 %v1436, 0.0
  %v1445 = vmax.f32 %v1437, 0.0
  %v1446 = vmax.f32 %v1438, 0.0
  %v1447 = vmax.f32 %v1439, 0.0
  %v1448 = vmax.f32 %v1440, 0.0
  %v1449 = vmax.f32 %v1441, 0.0
  %v1450 = vmax.f32 %v1442, 0.0
  %v1451 = vmul.f32 %v1026, %v1371
  %v1452 = vmul.f32 %v1029, %v1371
  %v1453 = vmul.f32 %v1034, %v1371
  %v1454 = vmul.f32 %v1037, %v1371
  %v1455 = vmul.f32 %v1042, %v1371
  %v1456 = vmul.f32 %v1045, %v1371
  %v1457 = vmul.f32 %v1050, %v1371
  %v1458 = vmul.f32 %v1053, %v1371
  %v1459 = vadd.f32 %v1451, %v1385
  %v1460 = vadd.f32 %v1452, %v1385
  %v1461 = vadd.f32 %v1453, %v1385
  %v1462 = vadd.f32 %v1454, %v1385
  %v1463 = vadd.f32 %v1455, %v1385
  %v1464 = vadd.f32 %v1456, %v1385
  %v1465 = vadd.f32 %v1457, %v1385
  %v1466 = vadd.f32 %v1458, %v1385
  %v1467 = vmax.f32 %v1459, 0.0
  %v1468 = vmax.f32 %v1460, 0.0
  %v1469 = vmax.f32 %v1461, 0.0
  %v1470 = vmax.f32 %v1462, 0.0
  %v1471 = vmax.f32 %v1463, 0.0
  %v1472 = vmax.f32 %v1464, 0.0
  %v1473 = vmax.f32 %v1465, 0.0
  %v1474 = vmax.f32 %v1466, 0.0
  %v1475 = vmax.f32 %v1395, %v1419
  %v1476 = vmax.f32 %v1396, %v1420
  %v1477 = vmax.f32 %v1397, %v1421
  %v1478 = vmax.f32 %v1398, %v1422
  %v1479 = vmax.f32 %v1399, %v1423
  %v1480 = vmax.f32 %v1400, %v1424
  %v1481 = vmax.f32 %v1401, %v1425
  %v1482 = vmax.f32 %v1402, %v1426
  %v1483 = vmax.f32 %v1443, %v1467
  %v1484 = vmax.f32 %v1444, %v1468
  %v1485 = vmax.f32 %v1445, %v1469
  %v1486 = vmax.f32 %v1446, %v1470
  %v1487 = vmax.f32 %v1447, %v1471
  %v1488 = vmax.f32 %v1448, %v1472
  %v1489 = vmax.f32 %v1449, %v1473
  %v1490 = vmax.f32 %v1450, %v1474
  %v1491 = vmax.f32 %v1475, %v1483
  %v1492 = vmax.f32 %v1476, %v1484
  %v1493 = vmax.f32 %v1477, %v1485
  %v1494 = vmax.f32 %v1478, %v1486
  %v1495 = vmax.f32 %v1479, %v1487
  %v1496 = vmax.f32 %v1480, %v1488
  %v1497 = vmax.f32 %v1481, %v1489
  %v1498 = vmax.f32 %v1482, %v1490
  %v1499 = vpack.c.bf16 %v1492, %v1491
  %v1500 = vpack.c.bf16 %v1494, %v1493
  %v1501 = vpack.c.bf16 %v1496, %v1495
  %v1502 = vpack.c.bf16 %v1498, %v1497
  %v1507 = vunpack.c.l.b16 %v1499
  %v1508 = vunpack.c.h.b16 %v1499
  %v1509 = vunpack.c.l.b16 %v1500
  %v1510 = vunpack.c.h.b16 %v1500
  %v1511 = vunpack.c.l.b16 %v1501
  %v1512 = vunpack.c.h.b16 %v1501
  %v1513 = vunpack.c.l.b16 %v1502
  %v1514 = vunpack.c.h.b16 %v1502
  %v1515 = vpack.c.b16 %v1507, %v1507
  %v1516 = vpack.c.b16 %v1508, %v1508
  %v1517 = vpack.c.b16 %v1509, %v1509
  %v1518 = vpack.c.b16 %v1510, %v1510
  %v1519 = vpack.c.b16 %v1511, %v1511
  %v1520 = vpack.c.b16 %v1512, %v1512
  %v1521 = vpack.c.b16 %v1513, %v1513
  %v1522 = vpack.c.b16 %v1514, %v1514
  %1531 = vst [vmem:[%s5] sm:$0xf] %v1515
  %1532 = vst [vmem:[%s5 + $0x4] sm:$0xf] %v1516
  %1533 = vst [vmem:[%s5 + $0x8] sm:$0xf] %v1517
  %1534 = vst [vmem:[%s5 + $0xc] sm:$0xf] %v1518
  %1535 = vst [vmem:[%s5 + $0x10] sm:$0xf] %v1519
  %1536 = vst [vmem:[%s5 + $0x14] sm:$0xf] %v1520
  %1537 = vst [vmem:[%s5 + $0x18] sm:$0xf] %v1521
  %1538 = vst [vmem:[%s5 + $0x1c] sm:$0x3] %v1522
  // Predicated region
  $region22: #{m5_forward.5} parent=0 // pred_check
    _
  $region23: #{m5_forward.5} parent=0 // pred_check_branch
    %1540 = sbr.rel (0) target = $region25
  $region24: #{m5_forward.5} parent=0 // pred_region
    _
  $region25: #{m5_forward.5} parent=0 // pred_fallthru
    _
  // Predicated region
  $region26: #{m5_forward.5} parent=0 // pred_check
    _
  $region27: #{m5_forward.5} parent=0 // pred_check_branch
    %1542 = sbr.rel (0) target = $region29
  $region28: #{m5_forward.5} parent=0 // pred_region
    _
  $region29: #{m5_forward.5} parent=0 // pred_fallthru
    _

// kernel: m5_forward.6
$region0: #{m5_forward.6}
  #allocation0 [shape = 'u32[]', space=smem, size = 0x4, offset = 0x4, fixed_abs, tag = 'smem constant byte address 0x4 - core index']
  #allocation1 [shape = 'u32[144,128]{1,0:T(1,128)}', space=vmem, size = 0x12000, scoped, tag = 'internal scratch']
  %s0 = inlined_call_operand.vmem [shape: bf16[4,14,384], index: 0, kind: input, shape index: {}]
  %s1 = inlined_call_operand.vmem [shape: bf16[384,128], index: 1, kind: input, shape index: {}]
  %s2 = inlined_call_operand.vmem [shape: f32[1,128], index: 2, kind: input, shape index: {}]
  %s3 = inlined_call_operand.vmem [shape: f32[1,128], index: 3, kind: input, shape index: {}]
  %s4 = inlined_call_operand.vmem [shape: bf16[14,128], index: 4, kind: output, shape index: {}]
  %s5 = sld [smem:[#allocation0]]
  $region26: #{m5_forward.6} parent=0
    _
  %s7 = ssub.s32 1, %s5
  %s8 = scalar_select 0, %s7, %s5
  // Predicated region
  $region2: #{m5_forward.6} parent=0 // pred_check
    _
  $region3: #{m5_forward.6} parent=0 // pred_check_branch
    %10 = sbr.rel (0) target = $region5
  $region4: #{m5_forward.6} parent=0 // pred_region
    _
  $region5: #{m5_forward.6} parent=0 // pred_fallthru
    _
  // Predicated region
  $region6: #{m5_forward.6} parent=0 // pred_check
    _
  $region7: #{m5_forward.6} parent=0 // pred_check_branch
    %12 = sbr.rel (0) target = $region9
  $region8: #{m5_forward.6} parent=0 // pred_region
    _
  $region9: #{m5_forward.6} parent=0 // pred_fallthru
    _
  // Predicated region
  $region10: #{m5_forward.6} parent=0 // pred_check
    _
  $region11: #{m5_forward.6} parent=0 // pred_check_branch
    %14 = sbr.rel (0) target = $region13
  $region12: #{m5_forward.6} parent=0 // pred_region
    _
  $region13: #{m5_forward.6} parent=0 // pred_fallthru
    _
  // Predicated region
  $region14: #{m5_forward.6} parent=0 // pred_check
    _
  $region15: #{m5_forward.6} parent=0 // pred_check_branch
    %16 = sbr.rel (0) target = $region17
  $region16: #{m5_forward.6} parent=0 // pred_region
    _
  $region17: #{m5_forward.6} parent=0 // pred_fallthru
    _
  %v18 = vld [vmem:[%s1] sm:$0xf]
  %v19 = vld [vmem:[%s1 + $0x4] sm:$0xf]
  %v20 = vld [vmem:[%s1 + $0x8] sm:$0xf]
  %v21 = vld [vmem:[%s1 + $0xc] sm:$0xf]
  %v22 = vld [vmem:[%s1 + $0x10] sm:$0xf]
  %v23 = vld [vmem:[%s1 + $0x14] sm:$0xf]
  %v24 = vld [vmem:[%s1 + $0x18] sm:$0xf]
  %v25 = vld [vmem:[%s1 + $0x1c] sm:$0xf]
  %v26 = vld [vmem:[%s1 + $0x20] sm:$0xf]
  %v27 = vld [vmem:[%s1 + $0x24] sm:$0xf]
  %v28 = vld [vmem:[%s1 + $0x28] sm:$0xf]
  %v29 = vld [vmem:[%s1 + $0x2c] sm:$0xf]
  %v30 = vld [vmem:[%s1 + $0x30] sm:$0xf]
  %v31 = vld [vmem:[%s1 + $0x34] sm:$0xf]
  %v32 = vld [vmem:[%s1 + $0x38] sm:$0xf]
  %v33 = vld [vmem:[%s1 + $0x3c] sm:$0xf]
  %v34 = vld [vmem:[%s1 + $0x40] sm:$0xf]
  %v35 = vld [vmem:[%s1 + $0x44] sm:$0xf]
  %v36 = vld [vmem:[%s1 + $0x48] sm:$0xf]
  %v37 = vld [vmem:[%s1 + $0x4c] sm:$0xf]
  %v38 = vld [vmem:[%s1 + $0x50] sm:$0xf]
  %v39 = vld [vmem:[%s1 + $0x54] sm:$0xf]
  %v40 = vld [vmem:[%s1 + $0x58] sm:$0xf]
  %v41 = vld [vmem:[%s1 + $0x5c] sm:$0xf]
  %v42 = vld [vmem:[%s1 + $0x60] sm:$0xf]
  %v43 = vld [vmem:[%s1 + $0x64] sm:$0xf]
  %v44 = vld [vmem:[%s1 + $0x68] sm:$0xf]
  %v45 = vld [vmem:[%s1 + $0x6c] sm:$0xf]
  %v46 = vld [vmem:[%s1 + $0x70] sm:$0xf]
  %v47 = vld [vmem:[%s1 + $0x74] sm:$0xf]
  %v48 = vld [vmem:[%s1 + $0x78] sm:$0xf]
  %v49 = vld [vmem:[%s1 + $0x7c] sm:$0xf]
  %v50 = vld [vmem:[%s1 + $0x80] sm:$0xf]
  %v51 = vld [vmem:[%s1 + $0x84] sm:$0xf]
  %v52 = vld [vmem:[%s1 + $0x88] sm:$0xf]
  %v53 = vld [vmem:[%s1 + $0x8c] sm:$0xf]
  %v54 = vld [vmem:[%s1 + $0x90] sm:$0xf]
  %v55 = vld [vmem:[%s1 + $0x94] sm:$0xf]
  %v56 = vld [vmem:[%s1 + $0x98] sm:$0xf]
  %v57 = vld [vmem:[%s1 + $0x9c] sm:$0xf]
  %v58 = vld [vmem:[%s1 + $0xa0] sm:$0xf]
  %v59 = vld [vmem:[%s1 + $0xa4] sm:$0xf]
  %v60 = vld [vmem:[%s1 + $0xa8] sm:$0xf]
  %v61 = vld [vmem:[%s1 + $0xac] sm:$0xf]
  %v62 = vld [vmem:[%s1 + $0xb0] sm:$0xf]
  %v63 = vld [vmem:[%s1 + $0xb4] sm:$0xf]
  %v64 = vld [vmem:[%s1 + $0xb8] sm:$0xf]
  %v65 = vld [vmem:[%s1 + $0xbc] sm:$0xf]
  %v66 = vld [vmem:[%s0] sm:$0xff]
  %v67 = vld [vmem:[%s0 + $0x8] sm:$0xf]
  %v68 = vld [vmem:[%s0 + $0xc] sm:$0x77]
  %v69 = vld [vmem:[%s0 + $0x14] sm:$0x7]
  %v74 = vunpack.c.l.b16 %v66
  %v75 = vunpack.c.h.b16 %v66
  %v76 = vunpack.c.l.b16 %v67
  %v77 = vunpack.c.l.b16 %v68
  %v78 = vunpack.c.h.b16 %v68
  %v79 = vunpack.c.l.b16 %v69
  %v80 = vpack.c.b16 %v77, %v74
  %v81 = vpack.c.b16 %v78, %v75
  %v82 = vpack.c.b16 %v79, %v76
  %v134 = vunpack.c.l.b16 %v18
  %v135 = vunpack.c.l.b16 %v19
  %v136 = vunpack.c.l.b16 %v20
  %v137 = vunpack.c.l.b16 %v21
  %v138 = vunpack.c.l.b16 %v22
  %v139 = vunpack.c.l.b16 %v23
  %v140 = vunpack.c.l.b16 %v24
  %v141 = vunpack.c.l.b16 %v25
  %v142 = vunpack.c.l.b16 %v26
  %v143 = vunpack.c.l.b16 %v27
  %v144 = vunpack.c.l.b16 %v28
  %v145 = vunpack.c.l.b16 %v29
  %v146 = vunpack.c.l.b16 %v30
  %v147 = vunpack.c.l.b16 %v31
  %v148 = vunpack.c.l.b16 %v32
  %v149 = vunpack.c.l.b16 %v33
  %v150 = vunpack.c.l.b16 %v34
  %v151 = vunpack.c.l.b16 %v35
  %v152 = vunpack.c.l.b16 %v36
  %v153 = vunpack.c.l.b16 %v37
  %v154 = vunpack.c.l.b16 %v38
  %v155 = vunpack.c.l.b16 %v39
  %v156 = vunpack.c.l.b16 %v40
  %v157 = vunpack.c.l.b16 %v41
  %v158 = vunpack.c.l.b16 %v42
  %v159 = vunpack.c.l.b16 %v43
  %v160 = vunpack.c.l.b16 %v44
  %v161 = vunpack.c.l.b16 %v45
  %v162 = vunpack.c.l.b16 %v46
  %v163 = vunpack.c.l.b16 %v47
  %v164 = vunpack.c.l.b16 %v48
  %v165 = vunpack.c.l.b16 %v49
  %v166 = vunpack.c.l.b16 %v50
  %v167 = vunpack.c.l.b16 %v51
  %v168 = vunpack.c.l.b16 %v52
  %v169 = vunpack.c.l.b16 %v53
  %v170 = vunpack.c.l.b16 %v54
  %v171 = vunpack.c.l.b16 %v55
  %v172 = vunpack.c.l.b16 %v56
  %v173 = vunpack.c.l.b16 %v57
  %v174 = vunpack.c.l.b16 %v58
  %v175 = vunpack.c.l.b16 %v59
  %v176 = vunpack.c.l.b16 %v60
  %v177 = vunpack.c.l.b16 %v61
  %v178 = vunpack.c.l.b16 %v62
  %v179 = vunpack.c.l.b16 %v63
  %v180 = vunpack.c.l.b16 %v64
  %v181 = vunpack.c.l.b16 %v65
  %v182 = vpack.c.b16 %v135, %v134
  %v183 = vpack.c.b16 %v137, %v136
  %v184 = vpack.c.b16 %v139, %v138
  %v185 = vpack.c.b16 %v141, %v140
  %v186 = vpack.c.b16 %v143, %v142
  %v187 = vpack.c.b16 %v145, %v144
  %v188 = vpack.c.b16 %v147, %v146
  %v189 = vpack.c.b16 %v149, %v148
  %v190 = vpack.c.b16 %v151, %v150
  %v191 = vpack.c.b16 %v153, %v152
  %v192 = vpack.c.b16 %v155, %v154
  %v193 = vpack.c.b16 %v157, %v156
  %v194 = vpack.c.b16 %v159, %v158
  %v195 = vpack.c.b16 %v161, %v160
  %v196 = vpack.c.b16 %v163, %v162
  %v197 = vpack.c.b16 %v165, %v164
  %v198 = vpack.c.b16 %v167, %v166
  %v199 = vpack.c.b16 %v169, %v168
  %v200 = vpack.c.b16 %v171, %v170
  %v201 = vpack.c.b16 %v173, %v172
  %v202 = vpack.c.b16 %v175, %v174
  %v203 = vpack.c.b16 %v177, %v176
  %v204 = vpack.c.b16 %v179, %v178
  %v205 = vpack.c.b16 %v181, %v180
  %230 = vmatprep.subr.bf16.mxu0 0
  %231 = vmatpush1.bf16.msra.mxu0 %v182
  %232 = vmatprep.subr.bf16.mxu0 0
  %233 = vmatpush1.bf16.msra.mxu0 %v183
  %234 = vmatprep.subr.bf16.mxu0 0
  %235 = vmatpush1.bf16.msra.mxu0 %v184
  %236 = vmatprep.subr.bf16.mxu0 0
  %237 = vmatpush1.bf16.msra.mxu0 %v185
  %238 = vmatprep.subr.bf16.mxu0 0
  %239 = vmatpush1.bf16.msra.mxu0 %v186
  %240 = vmatprep.subr.bf16.mxu0 0
  %241 = vmatpush1.bf16.msra.mxu0 %v187
  %242 = vmatprep.subr.bf16.mxu0 0
  %243 = vmatpush1.bf16.msra.mxu0 %v188
  %244 = vmatprep.subr.bf16.mxu0 0
  %245 = vmatpush1.bf16.msra.mxu0 %v189
  %246 = vmatprep.subr.bf16.mxu0 0
  %247 = vmatpush1.bf16.msra.mxu0 %v190
  %248 = vmatprep.subr.bf16.mxu0 0
  %249 = vmatpush1.bf16.msra.mxu0 %v191
  %250 = vmatprep.subr.bf16.mxu0 0
  %251 = vmatpush1.bf16.msra.mxu0 %v192
  %252 = vmatprep.subr.bf16.mxu0 0
  %253 = vmatpush1.bf16.msra.mxu0 %v193
  %254 = vmatprep.subr.bf16.mxu0 0
  %255 = vmatpush1.bf16.msra.mxu0 %v194
  %256 = vmatprep.subr.bf16.mxu0 0
  %257 = vmatpush1.bf16.msra.mxu0 %v195
  %258 = vmatprep.subr.bf16.mxu0 0
  %259 = vmatpush1.bf16.msra.mxu0 %v196
  %260 = vmatprep.subr.bf16.mxu0 0
  %261 = vmatpush1.bf16.msra.mxu0 %v197
  %262 = vmatprep.mubr.bf16.mxu0 %v81
  %263 = vmatmul.mubr.bf16.gmra.mrb[0].mxu0 %v80
  %v264 = vpop.f32.mrb[0].mxu0
  %v265 = vadd.f32 0.0, %v264
  %v266 = vpop.f32.mrb[0].mxu0
  %v267 = vpop.f32.mrb[0].mxu0
  %v268 = vadd.f32 0.0, %v267
  %v269 = vpop.f32.mrb[0].mxu0
  %270 = vdwg.mxu0
  %271 = vmatprep.subr.bf16.mxu0 0
  %272 = vmatpush1.bf16.msra.mxu0 %v198
  %273 = vmatprep.subr.bf16.mxu0 0
  %274 = vmatpush1.bf16.msra.mxu0 %v199
  %275 = vmatprep.subr.bf16.mxu0 0
  %276 = vmatpush1.bf16.msra.mxu0 %v200
  %277 = vmatprep.subr.bf16.mxu0 0
  %278 = vmatpush1.bf16.msra.mxu0 %v201
  %279 = vmatprep.subr.bf16.mxu0 0
  %280 = vmatpush1.bf16.msra.mxu0 %v202
  %281 = vmatprep.subr.bf16.mxu0 0
  %282 = vmatpush1.bf16.msra.mxu0 %v203
  %283 = vmatprep.subr.bf16.mxu0 0
  %284 = vmatpush1.bf16.msra.mxu0 %v204
  %285 = vmatprep.subr.bf16.mxu0 0
  %286 = vmatpush1.bf16.msra.mxu0 %v205
  %287 = vmatprep.subr.bf16.mxu0 0
  %288 = vmatpush1.bf16.msra.mxu0 0
  %289 = vmatprep.subr.bf16.mxu0 0
  %290 = vmatpush1.bf16.msra.mxu0 0
  %291 = vmatprep.subr.bf16.mxu0 0
  %292 = vmatpush1.bf16.msra.mxu0 0
  %293 = vmatprep.subr.bf16.mxu0 0
  %294 = vmatpush1.bf16.msra.mxu0 0
  %295 = vmatprep.subr.bf16.mxu0 0
  %296 = vmatpush1.bf16.msra.mxu0 0
  %297 = vmatprep.subr.bf16.mxu0 0
  %298 = vmatpush1.bf16.msra.mxu0 0
  %299 = vmatprep.subr.bf16.mxu0 0
  %300 = vmatpush1.bf16.msra.mxu0 0
  %301 = vmatprep.subr.bf16.mxu0 0
  %302 = vmatpush1.bf16.msra.mxu0 0
  %303 = vmatprep.mubr.bf16.mxu0 0
  %304 = vmatmul.mubr.bf16.gmra.mrb[0].mxu0 %v82
  %v305 = vpop.f32.mrb[0].mxu0
  %v306 = vadd.f32 %v265, %v305
  %v307 = vpop.f32.mrb[0].mxu0
  %v308 = vpop.f32.mrb[0].mxu0
  %v309 = vadd.f32 %v268, %v308
  %v310 = vpop.f32.mrb[0].mxu0
  %311 = vdwg.mxu0
  %s312 = scalar_lea.vmem %s0, 24
  %v313 = vld [vmem:[%s312] sm:$0xff]
  %v314 = vld [vmem:[%s312 + $0x8] sm:$0xf]
  %v315 = vld [vmem:[%s312 + $0xc] sm:$0x77]
  %v316 = vld [vmem:[%s312 + $0x14] sm:$0x7]
  %v321 = vunpack.c.l.b16 %v313
  %v322 = vunpack.c.h.b16 %v313
  %v323 = vunpack.c.l.b16 %v314
  %v324 = vunpack.c.l.b16 %v315
  %v325 = vunpack.c.h.b16 %v315
  %v326 = vunpack.c.l.b16 %v316
  %v327 = vpack.c.b16 %v324, %v321
  %v328 = vpack.c.b16 %v325, %v322
  %v329 = vpack.c.b16 %v326, %v323
  %333 = vmatprep.subr.bf16.mxu0 0
  %334 = vmatpush1.bf16.msra.mxu0 %v182
  %335 = vmatprep.subr.bf16.mxu0 0
  %336 = vmatpush1.bf16.msra.mxu0 %v183
  %337 = vmatprep.subr.bf16.mxu0 0
  %338 = vmatpush1.bf16.msra.mxu0 %v184
  %339 = vmatprep.subr.bf16.mxu0 0
  %340 = vmatpush1.bf16.msra.mxu0 %v185
  %341 = vmatprep.subr.bf16.mxu0 0
  %342 = vmatpush1.bf16.msra.mxu0 %v186
  %343 = vmatprep.subr.bf16.mxu0 0
  %344 = vmatpush1.bf16.msra.mxu0 %v187
  %345 = vmatprep.subr.bf16.mxu0 0
  %346 = vmatpush1.bf16.msra.mxu0 %v188
  %347 = vmatprep.subr.bf16.mxu0 0
  %348 = vmatpush1.bf16.msra.mxu0 %v189
  %349 = vmatprep.subr.bf16.mxu0 0
  %350 = vmatpush1.bf16.msra.mxu0 %v190
  %351 = vmatprep.subr.bf16.mxu0 0
  %352 = vmatpush1.bf16.msra.mxu0 %v191
  %353 = vmatprep.subr.bf16.mxu0 0
  %354 = vmatpush1.bf16.msra.mxu0 %v192
  %355 = vmatprep.subr.bf16.mxu0 0
  %356 = vmatpush1.bf16.msra.mxu0 %v193
  %357 = vmatprep.subr.bf16.mxu0 0
  %358 = vmatpush1.bf16.msra.mxu0 %v194
  %359 = vmatprep.subr.bf16.mxu0 0
  %360 = vmatpush1.bf16.msra.mxu0 %v195
  %361 = vmatprep.subr.bf16.mxu0 0
  %362 = vmatpush1.bf16.msra.mxu0 %v196
  %363 = vmatprep.subr.bf16.mxu0 0
  %364 = vmatpush1.bf16.msra.mxu0 %v197
  %365 = vmatprep.mubr.bf16.mxu0 %v328
  %366 = vmatmul.mubr.bf16.gmra.mrb[0].mxu0 %v327
  %v367 = vpop.f32.mrb[0].mxu0
  %v368 = vadd.f32 0.0, %v367
  %v369 = vpop.f32.mrb[0].mxu0
  %v370 = vpop.f32.mrb[0].mxu0
  %v371 = vadd.f32 0.0, %v370
  %v372 = vpop.f32.mrb[0].mxu0
  %373 = vdwg.mxu0
  %374 = vmatprep.subr.bf16.mxu0 0
  %375 = vmatpush1.bf16.msra.mxu0 %v198
  %376 = vmatprep.subr.bf16.mxu0 0
  %377 = vmatpush1.bf16.msra.mxu0 %v199
  %378 = vmatprep.subr.bf16.mxu0 0
  %379 = vmatpush1.bf16.msra.mxu0 %v200
  %380 = vmatprep.subr.bf16.mxu0 0
  %381 = vmatpush1.bf16.msra.mxu0 %v201
  %382 = vmatprep.subr.bf16.mxu0 0
  %383 = vmatpush1.bf16.msra.mxu0 %v202
  %384 = vmatprep.subr.bf16.mxu0 0
  %385 = vmatpush1.bf16.msra.mxu0 %v203
  %386 = vmatprep.subr.bf16.mxu0 0
  %387 = vmatpush1.bf16.msra.mxu0 %v204
  %388 = vmatprep.subr.bf16.mxu0 0
  %389 = vmatpush1.bf16.msra.mxu0 %v205
  %390 = vmatprep.subr.bf16.mxu0 0
  %391 = vmatpush1.bf16.msra.mxu0 0
  %392 = vmatprep.subr.bf16.mxu0 0
  %393 = vmatpush1.bf16.msra.mxu0 0
  %394 = vmatprep.subr.bf16.mxu0 0
  %395 = vmatpush1.bf16.msra.mxu0 0
  %396 = vmatprep.subr.bf16.mxu0 0
  %397 = vmatpush1.bf16.msra.mxu0 0
  %398 = vmatprep.subr.bf16.mxu0 0
  %399 = vmatpush1.bf16.msra.mxu0 0
  %400 = vmatprep.subr.bf16.mxu0 0
  %401 = vmatpush1.bf16.msra.mxu0 0
  %402 = vmatprep.subr.bf16.mxu0 0
  %403 = vmatpush1.bf16.msra.mxu0 0
  %404 = vmatprep.subr.bf16.mxu0 0
  %405 = vmatpush1.bf16.msra.mxu0 0
  %406 = vmatprep.mubr.bf16.mxu0 0
  %407 = vmatmul.mubr.bf16.gmra.mrb[0].mxu0 %v329
  %v408 = vpop.f32.mrb[0].mxu0
  %v409 = vadd.f32 %v368, %v408
  %v410 = vpop.f32.mrb[0].mxu0
  %v411 = vpop.f32.mrb[0].mxu0
  %v412 = vadd.f32 %v371, %v411
  %v413 = vpop.f32.mrb[0].mxu0
  %414 = vdwg.mxu0
  %s415 = scalar_lea.vmem %s0, 48
  %v416 = vld [vmem:[%s415] sm:$0xff]
  %v417 = vld [vmem:[%s415 + $0x8] sm:$0xf]
  %v418 = vld [vmem:[%s415 + $0xc] sm:$0x77]
  %v419 = vld [vmem:[%s415 + $0x14] sm:$0x7]
  %v424 = vunpack.c.l.b16 %v416
  %v425 = vunpack.c.h.b16 %v416
  %v426 = vunpack.c.l.b16 %v417
  %v427 = vunpack.c.l.b16 %v418
  %v428 = vunpack.c.h.b16 %v418
  %v429 = vunpack.c.l.b16 %v419
  %v430 = vpack.c.b16 %v427, %v424
  %v431 = vpack.c.b16 %v428, %v425
  %v432 = vpack.c.b16 %v429, %v426
  %436 = vmatprep.subr.bf16.mxu0 0
  %437 = vmatpush1.bf16.msra.mxu0 %v182
  %438 = vmatprep.subr.bf16.mxu0 0
  %439 = vmatpush1.bf16.msra.mxu0 %v183
  %440 = vmatprep.subr.bf16.mxu0 0
  %441 = vmatpush1.bf16.msra.mxu0 %v184
  %442 = vmatprep.subr.bf16.mxu0 0
  %443 = vmatpush1.bf16.msra.mxu0 %v185
  %444 = vmatprep.subr.bf16.mxu0 0
  %445 = vmatpush1.bf16.msra.mxu0 %v186
  %446 = vmatprep.subr.bf16.mxu0 0
  %447 = vmatpush1.bf16.msra.mxu0 %v187
  %448 = vmatprep.subr.bf16.mxu0 0
  %449 = vmatpush1.bf16.msra.mxu0 %v188
  %450 = vmatprep.subr.bf16.mxu0 0
  %451 = vmatpush1.bf16.msra.mxu0 %v189
  %452 = vmatprep.subr.bf16.mxu0 0
  %453 = vmatpush1.bf16.msra.mxu0 %v190
  %454 = vmatprep.subr.bf16.mxu0 0
  %455 = vmatpush1.bf16.msra.mxu0 %v191
  %456 = vmatprep.subr.bf16.mxu0 0
  %457 = vmatpush1.bf16.msra.mxu0 %v192
  %458 = vmatprep.subr.bf16.mxu0 0
  %459 = vmatpush1.bf16.msra.mxu0 %v193
  %460 = vmatprep.subr.bf16.mxu0 0
  %461 = vmatpush1.bf16.msra.mxu0 %v194
  %462 = vmatprep.subr.bf16.mxu0 0
  %463 = vmatpush1.bf16.msra.mxu0 %v195
  %464 = vmatprep.subr.bf16.mxu0 0
  %465 = vmatpush1.bf16.msra.mxu0 %v196
  %466 = vmatprep.subr.bf16.mxu0 0
  %467 = vmatpush1.bf16.msra.mxu0 %v197
  %468 = vmatprep.mubr.bf16.mxu0 %v431
  %469 = vmatmul.mubr.bf16.gmra.mrb[0].mxu0 %v430
  %v470 = vpop.f32.mrb[0].mxu0
  %v471 = vadd.f32 0.0, %v470
  %v472 = vpop.f32.mrb[0].mxu0
  %v473 = vpop.f32.mrb[0].mxu0
  %v474 = vadd.f32 0.0, %v473
  %v475 = vpop.f32.mrb[0].mxu0
  %476 = vdwg.mxu0
  %477 = vmatprep.subr.bf16.mxu0 0
  %478 = vmatpush1.bf16.msra.mxu0 %v198
  %479 = vmatprep.subr.bf16.mxu0 0
  %480 = vmatpush1.bf16.msra.mxu0 %v199
  %481 = vmatprep.subr.bf16.mxu0 0
  %482 = vmatpush1.bf16.msra.mxu0 %v200
  %483 = vmatprep.subr.bf16.mxu0 0
  %484 = vmatpush1.bf16.msra.mxu0 %v201
  %485 = vmatprep.subr.bf16.mxu0 0
  %486 = vmatpush1.bf16.msra.mxu0 %v202
  %487 = vmatprep.subr.bf16.mxu0 0
  %488 = vmatpush1.bf16.msra.mxu0 %v203
  %489 = vmatprep.subr.bf16.mxu0 0
  %490 = vmatpush1.bf16.msra.mxu0 %v204
  %491 = vmatprep.subr.bf16.mxu0 0
  %492 = vmatpush1.bf16.msra.mxu0 %v205
  %493 = vmatprep.subr.bf16.mxu0 0
  %494 = vmatpush1.bf16.msra.mxu0 0
  %495 = vmatprep.subr.bf16.mxu0 0
  %496 = vmatpush1.bf16.msra.mxu0 0
  %497 = vmatprep.subr.bf16.mxu0 0
  %498 = vmatpush1.bf16.msra.mxu0 0
  %499 = vmatprep.subr.bf16.mxu0 0
  %500 = vmatpush1.bf16.msra.mxu0 0
  %501 = vmatprep.subr.bf16.mxu0 0
  %502 = vmatpush1.bf16.msra.mxu0 0
  %503 = vmatprep.subr.bf16.mxu0 0
  %504 = vmatpush1.bf16.msra.mxu0 0
  %505 = vmatprep.subr.bf16.mxu0 0
  %506 = vmatpush1.bf16.msra.mxu0 0
  %507 = vmatprep.subr.bf16.mxu0 0
  %508 = vmatpush1.bf16.msra.mxu0 0
  %509 = vmatprep.mubr.bf16.mxu0 0
  %510 = vmatmul.mubr.bf16.gmra.mrb[0].mxu0 %v432
  %v511 = vpop.f32.mrb[0].mxu0
  %v512 = vadd.f32 %v471, %v511
  %v513 = vpop.f32.mrb[0].mxu0
  %v514 = vpop.f32.mrb[0].mxu0
  %v515 = vadd.f32 %v474, %v514
  %v516 = vpop.f32.mrb[0].mxu0
  %517 = vdwg.mxu0
  %s518 = scalar_lea.vmem %s0, 72
  %v519 = vld [vmem:[%s518] sm:$0xff]
  %v520 = vld [vmem:[%s518 + $0x8] sm:$0xf]
  %v521 = vld [vmem:[%s518 + $0xc] sm:$0x77]
  %v522 = vld [vmem:[%s518 + $0x14] sm:$0x7]
  %v527 = vunpack.c.l.b16 %v519
  %v528 = vunpack.c.h.b16 %v519
  %v529 = vunpack.c.l.b16 %v520
  %v530 = vunpack.c.l.b16 %v521
  %v531 = vunpack.c.h.b16 %v521
  %v532 = vunpack.c.l.b16 %v522
  %v533 = vpack.c.b16 %v530, %v527
  %v534 = vpack.c.b16 %v531, %v528
  %v535 = vpack.c.b16 %v532, %v529
  %539 = vmatprep.subr.bf16.mxu0 0
  %540 = vmatpush1.bf16.msra.mxu0 %v182
  %541 = vmatprep.subr.bf16.mxu0 0
  %542 = vmatpush1.bf16.msra.mxu0 %v183
  %543 = vmatprep.subr.bf16.mxu0 0
  %544 = vmatpush1.bf16.msra.mxu0 %v184
  %545 = vmatprep.subr.bf16.mxu0 0
  %546 = vmatpush1.bf16.msra.mxu0 %v185
  %547 = vmatprep.subr.bf16.mxu0 0
  %548 = vmatpush1.bf16.msra.mxu0 %v186
  %549 = vmatprep.subr.bf16.mxu0 0
  %550 = vmatpush1.bf16.msra.mxu0 %v187
  %551 = vmatprep.subr.bf16.mxu0 0
  %552 = vmatpush1.bf16.msra.mxu0 %v188
  %553 = vmatprep.subr.bf16.mxu0 0
  %554 = vmatpush1.bf16.msra.mxu0 %v189
  %555 = vmatprep.subr.bf16.mxu0 0
  %556 = vmatpush1.bf16.msra.mxu0 %v190
  %557 = vmatprep.subr.bf16.mxu0 0
  %558 = vmatpush1.bf16.msra.mxu0 %v191
  %559 = vmatprep.subr.bf16.mxu0 0
  %560 = vmatpush1.bf16.msra.mxu0 %v192
  %561 = vmatprep.subr.bf16.mxu0 0
  %562 = vmatpush1.bf16.msra.mxu0 %v193
  %563 = vmatprep.subr.bf16.mxu0 0
  %564 = vmatpush1.bf16.msra.mxu0 %v194
  %565 = vmatprep.subr.bf16.mxu0 0
  %566 = vmatpush1.bf16.msra.mxu0 %v195
  %567 = vmatprep.subr.bf16.mxu0 0
  %568 = vmatpush1.bf16.msra.mxu0 %v196
  %569 = vmatprep.subr.bf16.mxu0 0
  %570 = vmatpush1.bf16.msra.mxu0 %v197
  %571 = vmatprep.mubr.bf16.mxu0 %v534
  %572 = vmatmul.mubr.bf16.gmra.mrb[0].mxu0 %v533
  %v573 = vpop.f32.mrb[0].mxu0
  %v574 = vadd.f32 0.0, %v573
  %v575 = vpop.f32.mrb[0].mxu0
  %v576 = vpop.f32.mrb[0].mxu0
  %v577 = vadd.f32 0.0, %v576
  %v578 = vpop.f32.mrb[0].mxu0
  %579 = vdwg.mxu0
  %580 = vmatprep.subr.bf16.mxu0 0
  %581 = vmatpush1.bf16.msra.mxu0 %v198
  %582 = vmatprep.subr.bf16.mxu0 0
  %583 = vmatpush1.bf16.msra.mxu0 %v199
  %584 = vmatprep.subr.bf16.mxu0 0
  %585 = vmatpush1.bf16.msra.mxu0 %v200
  %586 = vmatprep.subr.bf16.mxu0 0
  %587 = vmatpush1.bf16.msra.mxu0 %v201
  %588 = vmatprep.subr.bf16.mxu0 0
  %589 = vmatpush1.bf16.msra.mxu0 %v202
  %590 = vmatprep.subr.bf16.mxu0 0
  %591 = vmatpush1.bf16.msra.mxu0 %v203
  %592 = vmatprep.subr.bf16.mxu0 0
  %593 = vmatpush1.bf16.msra.mxu0 %v204
  %594 = vmatprep.subr.bf16.mxu0 0
  %595 = vmatpush1.bf16.msra.mxu0 %v205
  %596 = vmatprep.subr.bf16.mxu0 0
  %597 = vmatpush1.bf16.msra.mxu0 0
  %598 = vmatprep.subr.bf16.mxu0 0
  %599 = vmatpush1.bf16.msra.mxu0 0
  %600 = vmatprep.subr.bf16.mxu0 0
  %601 = vmatpush1.bf16.msra.mxu0 0
  %602 = vmatprep.subr.bf16.mxu0 0
  %603 = vmatpush1.bf16.msra.mxu0 0
  %604 = vmatprep.subr.bf16.mxu0 0
  %605 = vmatpush1.bf16.msra.mxu0 0
  %606 = vmatprep.subr.bf16.mxu0 0
  %607 = vmatpush1.bf16.msra.mxu0 0
  %608 = vmatprep.subr.bf16.mxu0 0
  %609 = vmatpush1.bf16.msra.mxu0 0
  %610 = vmatprep.subr.bf16.mxu0 0
  %611 = vmatpush1.bf16.msra.mxu0 0
  %612 = vmatprep.mubr.bf16.mxu0 0
  %613 = vmatmul.mubr.bf16.gmra.mrb[0].mxu0 %v535
  %v614 = vpop.f32.mrb[0].mxu0
  %v615 = vadd.f32 %v574, %v614
  %v616 = vpop.f32.mrb[0].mxu0
  %v617 = vpop.f32.mrb[0].mxu0
  %v618 = vadd.f32 %v577, %v617
  %v619 = vpop.f32.mrb[0].mxu0
  %620 = vdwg.mxu0
  %vm621 = vcmask 1045504
  %v622 = vsel %vm621, %v309, 0.0
  %v623 = vadd.f32 %v306, %v622
  %v624 = vrot.slane %v623, 4
  %v625 = vadd.f32 %v623, %v624
  %v626 = vrot.slane %v625, 2
  %v627 = vadd.f32 %v625, %v626
  %v628 = vrot.slane %v627, 1
  %v629 = vadd.f32 %v627, %v628
  %v630 = vsel %vm621, %v412, 0.0
  %v631 = vadd.f32 %v409, %v630
  %v632 = vrot.slane %v631, 4
  %v633 = vadd.f32 %v631, %v632
  %v634 = vrot.slane %v633, 2
  %v635 = vadd.f32 %v633, %v634
  %v636 = vrot.slane %v635, 1
  %v637 = vadd.f32 %v635, %v636
  %v638 = vadd.f32 %v629, %v637
  %v639 = vsel %vm621, %v515, 0.0
  %v640 = vadd.f32 %v512, %v639
  %v641 = vrot.slane %v640, 4
  %v642 = vadd.f32 %v640, %v641
  %v643 = vrot.slane %v642, 2
  %v644 = vadd.f32 %v642, %v643
  %v645 = vrot.slane %v644, 1
  %v646 = vadd.f32 %v644, %v645
  %v647 = vadd.f32 %v638, %v646
  %v648 = vsel %vm621, %v618, 0.0
  %v649 = vadd.f32 %v615, %v648
  %v650 = vrot.slane %v649, 4
  %v651 = vadd.f32 %v649, %v650
  %v652 = vrot.slane %v651, 2
  %v653 = vadd.f32 %v651, %v652
  %v654 = vrot.slane %v653, 1
  %v655 = vadd.f32 %v653, %v654
  %v656 = vadd.f32 %v647, %v655
  %v657 = vmul.f32 %v656, 0.017857144
  %v658 = vsub.f32 %v306, %v657
  %v659 = vsub.f32 %v309, %v657
  %v660 = vmul.f32 %v658, %v658
  %v661 = vmul.f32 %v659, %v659
  %v662 = vsel %vm621, %v661, 0.0
  %v663 = vadd.f32 %v660, %v662
  %v664 = vrot.slane %v663, 4
  %v665 = vadd.f32 %v663, %v664
  %v666 = vrot.slane %v665, 2
  %v667 = vadd.f32 %v665, %v666
  %v668 = vrot.slane %v667, 1
  %v669 = vadd.f32 %v667, %v668
  %v670 = vsub.f32 %v409, %v657
  %v671 = vsub.f32 %v412, %v657
  %v672 = vmul.f32 %v670, %v670
  %v673 = vmul.f32 %v671, %v671
  %v674 = vsel %vm621, %v673, 0.0
  %v675 = vadd.f32 %v672, %v674
  %v676 = vrot.slane %v675, 4
  %v677 = vadd.f32 %v675, %v676
  %v678 = vrot.slane %v677, 2
  %v679 = vadd.f32 %v677, %v678
  %v680 = vrot.slane %v679, 1
  %v681 = vadd.f32 %v679, %v680
  %v682 = vadd.f32 %v669, %v681
  %v683 = vsub.f32 %v512, %v657
  %v684 = vsub.f32 %v515, %v657
  %v685 = vmul.f32 %v683, %v683
  %v686 = vmul.f32 %v684, %v684
  %v687 = vsel %vm621, %v686, 0.0
  %v688 = vadd.f32 %v685, %v687
  %v689 = vrot.slane %v688, 4
  %v690 = vadd.f32 %v688, %v689
  %v691 = vrot.slane %v690, 2
  %v692 = vadd.f32 %v690, %v691
  %v693 = vrot.slane %v692, 1
  %v694 = vadd.f32 %v692, %v693
  %v695 = vadd.f32 %v682, %v694
  %v696 = vsub.f32 %v615, %v657
  %v697 = vsub.f32 %v618, %v657
  %v698 = vmul.f32 %v696, %v696
  %v699 = vmul.f32 %v697, %v697
  %v700 = vsel %vm621, %v699, 0.0
  %v701 = vadd.f32 %v698, %v700
  %v702 = vrot.slane %v701, 4
  %v703 = vadd.f32 %v701, %v702
  %v704 = vrot.slane %v703, 2
  %v705 = vadd.f32 %v703, %v704
  %v706 = vrot.slane %v705, 1
  %v707 = vadd.f32 %v705, %v706
  %v708 = vadd.f32 %v695, %v707
  %v709 = vmul.f32 %v708, 0.017857144
  %v710 = vld [vmem:[%s2] sm:$0x1]
  %v711 = vadd.f32 %v709, 1e-05
  %v712 = vrsqrt.pop %v711
  %v713 = vmul.f32 %v710, %v712
  %v714 = vld [vmem:[%s3] sm:$0x1]
  %v715 = vmul.f32 %v657, %v713
  %v716 = vsub.f32 %v714, %v715
  %v718 = vlaneseq
  %v719 = vshrl.u32 %v718, 7
  %v720 = vsub.s32 0, %v719
  %v721 = vrot.slane %v713, %v720
  %v723 = vmul.f32 %v306, %v721
  %v724 = vmul.f32 %v309, %v721
  %v726 = vlaneseq
  %v727 = vshrl.u32 %v726, 7
  %v728 = vsub.s32 0, %v727
  %v729 = vrot.slane %v716, %v728
  %v731 = vadd.f32 %v723, %v729
  %v732 = vadd.f32 %v724, %v729
  %v733 = vmax.f32 %v731, 0.0
  %v734 = vmax.f32 %v732, 0.0
  %v735 = vmul.f32 %v409, %v721
  %v736 = vmul.f32 %v412, %v721
  %v737 = vadd.f32 %v735, %v729
  %v738 = vadd.f32 %v736, %v729
  %v739 = vmax.f32 %v737, 0.0
  %v740 = vmax.f32 %v738, 0.0
  %v741 = vmul.f32 %v512, %v721
  %v742 = vmul.f32 %v515, %v721
  %v743 = vadd.f32 %v741, %v729
  %v744 = vadd.f32 %v742, %v729
  %v745 = vmax.f32 %v743, 0.0
  %v746 = vmax.f32 %v744, 0.0
  %v747 = vmul.f32 %v615, %v721
  %v748 = vmul.f32 %v618, %v721
  %v749 = vadd.f32 %v747, %v729
  %v750 = vadd.f32 %v748, %v729
  %v751 = vmax.f32 %v749, 0.0
  %v752 = vmax.f32 %v750, 0.0
  %v753 = vmax.f32 %v733, %v739
  %v754 = vmax.f32 %v734, %v740
  %v755 = vmax.f32 %v745, %v751
  %v756 = vmax.f32 %v746, %v752
  %v757 = vmax.f32 %v753, %v755
  %v758 = vmax.f32 %v754, %v756
  %v759 = vpack.c.bf16 %v758, %v757
  %v761 = vunpack.c.l.b16 %v759
  %v762 = vunpack.c.h.b16 %v759
  %v763 = vpack.c.b16 %v761, %v761
  %v764 = vpack.c.b16 %v762, %v762
  %767 = vst [vmem:[%s4] sm:$0xf] %v763
  %768 = vst [vmem:[%s4 + $0x4] sm:$0x7] %v764
  // Predicated region
  $region18: #{m5_forward.6} parent=0 // pred_check
    _
  $region19: #{m5_forward.6} parent=0 // pred_check_branch
    %770 = sbr.rel (0) target = $region21
  $region20: #{m5_forward.6} parent=0 // pred_region
    _
  $region21: #{m5_forward.6} parent=0 // pred_fallthru
    _
  // Predicated region
  $region22: #{m5_forward.6} parent=0 // pred_check
    _
  $region23: #{m5_forward.6} parent=0 // pred_check_branch
    %772 = sbr.rel (0) target = $region25
  $region24: #{m5_forward.6} parent=0 // pred_region
    _
  $region25: #{m5_forward.6} parent=0 // pred_fallthru
    _

// kernel: m5_forward.7
$region0: #{m5_forward.7}
  #allocation0 [shape = 'u32[]', space=smem, size = 0x4, offset = 0x4, fixed_abs, tag = 'smem constant byte address 0x4 - core index']
  #allocation1 [shape = 'u32[144,128]{1,0:T(1,128)}', space=vmem, size = 0x12000, scoped, tag = 'internal scratch']
  %s0 = inlined_call_operand.vmem [shape: bf16[4,2,384], index: 0, kind: input, shape index: {}]
  %s1 = inlined_call_operand.vmem [shape: bf16[2,384], index: 1, kind: input, shape index: {}]
  %s2 = inlined_call_operand.vmem [shape: bf16[384,128], index: 2, kind: input, shape index: {}]
  %s3 = inlined_call_operand.vmem [shape: f32[1,128], index: 3, kind: input, shape index: {}]
  %s4 = inlined_call_operand.vmem [shape: f32[1,128], index: 4, kind: input, shape index: {}]
  %s5 = inlined_call_operand.vmem [shape: f32[128,2], index: 5, kind: input, shape index: {}]
  %s6 = inlined_call_operand.vmem [shape: f32[1,2], index: 6, kind: input, shape index: {}]
  %s7 = inlined_call_operand.hbm [shape: f32[2,2], index: 7, kind: output, shape index: {}]
  %s8 = sld [smem:[#allocation0]]
  $region38: #{m5_forward.7} parent=0
    _
  %s10 = ssub.s32 1, %s8
  %s11 = scalar_select 0, %s10, %s8
  $region1: #{m5_forward.7} parent=0
    #allocation2 [shape = 'u8[1024]{0}', space=vmem, size = 0x400, scoped, tag = 'output window, operand 0, single buffered']
    #allocation3 [shape = 's32[1]{0}', space=sflag, size = 0x4, scoped, tag = 'scoped memory for m5_forward.7']
    %12 = vsyncpa [#allocation3], 0
    // Predicated region
    $region2: #{m5_forward.7} parent=1 // pred_check
      _
    $region3: #{m5_forward.7} parent=1 // pred_check_branch
      %14 = sbr.rel (0) target = $region5
    $region4: #{m5_forward.7} parent=1 // pred_region
      _
    $region5: #{m5_forward.7} parent=1 // pred_fallthru
      _
    // Predicated region
    $region6: #{m5_forward.7} parent=1 // pred_check
      _
    $region7: #{m5_forward.7} parent=1 // pred_check_branch
      %16 = sbr.rel (0) target = $region9
    $region8: #{m5_forward.7} parent=1 // pred_region
      _
    $region9: #{m5_forward.7} parent=1 // pred_fallthru
      _
    // Predicated region
    $region10: #{m5_forward.7} parent=1 // pred_check
      _
    $region11: #{m5_forward.7} parent=1 // pred_check_branch
      %18 = sbr.rel (0) target = $region13
    $region12: #{m5_forward.7} parent=1 // pred_region
      _
    $region13: #{m5_forward.7} parent=1 // pred_fallthru
      _
    // Predicated region
    $region14: #{m5_forward.7} parent=1 // pred_check
      _
    $region15: #{m5_forward.7} parent=1 // pred_check_branch
      %20 = sbr.rel (0) target = $region17
    $region16: #{m5_forward.7} parent=1 // pred_region
      _
    $region17: #{m5_forward.7} parent=1 // pred_fallthru
      _
    // Predicated region
    $region18: #{m5_forward.7} parent=1 // pred_check
      _
    $region19: #{m5_forward.7} parent=1 // pred_check_branch
      %22 = sbr.rel (0) target = $region21
    $region20: #{m5_forward.7} parent=1 // pred_region
      _
    $region21: #{m5_forward.7} parent=1 // pred_fallthru
      _
    // Predicated region
    $region22: #{m5_forward.7} parent=1 // pred_check
      _
    $region23: #{m5_forward.7} parent=1 // pred_check_branch
      %24 = sbr.rel (0) target = $region25
    $region24: #{m5_forward.7} parent=1 // pred_region
      _
    $region25: #{m5_forward.7} parent=1 // pred_fallthru
      _
    // Predicated region
    $region26: #{m5_forward.7} parent=1 // pred_check
      _
    $region27: #{m5_forward.7} parent=1 // pred_check_branch
      %26 = sbr.rel (0) target = $region29
    $region28: #{m5_forward.7} parent=1 // pred_region
      _
    $region29: #{m5_forward.7} parent=1 // pred_fallthru
      _
    %v28 = vld [vmem:[%s2] sm:$0xf]
    %v29 = vld [vmem:[%s2 + $0x4] sm:$0xf]
    %v30 = vld [vmem:[%s2 + $0x8] sm:$0xf]
    %v31 = vld [vmem:[%s2 + $0xc] sm:$0xf]
    %v32 = vld [vmem:[%s2 + $0x10] sm:$0xf]
    %v33 = vld [vmem:[%s2 + $0x14] sm:$0xf]
    %v34 = vld [vmem:[%s2 + $0x18] sm:$0xf]
    %v35 = vld [vmem:[%s2 + $0x1c] sm:$0xf]
    %v36 = vld [vmem:[%s2 + $0x20] sm:$0xf]
    %v37 = vld [vmem:[%s2 + $0x24] sm:$0xf]
    %v38 = vld [vmem:[%s2 + $0x28] sm:$0xf]
    %v39 = vld [vmem:[%s2 + $0x2c] sm:$0xf]
    %v40 = vld [vmem:[%s2 + $0x30] sm:$0xf]
    %v41 = vld [vmem:[%s2 + $0x34] sm:$0xf]
    %v42 = vld [vmem:[%s2 + $0x38] sm:$0xf]
    %v43 = vld [vmem:[%s2 + $0x3c] sm:$0xf]
    %v44 = vld [vmem:[%s2 + $0x40] sm:$0xf]
    %v45 = vld [vmem:[%s2 + $0x44] sm:$0xf]
    %v46 = vld [vmem:[%s2 + $0x48] sm:$0xf]
    %v47 = vld [vmem:[%s2 + $0x4c] sm:$0xf]
    %v48 = vld [vmem:[%s2 + $0x50] sm:$0xf]
    %v49 = vld [vmem:[%s2 + $0x54] sm:$0xf]
    %v50 = vld [vmem:[%s2 + $0x58] sm:$0xf]
    %v51 = vld [vmem:[%s2 + $0x5c] sm:$0xf]
    %v52 = vld [vmem:[%s2 + $0x60] sm:$0xf]
    %v53 = vld [vmem:[%s2 + $0x64] sm:$0xf]
    %v54 = vld [vmem:[%s2 + $0x68] sm:$0xf]
    %v55 = vld [vmem:[%s2 + $0x6c] sm:$0xf]
    %v56 = vld [vmem:[%s2 + $0x70] sm:$0xf]
    %v57 = vld [vmem:[%s2 + $0x74] sm:$0xf]
    %v58 = vld [vmem:[%s2 + $0x78] sm:$0xf]
    %v59 = vld [vmem:[%s2 + $0x7c] sm:$0xf]
    %v60 = vld [vmem:[%s2 + $0x80] sm:$0xf]
    %v61 = vld [vmem:[%s2 + $0x84] sm:$0xf]
    %v62 = vld [vmem:[%s2 + $0x88] sm:$0xf]
    %v63 = vld [vmem:[%s2 + $0x8c] sm:$0xf]
    %v64 = vld [vmem:[%s2 + $0x90] sm:$0xf]
    %v65 = vld [vmem:[%s2 + $0x94] sm:$0xf]
    %v66 = vld [vmem:[%s2 + $0x98] sm:$0xf]
    %v67 = vld [vmem:[%s2 + $0x9c] sm:$0xf]
    %v68 = vld [vmem:[%s2 + $0xa0] sm:$0xf]
    %v69 = vld [vmem:[%s2 + $0xa4] sm:$0xf]
    %v70 = vld [vmem:[%s2 + $0xa8] sm:$0xf]
    %v71 = vld [vmem:[%s2 + $0xac] sm:$0xf]
    %v72 = vld [vmem:[%s2 + $0xb0] sm:$0xf]
    %v73 = vld [vmem:[%s2 + $0xb4] sm:$0xf]
    %v74 = vld [vmem:[%s2 + $0xb8] sm:$0xf]
    %v75 = vld [vmem:[%s2 + $0xbc] sm:$0xf]
    %v76 = vld [vmem:[%s0] sm:$0x7]
    %v79 = vunpack.c.l.s4 1966171168
    %v80 = vunpack.c.0.s8 %v79
    %v81 = vlaneseq
    %v82 = vshrl.u32 %v81, 7
    %v83 = vsub.s32 %v80, %v82
    %v84 = vrot.slane %v76, %v83
    %v85 = vcombine.high %v84, %v84
    %v87 = vunpack.c.l.s4 1966171168
    %v88 = vunpack.c.0.s8 %v87
    %v89 = vlaneseq
    %v90 = vshrl.u32 %v89, 7
    %v91 = vsub.s32 %v88, %v90
    %v92 = vrot.slane %v84, %v91
    %v94 = vunpack.c.l.s4 1966171168
    %v95 = vunpack.c.0.s8 %v94
    %v96 = vlaneseq
    %v97 = vshrl.u32 %v96, 7
    %v98 = vsub.s32 %v95, %v97
    %v99 = vrot.slane %v85, %v98
    %v100 = vcombine.high %v92, %v92
    %v152 = vunpack.c.l.b16 %v28
    %v153 = vunpack.c.l.b16 %v29
    %v154 = vunpack.c.l.b16 %v30
    %v155 = vunpack.c.l.b16 %v31
    %v156 = vunpack.c.l.b16 %v32
    %v157 = vunpack.c.l.b16 %v33
    %v158 = vunpack.c.l.b16 %v34
    %v159 = vunpack.c.l.b16 %v35
    %v160 = vunpack.c.l.b16 %v36
    %v161 = vunpack.c.l.b16 %v37
    %v162 = vunpack.c.l.b16 %v38
    %v163 = vunpack.c.l.b16 %v39
    %v164 = vunpack.c.l.b16 %v40
    %v165 = vunpack.c.l.b16 %v41
    %v166 = vunpack.c.l.b16 %v42
    %v167 = vunpack.c.l.b16 %v43
    %v168 = vunpack.c.l.b16 %v44
    %v169 = vunpack.c.l.b16 %v45
    %v170 = vunpack.c.l.b16 %v46
    %v171 = vunpack.c.l.b16 %v47
    %v172 = vunpack.c.l.b16 %v48
    %v173 = vunpack.c.l.b16 %v49
    %v174 = vunpack.c.l.b16 %v50
    %v175 = vunpack.c.l.b16 %v51
    %v176 = vunpack.c.l.b16 %v52
    %v177 = vunpack.c.l.b16 %v53
    %v178 = vunpack.c.l.b16 %v54
    %v179 = vunpack.c.l.b16 %v55
    %v180 = vunpack.c.l.b16 %v56
    %v181 = vunpack.c.l.b16 %v57
    %v182 = vunpack.c.l.b16 %v58
    %v183 = vunpack.c.l.b16 %v59
    %v184 = vunpack.c.l.b16 %v60
    %v185 = vunpack.c.l.b16 %v61
    %v186 = vunpack.c.l.b16 %v62
    %v187 = vunpack.c.l.b16 %v63
    %v188 = vunpack.c.l.b16 %v64
    %v189 = vunpack.c.l.b16 %v65
    %v190 = vunpack.c.l.b16 %v66
    %v191 = vunpack.c.l.b16 %v67
    %v192 = vunpack.c.l.b16 %v68
    %v193 = vunpack.c.l.b16 %v69
    %v194 = vunpack.c.l.b16 %v70
    %v195 = vunpack.c.l.b16 %v71
    %v196 = vunpack.c.l.b16 %v72
    %v197 = vunpack.c.l.b16 %v73
    %v198 = vunpack.c.l.b16 %v74
    %v199 = vunpack.c.l.b16 %v75
    %v200 = vpack.c.b16 %v153, %v152
    %v201 = vpack.c.b16 %v155, %v154
    %v202 = vpack.c.b16 %v157, %v156
    %v203 = vpack.c.b16 %v159, %v158
    %v204 = vpack.c.b16 %v161, %v160
    %v205 = vpack.c.b16 %v163, %v162
    %v206 = vpack.c.b16 %v165, %v164
    %v207 = vpack.c.b16 %v167, %v166
    %v208 = vpack.c.b16 %v169, %v168
    %v209 = vpack.c.b16 %v171, %v170
    %v210 = vpack.c.b16 %v173, %v172
    %v211 = vpack.c.b16 %v175, %v174
    %v212 = vpack.c.b16 %v177, %v176
    %v213 = vpack.c.b16 %v179, %v178
    %v214 = vpack.c.b16 %v181, %v180
    %v215 = vpack.c.b16 %v183, %v182
    %v216 = vpack.c.b16 %v185, %v184
    %v217 = vpack.c.b16 %v187, %v186
    %v218 = vpack.c.b16 %v189, %v188
    %v219 = vpack.c.b16 %v191, %v190
    %v220 = vpack.c.b16 %v193, %v192
    %v221 = vpack.c.b16 %v195, %v194
    %v222 = vpack.c.b16 %v197, %v196
    %v223 = vpack.c.b16 %v199, %v198
    %248 = vmatprep.subr.bf16.mxu0 0
    %249 = vmatpush1.bf16.msra.mxu0 %v200
    %250 = vmatprep.subr.bf16.mxu0 0
    %251 = vmatpush1.bf16.msra.mxu0 %v201
    %252 = vmatprep.subr.bf16.mxu0 0
    %253 = vmatpush1.bf16.msra.mxu0 %v202
    %254 = vmatprep.subr.bf16.mxu0 0
    %255 = vmatpush1.bf16.msra.mxu0 %v203
    %256 = vmatprep.subr.bf16.mxu0 0
    %257 = vmatpush1.bf16.msra.mxu0 %v204
    %258 = vmatprep.subr.bf16.mxu0 0
    %259 = vmatpush1.bf16.msra.mxu0 %v205
    %260 = vmatprep.subr.bf16.mxu0 0
    %261 = vmatpush1.bf16.msra.mxu0 %v206
    %262 = vmatprep.subr.bf16.mxu0 0
    %263 = vmatpush1.bf16.msra.mxu0 %v207
    %264 = vmatprep.subr.bf16.mxu0 0
    %265 = vmatpush1.bf16.msra.mxu0 %v208
    %266 = vmatprep.subr.bf16.mxu0 0
    %267 = vmatpush1.bf16.msra.mxu0 %v209
    %268 = vmatprep.subr.bf16.mxu0 0
    %269 = vmatpush1.bf16.msra.mxu0 %v210
    %270 = vmatprep.subr.bf16.mxu0 0
    %271 = vmatpush1.bf16.msra.mxu0 %v211
    %272 = vmatprep.subr.bf16.mxu0 0
    %273 = vmatpush1.bf16.msra.mxu0 %v212
    %274 = vmatprep.subr.bf16.mxu0 0
    %275 = vmatpush1.bf16.msra.mxu0 %v213
    %276 = vmatprep.subr.bf16.mxu0 0
    %277 = vmatpush1.bf16.msra.mxu0 %v214
    %278 = vmatprep.subr.bf16.mxu0 0
    %279 = vmatpush1.bf16.msra.mxu0 %v215
    %280 = vmatprep.mubr.bf16.mxu0 %v99
    %281 = vmatmul.mubr.bf16.gmra.mrb[0].mxu0 %v92
    %v282 = vpop.f32.mrb[0].mxu0
    %v283 = vadd.f32 0.0, %v282
    %v284 = vpop.f32.mrb[0].mxu0
    %v285 = vpop.f32.mrb[0].mxu0
    %v286 = vpop.f32.mrb[0].mxu0
    %287 = vdwg.mxu0
    %288 = vmatprep.subr.bf16.mxu0 0
    %289 = vmatpush1.bf16.msra.mxu0 %v216
    %290 = vmatprep.subr.bf16.mxu0 0
    %291 = vmatpush1.bf16.msra.mxu0 %v217
    %292 = vmatprep.subr.bf16.mxu0 0
    %293 = vmatpush1.bf16.msra.mxu0 %v218
    %294 = vmatprep.subr.bf16.mxu0 0
    %295 = vmatpush1.bf16.msra.mxu0 %v219
    %296 = vmatprep.subr.bf16.mxu0 0
    %297 = vmatpush1.bf16.msra.mxu0 %v220
    %298 = vmatprep.subr.bf16.mxu0 0
    %299 = vmatpush1.bf16.msra.mxu0 %v221
    %300 = vmatprep.subr.bf16.mxu0 0
    %301 = vmatpush1.bf16.msra.mxu0 %v222
    %302 = vmatprep.subr.bf16.mxu0 0
    %303 = vmatpush1.bf16.msra.mxu0 %v223
    %304 = vmatprep.subr.bf16.mxu0 0
    %305 = vmatpush1.bf16.msra.mxu0 0
    %306 = vmatprep.subr.bf16.mxu0 0
    %307 = vmatpush1.bf16.msra.mxu0 0
    %308 = vmatprep.subr.bf16.mxu0 0
    %309 = vmatpush1.bf16.msra.mxu0 0
    %310 = vmatprep.subr.bf16.mxu0 0
    %311 = vmatpush1.bf16.msra.mxu0 0
    %312 = vmatprep.subr.bf16.mxu0 0
    %313 = vmatpush1.bf16.msra.mxu0 0
    %314 = vmatprep.subr.bf16.mxu0 0
    %315 = vmatpush1.bf16.msra.mxu0 0
    %316 = vmatprep.subr.bf16.mxu0 0
    %317 = vmatpush1.bf16.msra.mxu0 0
    %318 = vmatprep.subr.bf16.mxu0 0
    %319 = vmatpush1.bf16.msra.mxu0 0
    %320 = vmatprep.mubr.bf16.mxu0 0
    %321 = vmatmul.mubr.bf16.gmra.mrb[0].mxu0 %v100
    %v322 = vpop.f32.mrb[0].mxu0
    %v323 = vadd.f32 %v283, %v322
    %v324 = vpop.f32.mrb[0].mxu0
    %v325 = vpop.f32.mrb[0].mxu0
    %v326 = vpop.f32.mrb[0].mxu0
    %327 = vdwg.mxu0
    %s328 = scalar_lea.vmem %s0, 3
    %v329 = vld [vmem:[%s328] sm:$0x7]
    %v332 = vunpack.c.l.s4 1966171168
    %v333 = vunpack.c.0.s8 %v332
    %v334 = vlaneseq
    %v335 = vshrl.u32 %v334, 7
    %v336 = vsub.s32 %v333, %v335
    %v337 = vrot.slane %v329, %v336
    %v338 = vcombine.high %v337, %v337
    %v340 = vunpack.c.l.s4 1966171168
    %v341 = vunpack.c.0.s8 %v340
    %v342 = vlaneseq
    %v343 = vshrl.u32 %v342, 7
    %v344 = vsub.s32 %v341, %v343
    %v345 = vrot.slane %v337, %v344
    %v347 = vunpack.c.l.s4 1966171168
    %v348 = vunpack.c.0.s8 %v347
    %v349 = vlaneseq
    %v350 = vshrl.u32 %v349, 7
    %v351 = vsub.s32 %v348, %v350
    %v352 = vrot.slane %v338, %v351
    %v353 = vcombine.high %v345, %v345
    %357 = vmatprep.subr.bf16.mxu0 0
    %358 = vmatpush1.bf16.msra.mxu0 %v200
    %359 = vmatprep.subr.bf16.mxu0 0
    %360 = vmatpush1.bf16.msra.mxu0 %v201
    %361 = vmatprep.subr.bf16.mxu0 0
    %362 = vmatpush1.bf16.msra.mxu0 %v202
    %363 = vmatprep.subr.bf16.mxu0 0
    %364 = vmatpush1.bf16.msra.mxu0 %v203
    %365 = vmatprep.subr.bf16.mxu0 0
    %366 = vmatpush1.bf16.msra.mxu0 %v204
    %367 = vmatprep.subr.bf16.mxu0 0
    %368 = vmatpush1.bf16.msra.mxu0 %v205
    %369 = vmatprep.subr.bf16.mxu0 0
    %370 = vmatpush1.bf16.msra.mxu0 %v206
    %371 = vmatprep.subr.bf16.mxu0 0
    %372 = vmatpush1.bf16.msra.mxu0 %v207
    %373 = vmatprep.subr.bf16.mxu0 0
    %374 = vmatpush1.bf16.msra.mxu0 %v208
    %375 = vmatprep.subr.bf16.mxu0 0
    %376 = vmatpush1.bf16.msra.mxu0 %v209
    %377 = vmatprep.subr.bf16.mxu0 0
    %378 = vmatpush1.bf16.msra.mxu0 %v210
    %379 = vmatprep.subr.bf16.mxu0 0
    %380 = vmatpush1.bf16.msra.mxu0 %v211
    %381 = vmatprep.subr.bf16.mxu0 0
    %382 = vmatpush1.bf16.msra.mxu0 %v212
    %383 = vmatprep.subr.bf16.mxu0 0
    %384 = vmatpush1.bf16.msra.mxu0 %v213
    %385 = vmatprep.subr.bf16.mxu0 0
    %386 = vmatpush1.bf16.msra.mxu0 %v214
    %387 = vmatprep.subr.bf16.mxu0 0
    %388 = vmatpush1.bf16.msra.mxu0 %v215
    %389 = vmatprep.mubr.bf16.mxu0 %v352
    %390 = vmatmul.mubr.bf16.gmra.mrb[0].mxu0 %v345
    %v391 = vpop.f32.mrb[0].mxu0
    %v392 = vadd.f32 0.0, %v391
    %v393 = vpop.f32.mrb[0].mxu0
    %v394 = vpop.f32.mrb[0].mxu0
    %v395 = vpop.f32.mrb[0].mxu0
    %396 = vdwg.mxu0
    %397 = vmatprep.subr.bf16.mxu0 0
    %398 = vmatpush1.bf16.msra.mxu0 %v216
    %399 = vmatprep.subr.bf16.mxu0 0
    %400 = vmatpush1.bf16.msra.mxu0 %v217
    %401 = vmatprep.subr.bf16.mxu0 0
    %402 = vmatpush1.bf16.msra.mxu0 %v218
    %403 = vmatprep.subr.bf16.mxu0 0
    %404 = vmatpush1.bf16.msra.mxu0 %v219
    %405 = vmatprep.subr.bf16.mxu0 0
    %406 = vmatpush1.bf16.msra.mxu0 %v220
    %407 = vmatprep.subr.bf16.mxu0 0
    %408 = vmatpush1.bf16.msra.mxu0 %v221
    %409 = vmatprep.subr.bf16.mxu0 0
    %410 = vmatpush1.bf16.msra.mxu0 %v222
    %411 = vmatprep.subr.bf16.mxu0 0
    %412 = vmatpush1.bf16.msra.mxu0 %v223
    %413 = vmatprep.subr.bf16.mxu0 0
    %414 = vmatpush1.bf16.msra.mxu0 0
    %415 = vmatprep.subr.bf16.mxu0 0
    %416 = vmatpush1.bf16.msra.mxu0 0
    %417 = vmatprep.subr.bf16.mxu0 0
    %418 = vmatpush1.bf16.msra.mxu0 0
    %419 = vmatprep.subr.bf16.mxu0 0
    %420 = vmatpush1.bf16.msra.mxu0 0
    %421 = vmatprep.subr.bf16.mxu0 0
    %422 = vmatpush1.bf16.msra.mxu0 0
    %423 = vmatprep.subr.bf16.mxu0 0
    %424 = vmatpush1.bf16.msra.mxu0 0
    %425 = vmatprep.subr.bf16.mxu0 0
    %426 = vmatpush1.bf16.msra.mxu0 0
    %427 = vmatprep.subr.bf16.mxu0 0
    %428 = vmatpush1.bf16.msra.mxu0 0
    %429 = vmatprep.mubr.bf16.mxu0 0
    %430 = vmatmul.mubr.bf16.gmra.mrb[0].mxu0 %v353
    %v431 = vpop.f32.mrb[0].mxu0
    %v432 = vadd.f32 %v392, %v431
    %v433 = vpop.f32.mrb[0].mxu0
    %v434 = vpop.f32.mrb[0].mxu0
    %v435 = vpop.f32.mrb[0].mxu0
    %436 = vdwg.mxu0
    %s437 = scalar_lea.vmem %s0, 6
    %v438 = vld [vmem:[%s437] sm:$0x7]
    %v441 = vunpack.c.l.s4 1966171168
    %v442 = vunpack.c.0.s8 %v441
    %v443 = vlaneseq
    %v444 = vshrl.u32 %v443, 7
    %v445 = vsub.s32 %v442, %v444
    %v446 = vrot.slane %v438, %v445
    %v447 = vcombine.high %v446, %v446
    %v449 = vunpack.c.l.s4 1966171168
    %v450 = vunpack.c.0.s8 %v449
    %v451 = vlaneseq
    %v452 = vshrl.u32 %v451, 7
    %v453 = vsub.s32 %v450, %v452
    %v454 = vrot.slane %v446, %v453
    %v456 = vunpack.c.l.s4 1966171168
    %v457 = vunpack.c.0.s8 %v456
    %v458 = vlaneseq
    %v459 = vshrl.u32 %v458, 7
    %v460 = vsub.s32 %v457, %v459
    %v461 = vrot.slane %v447, %v460
    %v462 = vcombine.high %v454, %v454
    %466 = vmatprep.subr.bf16.mxu0 0
    %467 = vmatpush1.bf16.msra.mxu0 %v200
    %468 = vmatprep.subr.bf16.mxu0 0
    %469 = vmatpush1.bf16.msra.mxu0 %v201
    %470 = vmatprep.subr.bf16.mxu0 0
    %471 = vmatpush1.bf16.msra.mxu0 %v202
    %472 = vmatprep.subr.bf16.mxu0 0
    %473 = vmatpush1.bf16.msra.mxu0 %v203
    %474 = vmatprep.subr.bf16.mxu0 0
    %475 = vmatpush1.bf16.msra.mxu0 %v204
    %476 = vmatprep.subr.bf16.mxu0 0
    %477 = vmatpush1.bf16.msra.mxu0 %v205
    %478 = vmatprep.subr.bf16.mxu0 0
    %479 = vmatpush1.bf16.msra.mxu0 %v206
    %480 = vmatprep.subr.bf16.mxu0 0
    %481 = vmatpush1.bf16.msra.mxu0 %v207
    %482 = vmatprep.subr.bf16.mxu0 0
    %483 = vmatpush1.bf16.msra.mxu0 %v208
    %484 = vmatprep.subr.bf16.mxu0 0
    %485 = vmatpush1.bf16.msra.mxu0 %v209
    %486 = vmatprep.subr.bf16.mxu0 0
    %487 = vmatpush1.bf16.msra.mxu0 %v210
    %488 = vmatprep.subr.bf16.mxu0 0
    %489 = vmatpush1.bf16.msra.mxu0 %v211
    %490 = vmatprep.subr.bf16.mxu0 0
    %491 = vmatpush1.bf16.msra.mxu0 %v212
    %492 = vmatprep.subr.bf16.mxu0 0
    %493 = vmatpush1.bf16.msra.mxu0 %v213
    %494 = vmatprep.subr.bf16.mxu0 0
    %495 = vmatpush1.bf16.msra.mxu0 %v214
    %496 = vmatprep.subr.bf16.mxu0 0
    %497 = vmatpush1.bf16.msra.mxu0 %v215
    %498 = vmatprep.mubr.bf16.mxu0 %v461
    %499 = vmatmul.mubr.bf16.gmra.mrb[0].mxu0 %v454
    %v500 = vpop.f32.mrb[0].mxu0
    %v501 = vadd.f32 0.0, %v500
    %v502 = vpop.f32.mrb[0].mxu0
    %v503 = vpop.f32.mrb[0].mxu0
    %v504 = vpop.f32.mrb[0].mxu0
    %505 = vdwg.mxu0
    %506 = vmatprep.subr.bf16.mxu0 0
    %507 = vmatpush1.bf16.msra.mxu0 %v216
    %508 = vmatprep.subr.bf16.mxu0 0
    %509 = vmatpush1.bf16.msra.mxu0 %v217
    %510 = vmatprep.subr.bf16.mxu0 0
    %511 = vmatpush1.bf16.msra.mxu0 %v218
    %512 = vmatprep.subr.bf16.mxu0 0
    %513 = vmatpush1.bf16.msra.mxu0 %v219
    %514 = vmatprep.subr.bf16.mxu0 0
    %515 = vmatpush1.bf16.msra.mxu0 %v220
    %516 = vmatprep.subr.bf16.mxu0 0
    %517 = vmatpush1.bf16.msra.mxu0 %v221
    %518 = vmatprep.subr.bf16.mxu0 0
    %519 = vmatpush1.bf16.msra.mxu0 %v222
    %520 = vmatprep.subr.bf16.mxu0 0
    %521 = vmatpush1.bf16.msra.mxu0 %v223
    %522 = vmatprep.subr.bf16.mxu0 0
    %523 = vmatpush1.bf16.msra.mxu0 0
    %524 = vmatprep.subr.bf16.mxu0 0
    %525 = vmatpush1.bf16.msra.mxu0 0
    %526 = vmatprep.subr.bf16.mxu0 0
    %527 = vmatpush1.bf16.msra.mxu0 0
    %528 = vmatprep.subr.bf16.mxu0 0
    %529 = vmatpush1.bf16.msra.mxu0 0
    %530 = vmatprep.subr.bf16.mxu0 0
    %531 = vmatpush1.bf16.msra.mxu0 0
    %532 = vmatprep.subr.bf16.mxu0 0
    %533 = vmatpush1.bf16.msra.mxu0 0
    %534 = vmatprep.subr.bf16.mxu0 0
    %535 = vmatpush1.bf16.msra.mxu0 0
    %536 = vmatprep.subr.bf16.mxu0 0
    %537 = vmatpush1.bf16.msra.mxu0 0
    %538 = vmatprep.mubr.bf16.mxu0 0
    %539 = vmatmul.mubr.bf16.gmra.mrb[0].mxu0 %v462
    %v540 = vpop.f32.mrb[0].mxu0
    %v541 = vadd.f32 %v501, %v540
    %v542 = vpop.f32.mrb[0].mxu0
    %v543 = vpop.f32.mrb[0].mxu0
    %v544 = vpop.f32.mrb[0].mxu0
    %545 = vdwg.mxu0
    %s546 = scalar_lea.vmem %s0, 9
    %v547 = vld [vmem:[%s546] sm:$0x7]
    %v550 = vunpack.c.l.s4 1966171168
    %v551 = vunpack.c.0.s8 %v550
    %v552 = vlaneseq
    %v553 = vshrl.u32 %v552, 7
    %v554 = vsub.s32 %v551, %v553
    %v555 = vrot.slane %v547, %v554
    %v556 = vcombine.high %v555, %v555
    %v558 = vunpack.c.l.s4 1966171168
    %v559 = vunpack.c.0.s8 %v558
    %v560 = vlaneseq
    %v561 = vshrl.u32 %v560, 7
    %v562 = vsub.s32 %v559, %v561
    %v563 = vrot.slane %v555, %v562
    %v565 = vunpack.c.l.s4 1966171168
    %v566 = vunpack.c.0.s8 %v565
    %v567 = vlaneseq
    %v568 = vshrl.u32 %v567, 7
    %v569 = vsub.s32 %v566, %v568
    %v570 = vrot.slane %v556, %v569
    %v571 = vcombine.high %v563, %v563
    %575 = vmatprep.subr.bf16.mxu0 0
    %576 = vmatpush1.bf16.msra.mxu0 %v200
    %577 = vmatprep.subr.bf16.mxu0 0
    %578 = vmatpush1.bf16.msra.mxu0 %v201
    %579 = vmatprep.subr.bf16.mxu0 0
    %580 = vmatpush1.bf16.msra.mxu0 %v202
    %581 = vmatprep.subr.bf16.mxu0 0
    %582 = vmatpush1.bf16.msra.mxu0 %v203
    %583 = vmatprep.subr.bf16.mxu0 0
    %584 = vmatpush1.bf16.msra.mxu0 %v204
    %585 = vmatprep.subr.bf16.mxu0 0
    %586 = vmatpush1.bf16.msra.mxu0 %v205
    %587 = vmatprep.subr.bf16.mxu0 0
    %588 = vmatpush1.bf16.msra.mxu0 %v206
    %589 = vmatprep.subr.bf16.mxu0 0
    %590 = vmatpush1.bf16.msra.mxu0 %v207
    %591 = vmatprep.subr.bf16.mxu0 0
    %592 = vmatpush1.bf16.msra.mxu0 %v208
    %593 = vmatprep.subr.bf16.mxu0 0
    %594 = vmatpush1.bf16.msra.mxu0 %v209
    %595 = vmatprep.subr.bf16.mxu0 0
    %596 = vmatpush1.bf16.msra.mxu0 %v210
    %597 = vmatprep.subr.bf16.mxu0 0
    %598 = vmatpush1.bf16.msra.mxu0 %v211
    %599 = vmatprep.subr.bf16.mxu0 0
    %600 = vmatpush1.bf16.msra.mxu0 %v212
    %601 = vmatprep.subr.bf16.mxu0 0
    %602 = vmatpush1.bf16.msra.mxu0 %v213
    %603 = vmatprep.subr.bf16.mxu0 0
    %604 = vmatpush1.bf16.msra.mxu0 %v214
    %605 = vmatprep.subr.bf16.mxu0 0
    %606 = vmatpush1.bf16.msra.mxu0 %v215
    %607 = vmatprep.mubr.bf16.mxu0 %v570
    %608 = vmatmul.mubr.bf16.gmra.mrb[0].mxu0 %v563
    %v609 = vpop.f32.mrb[0].mxu0
    %v610 = vadd.f32 0.0, %v609
    %v611 = vpop.f32.mrb[0].mxu0
    %v612 = vpop.f32.mrb[0].mxu0
    %v613 = vpop.f32.mrb[0].mxu0
    %614 = vdwg.mxu0
    %615 = vmatprep.subr.bf16.mxu0 0
    %616 = vmatpush1.bf16.msra.mxu0 %v216
    %617 = vmatprep.subr.bf16.mxu0 0
    %618 = vmatpush1.bf16.msra.mxu0 %v217
    %619 = vmatprep.subr.bf16.mxu0 0
    %620 = vmatpush1.bf16.msra.mxu0 %v218
    %621 = vmatprep.subr.bf16.mxu0 0
    %622 = vmatpush1.bf16.msra.mxu0 %v219
    %623 = vmatprep.subr.bf16.mxu0 0
    %624 = vmatpush1.bf16.msra.mxu0 %v220
    %625 = vmatprep.subr.bf16.mxu0 0
    %626 = vmatpush1.bf16.msra.mxu0 %v221
    %627 = vmatprep.subr.bf16.mxu0 0
    %628 = vmatpush1.bf16.msra.mxu0 %v222
    %629 = vmatprep.subr.bf16.mxu0 0
    %630 = vmatpush1.bf16.msra.mxu0 %v223
    %631 = vmatprep.subr.bf16.mxu0 0
    %632 = vmatpush1.bf16.msra.mxu0 0
    %633 = vmatprep.subr.bf16.mxu0 0
    %634 = vmatpush1.bf16.msra.mxu0 0
    %635 = vmatprep.subr.bf16.mxu0 0
    %636 = vmatpush1.bf16.msra.mxu0 0
    %637 = vmatprep.subr.bf16.mxu0 0
    %638 = vmatpush1.bf16.msra.mxu0 0
    %639 = vmatprep.subr.bf16.mxu0 0
    %640 = vmatpush1.bf16.msra.mxu0 0
    %641 = vmatprep.subr.bf16.mxu0 0
    %642 = vmatpush1.bf16.msra.mxu0 0
    %643 = vmatprep.subr.bf16.mxu0 0
    %644 = vmatpush1.bf16.msra.mxu0 0
    %645 = vmatprep.subr.bf16.mxu0 0
    %646 = vmatpush1.bf16.msra.mxu0 0
    %647 = vmatprep.mubr.bf16.mxu0 0
    %648 = vmatmul.mubr.bf16.gmra.mrb[0].mxu0 %v571
    %v649 = vpop.f32.mrb[0].mxu0
    %v650 = vadd.f32 %v610, %v649
    %v651 = vpop.f32.mrb[0].mxu0
    %v652 = vpop.f32.mrb[0].mxu0
    %v653 = vpop.f32.mrb[0].mxu0
    %654 = vdwg.mxu0
    %v655 = vld [vmem:[%s1] sm:$0x7]
    %v658 = vunpack.c.l.s4 1966171168
    %v659 = vunpack.c.0.s8 %v658
    %v660 = vlaneseq
    %v661 = vshrl.u32 %v660, 7
    %v662 = vsub.s32 %v659, %v661
    %v663 = vrot.slane %v655, %v662
    %v664 = vcombine.high %v663, %v663
    %v666 = vunpack.c.l.s4 1966171168
    %v667 = vunpack.c.0.s8 %v666
    %v668 = vlaneseq
    %v669 = vshrl.u32 %v668, 7
    %v670 = vsub.s32 %v667, %v669
    %v671 = vrot.slane %v663, %v670
    %v673 = vunpack.c.l.s4 1966171168
    %v674 = vunpack.c.0.s8 %v673
    %v675 = vlaneseq
    %v676 = vshrl.u32 %v675, 7
    %v677 = vsub.s32 %v674, %v676
    %v678 = vrot.slane %v664, %v677
    %v679 = vcombine.high %v671, %v671
    %683 = vmatprep.subr.bf16.mxu0 0
    %684 = vmatpush1.bf16.msra.mxu0 %v200
    %685 = vmatprep.subr.bf16.mxu0 0
    %686 = vmatpush1.bf16.msra.mxu0 %v201
    %687 = vmatprep.subr.bf16.mxu0 0
    %688 = vmatpush1.bf16.msra.mxu0 %v202
    %689 = vmatprep.subr.bf16.mxu0 0
    %690 = vmatpush1.bf16.msra.mxu0 %v203
    %691 = vmatprep.subr.bf16.mxu0 0
    %692 = vmatpush1.bf16.msra.mxu0 %v204
    %693 = vmatprep.subr.bf16.mxu0 0
    %694 = vmatpush1.bf16.msra.mxu0 %v205
    %695 = vmatprep.subr.bf16.mxu0 0
    %696 = vmatpush1.bf16.msra.mxu0 %v206
    %697 = vmatprep.subr.bf16.mxu0 0
    %698 = vmatpush1.bf16.msra.mxu0 %v207
    %699 = vmatprep.subr.bf16.mxu0 0
    %700 = vmatpush1.bf16.msra.mxu0 %v208
    %701 = vmatprep.subr.bf16.mxu0 0
    %702 = vmatpush1.bf16.msra.mxu0 %v209
    %703 = vmatprep.subr.bf16.mxu0 0
    %704 = vmatpush1.bf16.msra.mxu0 %v210
    %705 = vmatprep.subr.bf16.mxu0 0
    %706 = vmatpush1.bf16.msra.mxu0 %v211
    %707 = vmatprep.subr.bf16.mxu0 0
    %708 = vmatpush1.bf16.msra.mxu0 %v212
    %709 = vmatprep.subr.bf16.mxu0 0
    %710 = vmatpush1.bf16.msra.mxu0 %v213
    %711 = vmatprep.subr.bf16.mxu0 0
    %712 = vmatpush1.bf16.msra.mxu0 %v214
    %713 = vmatprep.subr.bf16.mxu0 0
    %714 = vmatpush1.bf16.msra.mxu0 %v215
    %715 = vmatprep.mubr.bf16.mxu0 %v678
    %716 = vmatmul.mubr.bf16.gmra.mrb[0].mxu0 %v671
    %v717 = vpop.f32.mrb[0].mxu0
    %v718 = vadd.f32 0.0, %v717
    %v719 = vpop.f32.mrb[0].mxu0
    %v720 = vpop.f32.mrb[0].mxu0
    %v721 = vpop.f32.mrb[0].mxu0
    %722 = vdwg.mxu0
    %723 = vmatprep.subr.bf16.mxu0 0
    %724 = vmatpush1.bf16.msra.mxu0 %v216
    %725 = vmatprep.subr.bf16.mxu0 0
    %726 = vmatpush1.bf16.msra.mxu0 %v217
    %727 = vmatprep.subr.bf16.mxu0 0
    %728 = vmatpush1.bf16.msra.mxu0 %v218
    %729 = vmatprep.subr.bf16.mxu0 0
    %730 = vmatpush1.bf16.msra.mxu0 %v219
    %731 = vmatprep.subr.bf16.mxu0 0
    %732 = vmatpush1.bf16.msra.mxu0 %v220
    %733 = vmatprep.subr.bf16.mxu0 0
    %734 = vmatpush1.bf16.msra.mxu0 %v221
    %735 = vmatprep.subr.bf16.mxu0 0
    %736 = vmatpush1.bf16.msra.mxu0 %v222
    %737 = vmatprep.subr.bf16.mxu0 0
    %738 = vmatpush1.bf16.msra.mxu0 %v223
    %739 = vmatprep.subr.bf16.mxu0 0
    %740 = vmatpush1.bf16.msra.mxu0 0
    %741 = vmatprep.subr.bf16.mxu0 0
    %742 = vmatpush1.bf16.msra.mxu0 0
    %743 = vmatprep.subr.bf16.mxu0 0
    %744 = vmatpush1.bf16.msra.mxu0 0
    %745 = vmatprep.subr.bf16.mxu0 0
    %746 = vmatpush1.bf16.msra.mxu0 0
    %747 = vmatprep.subr.bf16.mxu0 0
    %748 = vmatpush1.bf16.msra.mxu0 0
    %749 = vmatprep.subr.bf16.mxu0 0
    %750 = vmatpush1.bf16.msra.mxu0 0
    %751 = vmatprep.subr.bf16.mxu0 0
    %752 = vmatpush1.bf16.msra.mxu0 0
    %753 = vmatprep.subr.bf16.mxu0 0
    %754 = vmatpush1.bf16.msra.mxu0 0
    %755 = vmatprep.mubr.bf16.mxu0 0
    %756 = vmatmul.mubr.bf16.gmra.mrb[0].mxu0 %v679
    %v757 = vpop.f32.mrb[0].mxu0
    %v758 = vadd.f32 %v718, %v757
    %v759 = vpop.f32.mrb[0].mxu0
    %v760 = vpop.f32.mrb[0].mxu0
    %v761 = vpop.f32.mrb[0].mxu0
    %762 = vdwg.mxu0
    %vm763 = vcmask 1041408
    %v764 = vsel %vm763, %v323, 0.0
    %v765 = vrot.slane %v764, 4
    %v766 = vadd.f32 %v764, %v765
    %v767 = vrot.slane %v766, 2
    %v768 = vadd.f32 %v766, %v767
    %v769 = vrot.slane %v768, 1
    %v770 = vadd.f32 %v768, %v769
    %v771 = vsel %vm763, %v432, 0.0
    %v772 = vrot.slane %v771, 4
    %v773 = vadd.f32 %v771, %v772
    %v774 = vrot.slane %v773, 2
    %v775 = vadd.f32 %v773, %v774
    %v776 = vrot.slane %v775, 1
    %v777 = vadd.f32 %v775, %v776
    %v778 = vadd.f32 %v770, %v777
    %v779 = vsel %vm763, %v541, 0.0
    %v780 = vrot.slane %v779, 4
    %v781 = vadd.f32 %v779, %v780
    %v782 = vrot.slane %v781, 2
    %v783 = vadd.f32 %v781, %v782
    %v784 = vrot.slane %v783, 1
    %v785 = vadd.f32 %v783, %v784
    %v786 = vadd.f32 %v778, %v785
    %v787 = vsel %vm763, %v650, 0.0
    %v788 = vrot.slane %v787, 4
    %v789 = vadd.f32 %v787, %v788
    %v790 = vrot.slane %v789, 2
    %v791 = vadd.f32 %v789, %v790
    %v792 = vrot.slane %v791, 1
    %v793 = vadd.f32 %v791, %v792
    %v794 = vadd.f32 %v786, %v793
    %v795 = vsel %vm763, %v758, 0.0
    %v796 = vrot.slane %v795, 4
    %v797 = vadd.f32 %v795, %v796
    %v798 = vrot.slane %v797, 2
    %v799 = vadd.f32 %v797, %v798
    %v800 = vrot.slane %v799, 1
    %v801 = vadd.f32 %v799, %v800
    %v802 = vadd.f32 %v794, %v801
    %v803 = vmul.f32 %v802, 0.1
    %v804 = vsub.f32 %v323, %v803
    %v805 = vmul.f32 %v804, %v804
    %v806 = vsel %vm763, %v805, 0.0
    %v807 = vrot.slane %v806, 4
    %v808 = vadd.f32 %v806, %v807
    %v809 = vrot.slane %v808, 2
    %v810 = vadd.f32 %v808, %v809
    %v811 = vrot.slane %v810, 1
    %v812 = vadd.f32 %v810, %v811
    %v813 = vsub.f32 %v432, %v803
    %v814 = vmul.f32 %v813, %v813
    %v815 = vsel %vm763, %v814, 0.0
    %v816 = vrot.slane %v815, 4
    %v817 = vadd.f32 %v815, %v816
    %v818 = vrot.slane %v817, 2
    %v819 = vadd.f32 %v817, %v818
    %v820 = vrot.slane %v819, 1
    %v821 = vadd.f32 %v819, %v820
    %v822 = vadd.f32 %v812, %v821
    %v823 = vsub.f32 %v541, %v803
    %v824 = vmul.f32 %v823, %v823
    %v825 = vsel %vm763, %v824, 0.0
    %v826 = vrot.slane %v825, 4
    %v827 = vadd.f32 %v825, %v826
    %v828 = vrot.slane %v827, 2
    %v829 = vadd.f32 %v827, %v828
    %v830 = vrot.slane %v829, 1
    %v831 = vadd.f32 %v829, %v830
    %v832 = vadd.f32 %v822, %v831
    %v833 = vsub.f32 %v650, %v803
    %v834 = vmul.f32 %v833, %v833
    %v835 = vsel %vm763, %v834, 0.0
    %v836 = vrot.slane %v835, 4
    %v837 = vadd.f32 %v835, %v836
    %v838 = vrot.slane %v837, 2
    %v839 = vadd.f32 %v837, %v838
    %v840 = vrot.slane %v839, 1
    %v841 = vadd.f32 %v839, %v840
    %v842 = vadd.f32 %v832, %v841
    %v843 = vsub.f32 %v758, %v803
    %v844 = vmul.f32 %v843, %v843
    %v845 = vsel %vm763, %v844, 0.0
    %v846 = vrot.slane %v845, 4
    %v847 = vadd.f32 %v845, %v846
    %v848 = vrot.slane %v847, 2
    %v849 = vadd.f32 %v847, %v848
    %v850 = vrot.slane %v849, 1
    %v851 = vadd.f32 %v849, %v850
    %v852 = vadd.f32 %v842, %v851
    %v853 = vmul.f32 %v852, 0.1
    %v854 = vld [vmem:[%s3] sm:$0x1]
    %v855 = vadd.f32 %v853, 1e-05
    %v856 = vrsqrt.pop %v855
    %v857 = vmul.f32 %v854, %v856
    %v858 = vld [vmem:[%s4] sm:$0x1]
    %v859 = vmul.f32 %v803, %v857
    %v860 = vsub.f32 %v858, %v859
    %v862 = vlaneseq
    %v863 = vshrl.u32 %v862, 7
    %v864 = vsub.s32 0, %v863
    %v865 = vrot.slane %v857, %v864
    %v867 = vmul.f32 %v323, %v865
    %v869 = vlaneseq
    %v870 = vshrl.u32 %v869, 7
    %v871 = vsub.s32 0, %v870
    %v872 = vrot.slane %v860, %v871
    %v874 = vadd.f32 %v867, %v872
    %v875 = vmax.f32 %v874, 0.0
    %v876 = vmul.f32 %v432, %v865
    %v877 = vadd.f32 %v876, %v872
    %v878 = vmax.f32 %v877, 0.0
    %v879 = vmul.f32 %v541, %v865
    %v880 = vadd.f32 %v879, %v872
    %v881 = vmax.f32 %v880, 0.0
    %v882 = vmul.f32 %v650, %v865
    %v883 = vadd.f32 %v882, %v872
    %v884 = vmax.f32 %v883, 0.0
    %v885 = vmax.f32 %v875, %v878
    %v886 = vmax.f32 %v881, %v884
    %v887 = vmax.f32 %v885, %v886
    %v888 = vld [vmem:[%s5] sm:$0xff]
    %v889 = vld [vmem:[%s5 + $0x8] sm:$0xff]
    %v890 = vld [vmem:[%s5 + $0x10] sm:$0xff]
    %v891 = vld [vmem:[%s5 + $0x18] sm:$0xff]
    %v892 = vld [vmem:[%s5 + $0x20] sm:$0xff]
    %v893 = vld [vmem:[%s5 + $0x28] sm:$0xff]
    %v894 = vld [vmem:[%s5 + $0x30] sm:$0xff]
    %v895 = vld [vmem:[%s5 + $0x38] sm:$0xff]
    %v896 = vld [vmem:[%s5 + $0x40] sm:$0xff]
    %v897 = vld [vmem:[%s5 + $0x48] sm:$0xff]
    %v898 = vld [vmem:[%s5 + $0x50] sm:$0xff]
    %v899 = vld [vmem:[%s5 + $0x58] sm:$0xff]
    %v900 = vld [vmem:[%s5 + $0x60] sm:$0xff]
    %v901 = vld [vmem:[%s5 + $0x68] sm:$0xff]
    %v902 = vld [vmem:[%s5 + $0x70] sm:$0xff]
    %v903 = vld [vmem:[%s5 + $0x78] sm:$0xff]
    %v904 = vld [vmem:[%s6] sm:$0x1]
    %v906 = vlaneseq
    %v907 = vshrl.u32 %v906, 7
    %v908 = vsub.s32 0, %v907
    %v909 = vrot.slane %v904, %v908
    %911 = vmatprep.subr.mxu0 0.0
    %912 = vmatpush1.msra.mxu0 %v888
    %913 = vmatprep.subr.mxu0 0.0
    %914 = vmatpush1.msra.mxu0 %v889
    %915 = vmatprep.subr.mxu0 0.0
    %916 = vmatpush1.msra.mxu0 %v890
    %917 = vmatprep.subr.mxu0 0.0
    %918 = vmatpush1.msra.mxu0 %v891
    %919 = vmatprep.subr.mxu0 0.0
    %920 = vmatpush1.msra.mxu0 %v892
    %921 = vmatprep.subr.mxu0 0.0
    %922 = vmatpush1.msra.mxu0 %v893
    %923 = vmatprep.subr.mxu0 0.0
    %924 = vmatpush1.msra.mxu0 %v894
    %925 = vmatprep.subr.mxu0 0.0
    %926 = vmatpush1.msra.mxu0 %v895
    %927 = vmatprep.subr.mxu0 0.0
    %928 = vmatpush1.msra.mxu0 %v896
    %929 = vmatprep.subr.mxu0 0.0
    %930 = vmatpush1.msra.mxu0 %v897
    %931 = vmatprep.subr.mxu0 0.0
    %932 = vmatpush1.msra.mxu0 %v898
    %933 = vmatprep.subr.mxu0 0.0
    %934 = vmatpush1.msra.mxu0 %v899
    %935 = vmatprep.subr.mxu0 0.0
    %936 = vmatpush1.msra.mxu0 %v900
    %937 = vmatprep.subr.mxu0 0.0
    %938 = vmatpush1.msra.mxu0 %v901
    %939 = vmatprep.subr.mxu0 0.0
    %940 = vmatpush1.msra.mxu0 %v902
    %941 = vmatprep.subr.mxu0 0.0
    %942 = vmatpush1.msra.mxu0 %v903
    %943 = vmatprep.subr.mxu0 0.0
    %944 = vmatpush1.msra.mxu0 0.0
    %945 = vmatprep.subr.mxu0 0.0
    %946 = vmatpush1.msra.mxu0 0.0
    %947 = vmatprep.subr.mxu0 0.0
    %948 = vmatpush1.msra.mxu0 0.0
    %949 = vmatprep.subr.mxu0 0.0
    %950 = vmatpush1.msra.mxu0 0.0
    %951 = vmatprep.subr.mxu0 0.0
    %952 = vmatpush1.msra.mxu0 0.0
    %953 = vmatprep.subr.mxu0 0.0
    %954 = vmatpush1.msra.mxu0 0.0
    %955 = vmatprep.subr.mxu0 0.0
    %956 = vmatpush1.msra.mxu0 0.0
    %957 = vmatprep.subr.mxu0 0.0
    %958 = vmatpush1.msra.mxu0 0.0
    %959 = vmatprep.subr.mxu0 0.0
    %960 = vmatpush1.msra.mxu0 0.0
    %961 = vmatprep.subr.mxu0 0.0
    %962 = vmatpush1.msra.mxu0 0.0
    %963 = vmatprep.subr.mxu0 0.0
    %964 = vmatpush1.msra.mxu0 0.0
    %965 = vmatprep.subr.mxu0 0.0
    %966 = vmatpush1.msra.mxu0 0.0
    %967 = vmatprep.subr.mxu0 0.0
    %968 = vmatpush1.msra.mxu0 0.0
    %969 = vmatprep.subr.mxu0 0.0
    %970 = vmatpush1.msra.mxu0 0.0
    %971 = vmatprep.subr.mxu0 0.0
    %972 = vmatpush1.msra.mxu0 0.0
    %973 = vmatprep.subr.mxu0 0.0
    %974 = vmatpush1.msra.mxu0 0.0
    %975 = vmatprep.mubr.f32.mxu0 0.0
    %976 = vmatmul.mubr.f32.gmra.mrb[0].mxu0 %v887
    %v977 = vpop.f32.mrb[0].mxu0
    %v978 = vadd.f32 %v909, %v977
    %v979 = vpop.f32.mrb[0].mxu0
    %980 = vdwg.mxu0
    %vm981 = vcmask 9216
    %v982 = vsel %vm981, %v978, -inf
    %983 = vmax.xlane.f32.xlu0 %v982
    %v984 = vpop.xlane.xlu0 %983
    %v985 = vsub.f32 %v978, %v984
    %v986 = vmul.f32 %v985, 1.442695
    %v987 = vpow.pop %v986
    %v988 = vsel %vm981, %v987, 0.0
    %989 = vadd.xlane.f32.xlu0 %v988
    %v990 = vpop.xlane.xlu0 %989
    %v991 = vlog2.pop %v990
    %v992 = vmul.f32 %v991, 0.6931472
    %v993 = vsub.f32 %v985, %v992
    %994 = vst.msk [vmem:[#allocation2] sm:$0x3] %vm981, %v993
    // Predicated region
    $region30: #{m5_forward.7} parent=1 // pred_check
      _
    $region31: #{m5_forward.7} parent=1 // pred_check_branch
      %996 = sbr.rel (0) target = $region33
    $region32: #{m5_forward.7} parent=1 // pred_region
      %s998 = ssub.s32 32, 32
      %999 = vsyncadd [#allocation3], %s998
      %s1001 = sshll.u32 [#allocation2], 4
      %s1002 = int_to_ptr.vmem [resolvable:$true] %s1001
      %1004 = dma.vmem_to_hbm [thread:$0]  %s1002, 32, %s7, [#allocation3]
    $region33: #{m5_forward.7} parent=1 // pred_fallthru
      _
    // Predicated region
    $region34: #{m5_forward.7} parent=1 // pred_check
      _
    $region35: #{m5_forward.7} parent=1 // pred_check_branch
      %1006 = sbr.rel (0) target = $region37
    $region36: #{m5_forward.7} parent=1 // pred_region
      %1007 = dma.done [#allocation3], 32
    $region37: #{m5_forward.7} parent=1 // pred_fallthru
      _
    %1008 = vsyncpa [#allocation3], 1

</llo_original>
